<compile_context>
chip_gen: v7x
topology: tpu7x:2x2x1
jax: 0.10.0
libtpu: 0.0.40
codegen_flags: <defaults>
</compile_context>

<pallas_src>
import functools

import jax
import jax.numpy as jnp
from jax import lax
from jax.experimental import pallas as pl
from jax.experimental.pallas import tpu as pltpu

LANE = 128
BN_EPS = 1e-5


def _round_up(x, m):
    return (x + m - 1) // m * m


def _pad2d(a, rows, cols):
    r, c = a.shape
    return jnp.pad(a, ((0, rows - r), (0, cols - c)))


# ---------------------------------------------------------------------------
# Kernel: one grid step == one sample, everything fused.
# ---------------------------------------------------------------------------
def _dsc_kernel(x_ref, ml_ref, mr_ref, we_ref, b1_ref, wd_ref, b2_ref,
                se1_ref, se2_ref, wp_ref, b3_ref,
                out_ref, halo_ref, *, H, W, margin, skip):
    HW = H * W
    M2 = 2 * margin + HW                  # rows per halo region
    L0, C0, R0 = 0, M2, 2 * M2            # region bases: left / center / right
    CEP = halo_ref.shape[1]

    # Zero only the margin rows (the HW-row centers are overwritten below).
    zeros_m = jnp.zeros((margin, CEP), jnp.float32)
    for base in (L0, C0, R0):
        halo_ref[base:base + margin, :] = zeros_m
        halo_ref[base + margin + HW:base + M2, :] = zeros_m

    xf = x_ref[0]                                            # (HW, CIN8)

    # ---- expand: 1x1 conv (+ folded BN) + ReLU ------------------------------
    # TODO(synk): cast MXU operands to bf16 on v6e/v7x (kept f32 here to match
    # the strict f32 reference check).
    y = jnp.dot(xf, we_ref[...], preferred_element_type=jnp.float32)
    y = jnp.maximum(y + b1_ref[...], 0.0)                    # (HW, CEP)

    # ---- depthwise 3x3, stride 1, zero-pad 1 --------------------------------
    # Store the center slab, then build left/right column-shifted slabs by
    # re-reading it at +-1 row offsets (the slab ends fall into the zero
    # margin) and zeroing the wrapped column with a precomputed float mask.
    halo_ref[C0 + margin:C0 + margin + HW, :] = y
    yL = halo_ref[C0 + margin - 1:C0 + margin - 1 + HW, :] * ml_ref[...]
    yR = halo_ref[C0 + margin + 1:C0 + margin + 1 + HW, :] * mr_ref[...]
    halo_ref[L0 + margin:L0 + margin + HW, :] = yL
    halo_ref[R0 + margin:R0 + margin + HW, :] = yR

    acc = y * wd_ref[4:5, :]                                 # center tap
    for t in range(9):
        if t == 4:
            continue
        dh, dw = t // 3 - 1, t % 3 - 1
        base = (L0, C0, R0)[dw + 1]
        start = base + margin + dh * W        # 8-aligned when W % 8 == 0
        acc = acc + halo_ref[start:start + HW, :] * wd_ref[t:t + 1, :]
    z = jnp.maximum(acc + b2_ref[...], 0.0)                  # (HW, CEP)

    # ---- squeeze-and-excitation ---------------------------------------------
    pooled = jnp.sum(z, axis=0, keepdims=True) * (1.0 / HW)  # (1, CEP)
    hid = jnp.maximum(
        jnp.dot(pooled, se1_ref[...], preferred_element_type=jnp.float32), 0.0)
    gate = jnp.dot(hid, se2_ref[...], preferred_element_type=jnp.float32)
    gate = 1.0 / (1.0 + jnp.exp(-gate))                      # sigmoid, (1, CEP)
    # TODO(synk): fold gate into wp (o = z @ (wp * gate_col)); needs a
    # lane->sublane relayout of gate, kept as a full-slab scale for safety.
    z = z * gate

    # ---- pointwise 1x1 conv (+ folded BN) + optional residual ---------------
    o = jnp.dot(z, wp_ref[...], preferred_element_type=jnp.float32) + b3_ref[...]
    if skip:
        o = o + xf
    out_ref[0] = o.astype(out_ref.dtype)


# ---------------------------------------------------------------------------
# Wrapper: layout plumbing (NCHW -> channel-last, minimal padding, BN fold).
# ---------------------------------------------------------------------------
def depthwise_separable_conv_forward(x, expand_w, bn1, dw_w, bn2,
                                     se_fc1_w, se_fc2_w, pw_w, bn3,
                                     *, stride=1, eps=BN_EPS):
    N, Cin, H, W = x.shape
    Cexp = expand_w.shape[0]
    Cout = pw_w.shape[0]
    Cr = se_fc1_w.shape[0]
    HW = H * W

    # TODO(synk): stride > 1 (strided depthwise output) is not implemented.
    assert stride == 1, "stride != 1 not implemented"
    skip = (stride == 1) and (Cin == Cout)

    CIN8 = _round_up(Cin, 8)            # narrow I/O channel dims (sublane pad)
    COUT8 = _round_up(Cout, 8)
    CEP = _round_up(Cexp, LANE)         # internal expanded dim stays lane-dense
    CRP = _round_up(Cr, LANE)
    margin = _round_up(W, 8)            # zero halo margin (>= W, 8-aligned)
    M2 = 2 * margin + HW

    def fold_bn(bn):                    # eval-mode BN: y = t * scale + bias
        g, b, m, v = bn
        scale = g / jnp.sqrt(v + eps)
        return scale, b - m * scale

    s1, bias1 = fold_bn(bn1)
    s2, bias2 = fold_bn(bn2)
    s3, bias3 = fold_bn(bn3)

    # NCHW -> (N, H*W, Cin), padded only to a sublane multiple (8), not 128.
    x_cl = jnp.transpose(x, (0, 2, 3, 1)).reshape(N, HW, Cin)
    x_cl = jnp.pad(x_cl, ((0, 0), (0, 0), (0, CIN8 - Cin)))

    we = _pad2d((expand_w.reshape(Cexp, Cin) * s1[:, None]).T, CIN8, CEP)
    b1 = _pad2d(bias1.reshape(1, Cexp), 1, CEP)
    wd = _pad2d(dw_w.reshape(Cexp, 9).T * s2[None, :], 9, CEP)   # (tap, chan)
    b2 = _pad2d(bias2.reshape(1, Cexp), 1, CEP)
    se1 = _pad2d(se_fc1_w.T, CEP, CRP)
    se2 = _pad2d(se_fc2_w.T, CRP, CEP)
    wp = _pad2d((pw_w.reshape(Cout, Cexp) * s3[:, None]).T, CEP, COUT8)
    b3 = _pad2d(bias3.reshape(1, Cout), 1, COUT8)

    # Column-boundary masks built in plain JAX (works for any W, no pow2 need).
    col = jnp.arange(HW, dtype=jnp.int32) % W
    maskL = (col != 0).astype(jnp.float32).reshape(HW, 1)
    maskR = (col != W - 1).astype(jnp.float32).reshape(HW, 1)

    kernel = functools.partial(_dsc_kernel, H=H, W=W, margin=margin, skip=skip)

    # TODO(synk): for large H*W (real MBConv shapes) add an H row-tile grid
    # axis (with a 1-row halo) so the working set fits v7x's 64 MiB VMEM and
    # both v7x TensorCores get work even at batch 1.
    out = pl.pallas_call(
        kernel,
        out_shape=jax.ShapeDtypeStruct((N, HW, COUT8), jnp.float32),
        grid=(N,),
        in_specs=[
            pl.BlockSpec((1, HW, CIN8), lambda n: (n, 0, 0)),  # x (one sample)
            pl.BlockSpec((HW, 1), lambda n: (0, 0)),           # column mask L
            pl.BlockSpec((HW, 1), lambda n: (0, 0)),           # column mask R
            pl.BlockSpec((CIN8, CEP), lambda n: (0, 0)),       # expand weight
            pl.BlockSpec((1, CEP), lambda n: (0, 0)),          # expand BN bias
            pl.BlockSpec((9, CEP), lambda n: (0, 0)),          # depthwise weight
            pl.BlockSpec((1, CEP), lambda n: (0, 0)),          # depthwise BN bias
            pl.BlockSpec((CEP, CRP), lambda n: (0, 0)),        # SE fc1
            pl.BlockSpec((CRP, CEP), lambda n: (0, 0)),        # SE fc2
            pl.BlockSpec((CEP, COUT8), lambda n: (0, 0)),      # pointwise weight
            pl.BlockSpec((1, COUT8), lambda n: (0, 0)),        # pointwise BN bias
        ],
        out_specs=pl.BlockSpec((1, HW, COUT8), lambda n: (n, 0, 0)),
        scratch_shapes=[pltpu.VMEM((3 * M2, CEP), jnp.float32)],
        compiler_params=pltpu.CompilerParams(
            dimension_semantics=("parallel",),
            vmem_limit_bytes=32 * 1024 * 1024),
    )(x_cl, maskL, maskR, we, b1, wd, b2, se1, se2, wp, b3)

    out = out[:, :, :Cout].reshape(N, H, W, Cout)
    return jnp.transpose(out, (0, 3, 1, 2))                    # back to NCHW


# ---------------------------------------------------------------------------
# Pure-JAX reference (matches the PyTorch forward in eval mode).
# ---------------------------------------------------------------------------
def reference(x, expand_w, bn1, dw_w, bn2, se_fc1_w, se_fc2_w, pw_w, bn3,
              *, stride=1, eps=BN_EPS):
    N, Cin, H, W = x.shape
    Cexp = expand_w.shape[0]
    Cout = pw_w.shape[0]
    HIGH = lax.Precision.HIGHEST

    def bn(t, p):
        g, b, m, v = p
        return ((t - m[None, :, None, None]) /
                jnp.sqrt(v + eps)[None, :, None, None] *
                g[None, :, None, None] + b[None, :, None, None])

    y = jnp.einsum('nchw,ec->nehw', x, expand_w.reshape(Cexp, Cin),
                   precision=HIGH)
    y = jnp.maximum(bn(y, bn1), 0.0)

    yp = jnp.pad(y, ((0, 0), (0, 0), (1, 1), (1, 1)))
    z = jnp.zeros_like(y)
    for kh in range(3):
        for kw in range(3):
            w_tap = dw_w[:, 0, kh, kw][None, :, None, None]
            z = z + yp[:, :, kh:kh + H, kw:kw + W] * w_tap
    z = jnp.maximum(bn(z, bn2), 0.0)

    pooled = jnp.mean(z, axis=(2, 3))                           # (N, Cexp)
    hid = jnp.maximum(jnp.dot(pooled, se_fc1_w.T, precision=HIGH), 0.0)
    gate = jax.nn.sigmoid(jnp.dot(hid, se_fc2_w.T, precision=HIGH))
    z = z * gate[:, :, None, None]

    o = jnp.einsum('nehw,oe->nohw', z, pw_w.reshape(Cout, Cexp),
                   precision=HIGH)
    o = bn(o, bn3)
    if stride == 1 and Cin == Cout:
        o = o + x
    return o


if __name__ == "__main__":
    N, Cin, H, W = 2, 4, 16, 16
    expansion = 6
    Cexp = Cin * expansion          # 24
    Cr = Cexp // 4                  # 6
    Cout = Cin                      # 4 -> skip connection active (stride=1)

    key = jax.random.PRNGKey(0)
    ks = jax.random.split(key, 10)
    x = jax.random.normal(ks[0], (N, Cin, H, W), jnp.float32)

    expand_w = jax.random.normal(ks[1], (Cexp, Cin, 1, 1), jnp.float32) * 0.3
    dw_w = jax.random.normal(ks[2], (Cexp, 1, 3, 3), jnp.float32) * 0.3
    se_fc1_w = jax.random.normal(ks[3], (Cr, Cexp), jnp.float32) * 0.3
    se_fc2_w = jax.random.normal(ks[4], (Cexp, Cr), jnp.float32) * 0.3
    pw_w = jax.random.normal(ks[5], (Cout, Cexp, 1, 1), jnp.float32) * 0.3

    def make_bn(k, C):
        k1, k2, k3, k4 = jax.random.split(k, 4)
        gamma = 1.0 + 0.1 * jax.random.normal(k1, (C,), jnp.float32)
        beta = 0.1 * jax.random.normal(k2, (C,), jnp.float32)
        mean = 0.1 * jax.random.normal(k3, (C,), jnp.float32)
        var = jax.random.uniform(k4, (C,), jnp.float32, 0.5, 1.5)
        return gamma, beta, mean, var

    bn1 = make_bn(ks[6], Cexp)
    bn2 = make_bn(ks[7], Cexp)
    bn3 = make_bn(ks[8], Cout)

    out = depthwise_separable_conv_forward(
        x, expand_w, bn1, dw_w, bn2, se_fc1_w, se_fc2_w, pw_w, bn3)
    out = jax.block_until_ready(out)

    ref = reference(x, expand_w, bn1, dw_w, bn2, se_fc1_w, se_fc2_w, pw_w, bn3)
    assert out.shape == (N, Cout, H, W)
    err = float(jnp.max(jnp.abs(out - ref)))
    assert jnp.allclose(out, ref, rtol=1e-2, atol=1e-2), f"max abs diff {err}"
    print("KERNEL_OK")
</pallas_src>

<mosaic_0001>
module attributes {stable_mosaic.version = 11 : i64} {
  func.func @_dsc_kernel(%arg0: i32, %arg1: memref<1x256x8xf32, #tpu.memory_space<vmem>>, %arg2: memref<256x1xf32, #tpu.memory_space<vmem>>, %arg3: memref<256x1xf32, #tpu.memory_space<vmem>>, %arg4: memref<8x128xf32, #tpu.memory_space<vmem>>, %arg5: memref<1x128xf32, #tpu.memory_space<vmem>>, %arg6: memref<9x128xf32, #tpu.memory_space<vmem>>, %arg7: memref<1x128xf32, #tpu.memory_space<vmem>>, %arg8: memref<128x128xf32, #tpu.memory_space<vmem>>, %arg9: memref<128x128xf32, #tpu.memory_space<vmem>>, %arg10: memref<128x8xf32, #tpu.memory_space<vmem>>, %arg11: memref<1x8xf32, #tpu.memory_space<vmem>>, %arg12: memref<1x256x8xf32, #tpu.memory_space<vmem>>, %arg13: memref<864x128xf32, #tpu.memory_space<vmem>>) attributes {dimension_semantics = [#tpu.dimension_semantics<parallel>], iteration_bounds = array<i64: 2>, scalar_prefetch = 0 : i64, scratch_operands = 1 : i64, tpu.core_type = #tpu.core_type<tc>, window_params = [{transform_indices = @transform_0, window_bounds = array<i64: 1, 256, 8>}, {pipeline_mode = #tpu.pipeline_mode<synchronous>, transform_indices = @transform_1, window_bounds = array<i64: 256, 1>}, {pipeline_mode = #tpu.pipeline_mode<synchronous>, transform_indices = @transform_2, window_bounds = array<i64: 256, 1>}, {pipeline_mode = #tpu.pipeline_mode<synchronous>, transform_indices = @transform_3, window_bounds = array<i64: 8, 128>}, {pipeline_mode = #tpu.pipeline_mode<synchronous>, transform_indices = @transform_4, window_bounds = array<i64: 1, 128>}, {pipeline_mode = #tpu.pipeline_mode<synchronous>, transform_indices = @transform_5, window_bounds = array<i64: 9, 128>}, {pipeline_mode = #tpu.pipeline_mode<synchronous>, transform_indices = @transform_6, window_bounds = array<i64: 1, 128>}, {pipeline_mode = #tpu.pipeline_mode<synchronous>, transform_indices = @transform_7, window_bounds = array<i64: 128, 128>}, {pipeline_mode = #tpu.pipeline_mode<synchronous>, transform_indices = @transform_8, window_bounds = array<i64: 128, 128>}, {pipeline_mode = #tpu.pipeline_mode<synchronous>, transform_indices = @transform_9, window_bounds = array<i64: 128, 8>}, {pipeline_mode = #tpu.pipeline_mode<synchronous>, transform_indices = @transform_10, window_bounds = array<i64: 1, 8>}, {transform_indices = @transform_11, window_bounds = array<i64: 1, 256, 8>}]} {
    %cst = arith.constant 0.000000e+00 : f32
    %0 = vector.broadcast %cst : f32 to vector<16x128xf32>
    %c0 = arith.constant 0 : index
    %c0_0 = arith.constant 0 : index
    %1 = vector.load %arg13[%c0, %c0_0] : memref<864x128xf32, #tpu.memory_space<vmem>>, vector<16x128xf32>
    tpu.vector_store %arg13[%c0, %c0_0], %0 {strides = array<i32>} : memref<864x128xf32, #tpu.memory_space<vmem>>, vector<16x128xf32>,
    %c272 = arith.constant 272 : index
    %c0_1 = arith.constant 0 : index
    %2 = vector.load %arg13[%c272, %c0_1] : memref<864x128xf32, #tpu.memory_space<vmem>>, vector<16x128xf32>
    tpu.vector_store %arg13[%c272, %c0_1], %0 {strides = array<i32>} : memref<864x128xf32, #tpu.memory_space<vmem>>, vector<16x128xf32>,
    %c288 = arith.constant 288 : index
    %c0_2 = arith.constant 0 : index
    %3 = vector.load %arg13[%c288, %c0_2] : memref<864x128xf32, #tpu.memory_space<vmem>>, vector<16x128xf32>
    tpu.vector_store %arg13[%c288, %c0_2], %0 {strides = array<i32>} : memref<864x128xf32, #tpu.memory_space<vmem>>, vector<16x128xf32>,
    %c560 = arith.constant 560 : index
    %c0_3 = arith.constant 0 : index
    %4 = vector.load %arg13[%c560, %c0_3] : memref<864x128xf32, #tpu.memory_space<vmem>>, vector<16x128xf32>
    tpu.vector_store %arg13[%c560, %c0_3], %0 {strides = array<i32>} : memref<864x128xf32, #tpu.memory_space<vmem>>, vector<16x128xf32>,
    %c576 = arith.constant 576 : index
    %c0_4 = arith.constant 0 : index
    %5 = vector.load %arg13[%c576, %c0_4] : memref<864x128xf32, #tpu.memory_space<vmem>>, vector<16x128xf32>
    tpu.vector_store %arg13[%c576, %c0_4], %0 {strides = array<i32>} : memref<864x128xf32, #tpu.memory_space<vmem>>, vector<16x128xf32>,
    %c848 = arith.constant 848 : index
    %c0_5 = arith.constant 0 : index
    %6 = vector.load %arg13[%c848, %c0_5] : memref<864x128xf32, #tpu.memory_space<vmem>>, vector<16x128xf32>
    tpu.vector_store %arg13[%c848, %c0_5], %0 {strides = array<i32>} : memref<864x128xf32, #tpu.memory_space<vmem>>, vector<16x128xf32>,
    %c0_6 = arith.constant 0 : index
    %c0_7 = arith.constant 0 : index
    %c0_8 = arith.constant 0 : index
    %7 = vector.load %arg1[%c0_6, %c0_7, %c0_8] : memref<1x256x8xf32, #tpu.memory_space<vmem>>, vector<1x256x8xf32>
    %8 = vector.shape_cast %7 : vector<1x256x8xf32> to vector<256x8xf32>
    %c0_9 = arith.constant 0 : index
    %c0_10 = arith.constant 0 : index
    %9 = vector.load %arg4[%c0_9, %c0_10] : memref<8x128xf32, #tpu.memory_space<vmem>>, vector<8x128xf32>
    %cst_11 = arith.constant dense<0.000000e+00> : vector<256x128xf32>
    %10 = tpu.matmul %8, %9, %cst_11 {dimension_numbers = #tpu.dot_dimension_numbers<[1], [0], [0], [1], [0, 0, 1, 1], [], []>} : vector<256x8xf32>, vector<8x128xf32>, vector<256x128xf32> -> vector<256x128xf32>
    %c0_12 = arith.constant 0 : index
    %c0_13 = arith.constant 0 : index
    %11 = vector.load %arg5[%c0_12, %c0_13] : memref<1x128xf32, #tpu.memory_space<vmem>>, vector<1x128xf32>
    %12 = vector.broadcast %11 : vector<1x128xf32> to vector<256x128xf32>
    %13 = arith.addf %10, %12 : vector<256x128xf32>
    %cst_14 = arith.constant 0.000000e+00 : f32
    %14 = vector.broadcast %cst_14 : f32 to vector<256x128xf32>
    %15 = arith.maximumf %13, %14 : vector<256x128xf32>
    %c304 = arith.constant 304 : index
    %c0_15 = arith.constant 0 : index
    %16 = vector.load %arg13[%c304, %c0_15] : memref<864x128xf32, #tpu.memory_space<vmem>>, vector<256x128xf32>
    tpu.vector_store %arg13[%c304, %c0_15], %15 {strides = array<i32>} : memref<864x128xf32, #tpu.memory_space<vmem>>, vector<256x128xf32>,
    %c303 = arith.constant 303 : index
    %c0_16 = arith.constant 0 : index
    %17 = vector.load %arg13[%c303, %c0_16] : memref<864x128xf32, #tpu.memory_space<vmem>>, vector<256x128xf32>
    %c0_17 = arith.constant 0 : index
    %c0_18 = arith.constant 0 : index
    %18 = vector.load %arg2[%c0_17, %c0_18] : memref<256x1xf32, #tpu.memory_space<vmem>>, vector<256x1xf32>
    %19 = vector.broadcast %18 : vector<256x1xf32> to vector<256x128xf32>
    %20 = arith.mulf %17, %19 : vector<256x128xf32>
    %c305 = arith.constant 305 : index
    %c0_19 = arith.constant 0 : index
    %21 = vector.load %arg13[%c305, %c0_19] : memref<864x128xf32, #tpu.memory_space<vmem>>, vector<256x128xf32>
    %c0_20 = arith.constant 0 : index
    %c0_21 = arith.constant 0 : index
    %22 = vector.load %arg3[%c0_20, %c0_21] : memref<256x1xf32, #tpu.memory_space<vmem>>, vector<256x1xf32>
    %23 = vector.broadcast %22 : vector<256x1xf32> to vector<256x128xf32>
    %24 = arith.mulf %21, %23 : vector<256x128xf32>
    %c16 = arith.constant 16 : index
    %c0_22 = arith.constant 0 : index
    %25 = vector.load %arg13[%c16, %c0_22] : memref<864x128xf32, #tpu.memory_space<vmem>>, vector<256x128xf32>
    tpu.vector_store %arg13[%c16, %c0_22], %20 {strides = array<i32>} : memref<864x128xf32, #tpu.memory_space<vmem>>, vector<256x128xf32>,
    %c592 = arith.constant 592 : index
    %c0_23 = arith.constant 0 : index
    %26 = vector.load %arg13[%c592, %c0_23] : memref<864x128xf32, #tpu.memory_space<vmem>>, vector<256x128xf32>
    tpu.vector_store %arg13[%c592, %c0_23], %24 {strides = array<i32>} : memref<864x128xf32, #tpu.memory_space<vmem>>, vector<256x128xf32>,
    %c4 = arith.constant 4 : index
    %c0_24 = arith.constant 0 : index
    %27 = vector.load %arg6[%c4, %c0_24] : memref<9x128xf32, #tpu.memory_space<vmem>>, vector<1x128xf32>
    %28 = vector.broadcast %27 : vector<1x128xf32> to vector<256x128xf32>
    %29 = arith.mulf %15, %28 : vector<256x128xf32>
    %c0_25 = arith.constant 0 : index
    %c0_26 = arith.constant 0 : index
    %30 = vector.load %arg13[%c0_25, %c0_26] : memref<864x128xf32, #tpu.memory_space<vmem>>, vector<256x128xf32>
    %c0_27 = arith.constant 0 : index
    %c0_28 = arith.constant 0 : index
    %31 = vector.load %arg6[%c0_27, %c0_28] : memref<9x128xf32, #tpu.memory_space<vmem>>, vector<1x128xf32>
    %32 = vector.broadcast %31 : vector<1x128xf32> to vector<256x128xf32>
    %33 = arith.mulf %30, %32 : vector<256x128xf32>
    %34 = arith.addf %29, %33 : vector<256x128xf32>
    %c288_29 = arith.constant 288 : index
    %c0_30 = arith.constant 0 : index
    %35 = vector.load %arg13[%c288_29, %c0_30] : memref<864x128xf32, #tpu.memory_space<vmem>>, vector<256x128xf32>
    %c1 = arith.constant 1 : index
    %c0_31 = arith.constant 0 : index
    %36 = vector.load %arg6[%c1, %c0_31] : memref<9x128xf32, #tpu.memory_space<vmem>>, vector<1x128xf32>
    %37 = vector.broadcast %36 : vector<1x128xf32> to vector<256x128xf32>
    %38 = arith.mulf %35, %37 : vector<256x128xf32>
    %39 = arith.addf %34, %38 : vector<256x128xf32>
    %c576_32 = arith.constant 576 : index
    %c0_33 = arith.constant 0 : index
    %40 = vector.load %arg13[%c576_32, %c0_33] : memref<864x128xf32, #tpu.memory_space<vmem>>, vector<256x128xf32>
    %c2 = arith.constant 2 : index
    %c0_34 = arith.constant 0 : index
    %41 = vector.load %arg6[%c2, %c0_34] : memref<9x128xf32, #tpu.memory_space<vmem>>, vector<1x128xf32>
    %42 = vector.broadcast %41 : vector<1x128xf32> to vector<256x128xf32>
    %43 = arith.mulf %40, %42 : vector<256x128xf32>
    %44 = arith.addf %39, %43 : vector<256x128xf32>
    %c16_35 = arith.constant 16 : index
    %c0_36 = arith.constant 0 : index
    %45 = vector.load %arg13[%c16_35, %c0_36] : memref<864x128xf32, #tpu.memory_space<vmem>>, vector<256x128xf32>
    %c3 = arith.constant 3 : index
    %c0_37 = arith.constant 0 : index
    %46 = vector.load %arg6[%c3, %c0_37] : memref<9x128xf32, #tpu.memory_space<vmem>>, vector<1x128xf32>
    %47 = vector.broadcast %46 : vector<1x128xf32> to vector<256x128xf32>
    %48 = arith.mulf %45, %47 : vector<256x128xf32>
    %49 = arith.addf %44, %48 : vector<256x128xf32>
    %c592_38 = arith.constant 592 : index
    %c0_39 = arith.constant 0 : index
    %50 = vector.load %arg13[%c592_38, %c0_39] : memref<864x128xf32, #tpu.memory_space<vmem>>, vector<256x128xf32>
    %c5 = arith.constant 5 : index
    %c0_40 = arith.constant 0 : index
    %51 = vector.load %arg6[%c5, %c0_40] : memref<9x128xf32, #tpu.memory_space<vmem>>, vector<1x128xf32>
    %52 = vector.broadcast %51 : vector<1x128xf32> to vector<256x128xf32>
    %53 = arith.mulf %50, %52 : vector<256x128xf32>
    %54 = arith.addf %49, %53 : vector<256x128xf32>
    %c32 = arith.constant 32 : index
    %c0_41 = arith.constant 0 : index
    %55 = vector.load %arg13[%c32, %c0_41] : memref<864x128xf32, #tpu.memory_space<vmem>>, vector<256x128xf32>
    %c6 = arith.constant 6 : index
    %c0_42 = arith.constant 0 : index
    %56 = vector.load %arg6[%c6, %c0_42] : memref<9x128xf32, #tpu.memory_space<vmem>>, vector<1x128xf32>
    %57 = vector.broadcast %56 : vector<1x128xf32> to vector<256x128xf32>
    %58 = arith.mulf %55, %57 : vector<256x128xf32>
    %59 = arith.addf %54, %58 : vector<256x128xf32>
    %c320 = arith.constant 320 : index
    %c0_43 = arith.constant 0 : index
    %60 = vector.load %arg13[%c320, %c0_43] : memref<864x128xf32, #tpu.memory_space<vmem>>, vector<256x128xf32>
    %c7 = arith.constant 7 : index
    %c0_44 = arith.constant 0 : index
    %61 = vector.load %arg6[%c7, %c0_44] : memref<9x128xf32, #tpu.memory_space<vmem>>, vector<1x128xf32>
    %62 = vector.broadcast %61 : vector<1x128xf32> to vector<256x128xf32>
    %63 = arith.mulf %60, %62 : vector<256x128xf32>
    %64 = arith.addf %59, %63 : vector<256x128xf32>
    %c608 = arith.constant 608 : index
    %c0_45 = arith.constant 0 : index
    %65 = vector.load %arg13[%c608, %c0_45] : memref<864x128xf32, #tpu.memory_space<vmem>>, vector<256x128xf32>
    %c8 = arith.constant 8 : index
    %c0_46 = arith.constant 0 : index
    %66 = vector.load %arg6[%c8, %c0_46] : memref<9x128xf32, #tpu.memory_space<vmem>>, vector<1x128xf32>
    %67 = vector.broadcast %66 : vector<1x128xf32> to vector<256x128xf32>
    %68 = arith.mulf %65, %67 : vector<256x128xf32>
    %69 = arith.addf %64, %68 : vector<256x128xf32>
    %c0_47 = arith.constant 0 : index
    %c0_48 = arith.constant 0 : index
    %70 = vector.load %arg7[%c0_47, %c0_48] : memref<1x128xf32, #tpu.memory_space<vmem>>, vector<1x128xf32>
    %71 = vector.broadcast %70 : vector<1x128xf32> to vector<256x128xf32>
    %72 = arith.addf %69, %71 : vector<256x128xf32>
    %cst_49 = arith.constant 0.000000e+00 : f32
    %73 = vector.broadcast %cst_49 : f32 to vector<256x128xf32>
    %74 = arith.maximumf %72, %73 : vector<256x128xf32>
    %cst_50 = arith.constant dense<0.000000e+00> : vector<128xf32>
    %75 = vector.multi_reduction <add>, %74, %cst_50 [0] : vector<256x128xf32> to vector<128xf32>
    %76 = vector.shape_cast %75 : vector<128xf32> to vector<1x128xf32>
    %cst_51 = arith.constant 3.906250e-03 : f32
    %77 = vector.broadcast %cst_51 : f32 to vector<1x128xf32>
    %78 = arith.mulf %76, %77 : vector<1x128xf32>
    %c0_52 = arith.constant 0 : index
    %c0_53 = arith.constant 0 : index
    %79 = vector.load %arg8[%c0_52, %c0_53] : memref<128x128xf32, #tpu.memory_space<vmem>>, vector<128x128xf32>
    %cst_54 = arith.constant dense<0.000000e+00> : vector<1x128xf32>
    %80 = tpu.matmul %78, %79, %cst_54 {dimension_numbers = #tpu.dot_dimension_numbers<[1], [0], [0], [1], [0, 0, 1, 1], [], []>} : vector<1x128xf32>, vector<128x128xf32>, vector<1x128xf32> -> vector<1x128xf32>
    %cst_55 = arith.constant 0.000000e+00 : f32
    %81 = vector.broadcast %cst_55 : f32 to vector<1x128xf32>
    %82 = arith.maximumf %80, %81 : vector<1x128xf32>
    %c0_56 = arith.constant 0 : index
    %c0_57 = arith.constant 0 : index
    %83 = vector.load %arg9[%c0_56, %c0_57] : memref<128x128xf32, #tpu.memory_space<vmem>>, vector<128x128xf32>
    %cst_58 = arith.constant dense<0.000000e+00> : vector<1x128xf32>
    %84 = tpu.matmul %82, %83, %cst_58 {dimension_numbers = #tpu.dot_dimension_numbers<[1], [0], [0], [1], [0, 0, 1, 1], [], []>} : vector<1x128xf32>, vector<128x128xf32>, vector<1x128xf32> -> vector<1x128xf32>
    %cst_59 = arith.constant 0.000000e+00 : f32
    %85 = vector.broadcast %cst_59 : f32 to vector<1x128xf32>
    %86 = arith.subf %85, %84 : vector<1x128xf32>
    %87 = math.exp %86 : vector<1x128xf32>
    %cst_60 = arith.constant 1.000000e+00 : f32
    %88 = vector.broadcast %cst_60 : f32 to vector<1x128xf32>
    %89 = arith.addf %88, %87 : vector<1x128xf32>
    %cst_61 = arith.constant 1.000000e+00 : f32
    %90 = vector.broadcast %cst_61 : f32 to vector<1x128xf32>
    %91 = arith.divf %90, %89 : vector<1x128xf32>
    %92 = vector.broadcast %91 : vector<1x128xf32> to vector<256x128xf32>
    %93 = arith.mulf %74, %92 : vector<256x128xf32>
    %c0_62 = arith.constant 0 : index
    %c0_63 = arith.constant 0 : index
    %94 = vector.load %arg10[%c0_62, %c0_63] : memref<128x8xf32, #tpu.memory_space<vmem>>, vector<128x8xf32>
    %cst_64 = arith.constant dense<0.000000e+00> : vector<256x8xf32>
    %95 = tpu.matmul %93, %94, %cst_64 {dimension_numbers = #tpu.dot_dimension_numbers<[1], [0], [0], [1], [0, 0, 1, 1], [], []>} : vector<256x128xf32>, vector<128x8xf32>, vector<256x8xf32> -> vector<256x8xf32>
    %c0_65 = arith.constant 0 : index
    %c0_66 = arith.constant 0 : index
    %96 = vector.load %arg11[%c0_65, %c0_66] : memref<1x8xf32, #tpu.memory_space<vmem>>, vector<1x8xf32>
    %97 = vector.broadcast %96 : vector<1x8xf32> to vector<256x8xf32>
    %98 = arith.addf %95, %97 : vector<256x8xf32>
    %99 = arith.addf %98, %8 : vector<256x8xf32>
    %c0_67 = arith.constant 0 : index
    %c0_68 = arith.constant 0 : index
    %c0_69 = arith.constant 0 : index
    %100 = vector.load %arg12[%c0_67, %c0_68, %c0_69] : memref<1x256x8xf32, #tpu.memory_space<vmem>>, vector<1x256x8xf32>
    %101 = vector.shape_cast %100 : vector<1x256x8xf32> to vector<256x8xf32>
    %102 = vector.shape_cast %99 : vector<256x8xf32> to vector<1x256x8xf32>
    tpu.vector_store %arg12[%c0_67, %c0_68, %c0_69], %102 {strides = array<i32>} : memref<1x256x8xf32, #tpu.memory_space<vmem>>, vector<1x256x8xf32>,
    return
  }
  func.func @transform_0(%arg0: i32) -> (i32, i32, i32) {
    %c0_i32 = arith.constant 0 : i32
    %c0_i32_0 = arith.constant 0 : i32
    %c0_i32_1 = arith.constant 0 : i32
    return %arg0, %c0_i32, %c0_i32_0 : i32, i32, i32
  }
  func.func @transform_1(%arg0: i32) -> (i32, i32) {
    %c0_i32 = arith.constant 0 : i32
    %c0_i32_0 = arith.constant 0 : i32
    %c0_i32_1 = arith.constant 0 : i32
    return %c0_i32, %c0_i32_0 : i32, i32
  }
  func.func @transform_2(%arg0: i32) -> (i32, i32) {
    %c0_i32 = arith.constant 0 : i32
    %c0_i32_0 = arith.constant 0 : i32
    %c0_i32_1 = arith.constant 0 : i32
    return %c0_i32, %c0_i32_0 : i32, i32
  }
  func.func @transform_3(%arg0: i32) -> (i32, i32) {
    %c0_i32 = arith.constant 0 : i32
    %c0_i32_0 = arith.constant 0 : i32
    %c0_i32_1 = arith.constant 0 : i32
    return %c0_i32, %c0_i32_0 : i32, i32
  }
  func.func @transform_4(%arg0: i32) -> (i32, i32) {
    %c0_i32 = arith.constant 0 : i32
    %c0_i32_0 = arith.constant 0 : i32
    %c0_i32_1 = arith.constant 0 : i32
    return %c0_i32, %c0_i32_0 : i32, i32
  }
  func.func @transform_5(%arg0: i32) -> (i32, i32) {
    %c0_i32 = arith.constant 0 : i32
    %c0_i32_0 = arith.constant 0 : i32
    %c0_i32_1 = arith.constant 0 : i32
    return %c0_i32, %c0_i32_0 : i32, i32
  }
  func.func @transform_6(%arg0: i32) -> (i32, i32) {
    %c0_i32 = arith.constant 0 : i32
    %c0_i32_0 = arith.constant 0 : i32
    %c0_i32_1 = arith.constant 0 : i32
    return %c0_i32, %c0_i32_0 : i32, i32
  }
  func.func @transform_7(%arg0: i32) -> (i32, i32) {
    %c0_i32 = arith.constant 0 : i32
    %c0_i32_0 = arith.constant 0 : i32
    %c0_i32_1 = arith.constant 0 : i32
    return %c0_i32, %c0_i32_0 : i32, i32
  }
  func.func @transform_8(%arg0: i32) -> (i32, i32) {
    %c0_i32 = arith.constant 0 : i32
    %c0_i32_0 = arith.constant 0 : i32
    %c0_i32_1 = arith.constant 0 : i32
    return %c0_i32, %c0_i32_0 : i32, i32
  }
  func.func @transform_9(%arg0: i32) -> (i32, i32) {
    %c0_i32 = arith.constant 0 : i32
    %c0_i32_0 = arith.constant 0 : i32
    %c0_i32_1 = arith.constant 0 : i32
    return %c0_i32, %c0_i32_0 : i32, i32
  }
  func.func @transform_10(%arg0: i32) -> (i32, i32) {
    %c0_i32 = arith.constant 0 : i32
    %c0_i32_0 = arith.constant 0 : i32
    %c0_i32_1 = arith.constant 0 : i32
    return %c0_i32, %c0_i32_0 : i32, i32
  }
  func.func @transform_11(%arg0: i32) -> (i32, i32, i32) {
    %c0_i32 = arith.constant 0 : i32
    %c0_i32_0 = arith.constant 0 : i32
    %c0_i32_1 = arith.constant 0 : i32
    return %arg0, %c0_i32, %c0_i32_0 : i32, i32, i32
  }
}

</mosaic_0001>

<llo_original>
// kernel: tpu_custom_call.1
$region0: #{tpu_custom_call.1}
  #allocation0 [shape = 'u32[]', space=smem, size = 0x4, offset = 0x4, fixed_abs, tag = 'smem constant byte address 0x4 - core index']
  #allocation1 [shape = 'u32[144,128]{1,0:T(1,128)}', space=vmem, size = 0x12000, scoped, tag = 'internal scratch']
  #allocation2 [shape = 'f32[864,128]{1,0:T(8,128)}', space=vmem, size = 0x6c000, scoped, tag = 'scratch operand']
  %s0 = inlined_call_operand.vmem [shape: f32[2,256,8], index: 0, kind: input, shape index: {}]
  %s1 = inlined_call_operand.vmem [shape: f32[256,1], index: 1, kind: input, shape index: {}]
  %s2 = inlined_call_operand.vmem [shape: f32[256,1], index: 2, kind: input, shape index: {}]
  %s3 = inlined_call_operand.vmem [shape: f32[8,128], index: 3, kind: input, shape index: {}]
  %s4 = inlined_call_operand.vmem [shape: f32[1,128], index: 4, kind: input, shape index: {}]
  %s5 = inlined_call_operand.vmem [shape: f32[9,128], index: 5, kind: input, shape index: {}]
  %s6 = inlined_call_operand.vmem [shape: f32[1,128], index: 6, kind: input, shape index: {}]
  %s7 = inlined_call_operand.vmem [shape: f32[128,128], index: 7, kind: input, shape index: {}]
  %s8 = inlined_call_operand.vmem [shape: f32[128,128], index: 8, kind: input, shape index: {}]
  %s9 = inlined_call_operand.vmem [shape: f32[128,8], index: 9, kind: input, shape index: {}]
  %s10 = inlined_call_operand.vmem [shape: f32[1,8], index: 10, kind: input, shape index: {}]
  %s11 = inlined_call_operand.vmem [shape: f32[2,256,8], index: 11, kind: output, shape index: {}]
  %s12 = sld [smem:[#allocation0]]
  $region77: #{tpu_custom_call.1} parent=0
    _
  %s14 = ssub.s32 1, %s12
  %s15 = scalar_select 0, %s14, %s12
  loop: start=0, step=1, limit=4
  $region2: #{tpu_custom_call.1} parent=0 // loop_pre_header
    _
  $region3: #{tpu_custom_call.1} parent=0 // loop_header
    %s17 = sphi 0, %s21
    %p18 = scmp.ge.s32.totalorder %s17, 4
    %s27 = sphi 0, %s29
    %s30 = sphi 0, %s27
    %s31 = sphi 0, %s30
    %s47 = sphi 0, %s31
    %s51 = sphi 0, %s51
    %s53 = sphi 0, %s51
    %s54 = sphi 0, %s53
    %s68 = sphi 0, %s54
    %s72 = sphi 0, %s72
    %s74 = sphi 0, %s72
    %s75 = sphi 0, %s74
    %s89 = sphi 0, %s75
    %s93 = sphi 0, %s93
    %s95 = sphi 0, %s93
    %s96 = sphi 0, %s95
    %s110 = sphi 0, %s96
    %s114 = sphi 0, %s114
    %s116 = sphi 0, %s114
    %s117 = sphi 0, %s116
    %s131 = sphi 0, %s117
    %s135 = sphi 0, %s135
    %s137 = sphi 0, %s135
    %s138 = sphi 0, %s137
    %s152 = sphi 0, %s138
    %s156 = sphi 0, %s156
    %s158 = sphi 0, %s156
    %s159 = sphi 0, %s158
    %s173 = sphi 0, %s159
    %s177 = sphi 0, %s177
    %s179 = sphi 0, %s177
    %s180 = sphi 0, %s179
    %s194 = sphi 0, %s180
    %s198 = sphi 0, %s198
    %s200 = sphi 0, %s198
    %s201 = sphi 0, %s200
    %s215 = sphi 0, %s201
    %s219 = sphi 0, %s219
    %s221 = sphi 0, %s219
    %s222 = sphi 0, %s221
    %s236 = sphi 0, %s222
    %s240 = sphi 0, %s240
    %s242 = sphi 0, %s240
    %s243 = sphi 0, %s242
    %s257 = sphi 0, %s243
    %s263 = sphi 0, %s265
    %s266 = sphi 0, %s263
    %s267 = sphi 0, %s266
    %s283 = sphi 0, %s267
  $region4: #{tpu_custom_call.1} parent=0 // loop_header_branch
    %20 = sbr.rel (%p18) target = $region8
  $region5: #{tpu_custom_call.1} parent=0 // loop_body
    %s22 = ssub.s32 %s17, 1
    %s23 = ssub.s32 %s17, 2
    %s24 = sadd.s32 %s17, 1
    %s25 = ssub.s32 %s17, %s24
    %p26 = scmp.eq.s32.totalorder %s25, 0
    %s28 = sadd.s32 %s27, 1
    %s29 = scalar_select %p26, %s27, %s28
    %p32 = pneg %p26
    %p33 = scmp.eq.s32.totalorder %s17, 1
    %p34 = por %p32, %p33
    %p35 = scmp.ne.s32.totalorder %s27, %s30
    %p36 = scmp.eq.s32.totalorder %s17, 0
    %p37 = por %p35, %p36
    %p38 = scmp.ne.s32.totalorder %s27, %s30
    %p39 = scmp.eq.s32.totalorder %s22, 1
    %p40 = por %p38, %p39
    %p41 = scmp.ne.s32.totalorder %s30, %s31
    %p42 = scmp.eq.s32.totalorder %s22, 0
    %p43 = por %p41, %p42
    %p44 = scmp.ne.s32.totalorder %s30, %s31
    %p45 = scmp.eq.s32.totalorder %s23, 1
    %p46 = por %p44, %p45
    %p48 = scmp.ne.s32.totalorder %s31, %s47
    %p49 = scmp.eq.s32.totalorder %s23, 0
    %p50 = por %p48, %p49
    %s52 = sadd.s32 %s51, 1
    %p55 = scmp.eq.s32.totalorder %s17, 1
    %p56 = scmp.ne.s32.totalorder %s51, %s53
    %p57 = scmp.eq.s32.totalorder %s17, 0
    %p58 = por %p56, %p57
    %p59 = scmp.ne.s32.totalorder %s51, %s53
    %p60 = scmp.eq.s32.totalorder %s22, 1
    %p61 = por %p59, %p60
    %p62 = scmp.ne.s32.totalorder %s53, %s54
    %p63 = scmp.eq.s32.totalorder %s22, 0
    %p64 = por %p62, %p63
    %p65 = scmp.ne.s32.totalorder %s53, %s54
    %p66 = scmp.eq.s32.totalorder %s23, 1
    %p67 = por %p65, %p66
    %p69 = scmp.ne.s32.totalorder %s54, %s68
    %p70 = scmp.eq.s32.totalorder %s23, 0
    %p71 = por %p69, %p70
    %s73 = sadd.s32 %s72, 1
    %p76 = scmp.eq.s32.totalorder %s17, 1
    %p77 = scmp.ne.s32.totalorder %s72, %s74
    %p78 = scmp.eq.s32.totalorder %s17, 0
    %p79 = por %p77, %p78
    %p80 = scmp.ne.s32.totalorder %s72, %s74
    %p81 = scmp.eq.s32.totalorder %s22, 1
    %p82 = por %p80, %p81
    %p83 = scmp.ne.s32.totalorder %s74, %s75
    %p84 = scmp.eq.s32.totalorder %s22, 0
    %p85 = por %p83, %p84
    %p86 = scmp.ne.s32.totalorder %s74, %s75
    %p87 = scmp.eq.s32.totalorder %s23, 1
    %p88 = por %p86, %p87
    %p90 = scmp.ne.s32.totalorder %s75, %s89
    %p91 = scmp.eq.s32.totalorder %s23, 0
    %p92 = por %p90, %p91
    %s94 = sadd.s32 %s93, 1
    %p97 = scmp.eq.s32.totalorder %s17, 1
    %p98 = scmp.ne.s32.totalorder %s93, %s95
    %p99 = scmp.eq.s32.totalorder %s17, 0
    %p100 = por %p98, %p99
    %p101 = scmp.ne.s32.totalorder %s93, %s95
    %p102 = scmp.eq.s32.totalorder %s22, 1
    %p103 = por %p101, %p102
    %p104 = scmp.ne.s32.totalorder %s95, %s96
    %p105 = scmp.eq.s32.totalorder %s22, 0
    %p106 = por %p104, %p105
    %p107 = scmp.ne.s32.totalorder %s95, %s96
    %p108 = scmp.eq.s32.totalorder %s23, 1
    %p109 = por %p107, %p108
    %p111 = scmp.ne.s32.totalorder %s96, %s110
    %p112 = scmp.eq.s32.totalorder %s23, 0
    %p113 = por %p111, %p112
    %s115 = sadd.s32 %s114, 1
    %p118 = scmp.eq.s32.totalorder %s17, 1
    %p119 = scmp.ne.s32.totalorder %s114, %s116
    %p120 = scmp.eq.s32.totalorder %s17, 0
    %p121 = por %p119, %p120
    %p122 = scmp.ne.s32.totalorder %s114, %s116
    %p123 = scmp.eq.s32.totalorder %s22, 1
    %p124 = por %p122, %p123
    %p125 = scmp.ne.s32.totalorder %s116, %s117
    %p126 = scmp.eq.s32.totalorder %s22, 0
    %p127 = por %p125, %p126
    %p128 = scmp.ne.s32.totalorder %s116, %s117
    %p129 = scmp.eq.s32.totalorder %s23, 1
    %p130 = por %p128, %p129
    %p132 = scmp.ne.s32.totalorder %s117, %s131
    %p133 = scmp.eq.s32.totalorder %s23, 0
    %p134 = por %p132, %p133
    %s136 = sadd.s32 %s135, 1
    %p139 = scmp.eq.s32.totalorder %s17, 1
    %p140 = scmp.ne.s32.totalorder %s135, %s137
    %p141 = scmp.eq.s32.totalorder %s17, 0
    %p142 = por %p140, %p141
    %p143 = scmp.ne.s32.totalorder %s135, %s137
    %p144 = scmp.eq.s32.totalorder %s22, 1
    %p145 = por %p143, %p144
    %p146 = scmp.ne.s32.totalorder %s137, %s138
    %p147 = scmp.eq.s32.totalorder %s22, 0
    %p148 = por %p146, %p147
    %p149 = scmp.ne.s32.totalorder %s137, %s138
    %p150 = scmp.eq.s32.totalorder %s23, 1
    %p151 = por %p149, %p150
    %p153 = scmp.ne.s32.totalorder %s138, %s152
    %p154 = scmp.eq.s32.totalorder %s23, 0
    %p155 = por %p153, %p154
    %s157 = sadd.s32 %s156, 1
    %p160 = scmp.eq.s32.totalorder %s17, 1
    %p161 = scmp.ne.s32.totalorder %s156, %s158
    %p162 = scmp.eq.s32.totalorder %s17, 0
    %p163 = por %p161, %p162
    %p164 = scmp.ne.s32.totalorder %s156, %s158
    %p165 = scmp.eq.s32.totalorder %s22, 1
    %p166 = por %p164, %p165
    %p167 = scmp.ne.s32.totalorder %s158, %s159
    %p168 = scmp.eq.s32.totalorder %s22, 0
    %p169 = por %p167, %p168
    %p170 = scmp.ne.s32.totalorder %s158, %s159
    %p171 = scmp.eq.s32.totalorder %s23, 1
    %p172 = por %p170, %p171
    %p174 = scmp.ne.s32.totalorder %s159, %s173
    %p175 = scmp.eq.s32.totalorder %s23, 0
    %p176 = por %p174, %p175
    %s178 = sadd.s32 %s177, 1
    %p181 = scmp.eq.s32.totalorder %s17, 1
    %p182 = scmp.ne.s32.totalorder %s177, %s179
    %p183 = scmp.eq.s32.totalorder %s17, 0
    %p184 = por %p182, %p183
    %p185 = scmp.ne.s32.totalorder %s177, %s179
    %p186 = scmp.eq.s32.totalorder %s22, 1
    %p187 = por %p185, %p186
    %p188 = scmp.ne.s32.totalorder %s179, %s180
    %p189 = scmp.eq.s32.totalorder %s22, 0
    %p190 = por %p188, %p189
    %p191 = scmp.ne.s32.totalorder %s179, %s180
    %p192 = scmp.eq.s32.totalorder %s23, 1
    %p193 = por %p191, %p192
    %p195 = scmp.ne.s32.totalorder %s180, %s194
    %p196 = scmp.eq.s32.totalorder %s23, 0
    %p197 = por %p195, %p196
    %s199 = sadd.s32 %s198, 1
    %p202 = scmp.eq.s32.totalorder %s17, 1
    %p203 = scmp.ne.s32.totalorder %s198, %s200
    %p204 = scmp.eq.s32.totalorder %s17, 0
    %p205 = por %p203, %p204
    %p206 = scmp.ne.s32.totalorder %s198, %s200
    %p207 = scmp.eq.s32.totalorder %s22, 1
    %p208 = por %p206, %p207
    %p209 = scmp.ne.s32.totalorder %s200, %s201
    %p210 = scmp.eq.s32.totalorder %s22, 0
    %p211 = por %p209, %p210
    %p212 = scmp.ne.s32.totalorder %s200, %s201
    %p213 = scmp.eq.s32.totalorder %s23, 1
    %p214 = por %p212, %p213
    %p216 = scmp.ne.s32.totalorder %s201, %s215
    %p217 = scmp.eq.s32.totalorder %s23, 0
    %p218 = por %p216, %p217
    %s220 = sadd.s32 %s219, 1
    %p223 = scmp.eq.s32.totalorder %s17, 1
    %p224 = scmp.ne.s32.totalorder %s219, %s221
    %p225 = scmp.eq.s32.totalorder %s17, 0
    %p226 = por %p224, %p225
    %p227 = scmp.ne.s32.totalorder %s219, %s221
    %p228 = scmp.eq.s32.totalorder %s22, 1
    %p229 = por %p227, %p228
    %p230 = scmp.ne.s32.totalorder %s221, %s222
    %p231 = scmp.eq.s32.totalorder %s22, 0
    %p232 = por %p230, %p231
    %p233 = scmp.ne.s32.totalorder %s221, %s222
    %p234 = scmp.eq.s32.totalorder %s23, 1
    %p235 = por %p233, %p234
    %p237 = scmp.ne.s32.totalorder %s222, %s236
    %p238 = scmp.eq.s32.totalorder %s23, 0
    %p239 = por %p237, %p238
    %s241 = sadd.s32 %s240, 1
    %p244 = scmp.eq.s32.totalorder %s17, 1
    %p245 = scmp.ne.s32.totalorder %s240, %s242
    %p246 = scmp.eq.s32.totalorder %s17, 0
    %p247 = por %p245, %p246
    %p248 = scmp.ne.s32.totalorder %s240, %s242
    %p249 = scmp.eq.s32.totalorder %s22, 1
    %p250 = por %p248, %p249
    %p251 = scmp.ne.s32.totalorder %s242, %s243
    %p252 = scmp.eq.s32.totalorder %s22, 0
    %p253 = por %p251, %p252
    %p254 = scmp.ne.s32.totalorder %s242, %s243
    %p255 = scmp.eq.s32.totalorder %s23, 1
    %p256 = por %p254, %p255
    %p258 = scmp.ne.s32.totalorder %s243, %s257
    %p259 = scmp.eq.s32.totalorder %s23, 0
    %p260 = por %p258, %p259
    %s261 = ssub.s32 %s17, %s24
    %p262 = scmp.eq.s32.totalorder %s261, 0
    %s264 = sadd.s32 %s263, 1
    %s265 = scalar_select %p262, %s263, %s264
    %p268 = pneg %p262
    %p269 = scmp.eq.s32.totalorder %s17, 1
    %p270 = por %p268, %p269
    %p271 = scmp.ne.s32.totalorder %s263, %s266
    %p272 = scmp.eq.s32.totalorder %s17, 0
    %p273 = por %p271, %p272
    %p274 = scmp.ne.s32.totalorder %s263, %s266
    %p275 = scmp.eq.s32.totalorder %s22, 1
    %p276 = por %p274, %p275
    %p277 = scmp.ne.s32.totalorder %s266, %s267
    %p278 = scmp.eq.s32.totalorder %s22, 0
    %p279 = por %p277, %p278
    %p280 = scmp.ne.s32.totalorder %s266, %s267
    %p281 = scmp.eq.s32.totalorder %s23, 1
    %p282 = por %p280, %p281
    %p284 = scmp.ne.s32.totalorder %s267, %s283
    %p285 = scmp.eq.s32.totalorder %s23, 0
    %p286 = por %p284, %p285
    %p287 = scmp.le.s32.totalorder 1, %s17
    %p288 = scmp.lt.s32.totalorder %s17, 3
    %p289 = pnand %p287, %p288
    %p290 = pneg %p289
    // Predicated region
    $region9: #{tpu_custom_call.1} parent=5 // pred_check
      _
    $region10: #{tpu_custom_call.1} parent=5 // pred_check_branch
      %292 = sbr.rel (%p289) target = $region12
    $region11: #{tpu_custom_call.1} parent=5 // pred_region
      %s293 = ssub.s32 %s17, 1
      // Predicated region
      $region13: #{tpu_custom_call.1} parent=11 // pred_check
        %p294 = pneg %p64
      $region14: #{tpu_custom_call.1} parent=11 // pred_check_branch
        %296 = sbr.rel (%p294) target = $region16
      $region15: #{tpu_custom_call.1} parent=11 // pred_region
        _
      $region16: #{tpu_custom_call.1} parent=11 // pred_fallthru
        _
      // Predicated region
      $region17: #{tpu_custom_call.1} parent=11 // pred_check
        %p297 = pneg %p85
      $region18: #{tpu_custom_call.1} parent=11 // pred_check_branch
        %299 = sbr.rel (%p297) target = $region20
      $region19: #{tpu_custom_call.1} parent=11 // pred_region
        _
      $region20: #{tpu_custom_call.1} parent=11 // pred_fallthru
        _
      // Predicated region
      $region21: #{tpu_custom_call.1} parent=11 // pred_check
        %p300 = pneg %p106
      $region22: #{tpu_custom_call.1} parent=11 // pred_check_branch
        %302 = sbr.rel (%p300) target = $region24
      $region23: #{tpu_custom_call.1} parent=11 // pred_region
        _
      $region24: #{tpu_custom_call.1} parent=11 // pred_fallthru
        _
      // Predicated region
      $region25: #{tpu_custom_call.1} parent=11 // pred_check
        %p303 = pneg %p127
      $region26: #{tpu_custom_call.1} parent=11 // pred_check_branch
        %305 = sbr.rel (%p303) target = $region28
      $region27: #{tpu_custom_call.1} parent=11 // pred_region
        _
      $region28: #{tpu_custom_call.1} parent=11 // pred_fallthru
        _
      // Predicated region
      $region29: #{tpu_custom_call.1} parent=11 // pred_check
        %p306 = pneg %p148
      $region30: #{tpu_custom_call.1} parent=11 // pred_check_branch
        %308 = sbr.rel (%p306) target = $region32
      $region31: #{tpu_custom_call.1} parent=11 // pred_region
        _
      $region32: #{tpu_custom_call.1} parent=11 // pred_fallthru
        _
      // Predicated region
      $region33: #{tpu_custom_call.1} parent=11 // pred_check
        %p309 = pneg %p169
      $region34: #{tpu_custom_call.1} parent=11 // pred_check_branch
        %311 = sbr.rel (%p309) target = $region36
      $region35: #{tpu_custom_call.1} parent=11 // pred_region
        _
      $region36: #{tpu_custom_call.1} parent=11 // pred_fallthru
        _
      // Predicated region
      $region37: #{tpu_custom_call.1} parent=11 // pred_check
        %p312 = pneg %p190
      $region38: #{tpu_custom_call.1} parent=11 // pred_check_branch
        %314 = sbr.rel (%p312) target = $region40
      $region39: #{tpu_custom_call.1} parent=11 // pred_region
        _
      $region40: #{tpu_custom_call.1} parent=11 // pred_fallthru
        _
      // Predicated region
      $region41: #{tpu_custom_call.1} parent=11 // pred_check
        %p315 = pneg %p211
      $region42: #{tpu_custom_call.1} parent=11 // pred_check_branch
        %317 = sbr.rel (%p315) target = $region44
      $region43: #{tpu_custom_call.1} parent=11 // pred_region
        _
      $region44: #{tpu_custom_call.1} parent=11 // pred_fallthru
        _
      // Predicated region
      $region45: #{tpu_custom_call.1} parent=11 // pred_check
        %p318 = pneg %p232
      $region46: #{tpu_custom_call.1} parent=11 // pred_check_branch
        %320 = sbr.rel (%p318) target = $region48
      $region47: #{tpu_custom_call.1} parent=11 // pred_region
        _
      $region48: #{tpu_custom_call.1} parent=11 // pred_fallthru
        _
      // Predicated region
      $region49: #{tpu_custom_call.1} parent=11 // pred_check
        %p321 = pneg %p253
      $region50: #{tpu_custom_call.1} parent=11 // pred_check_branch
        %323 = sbr.rel (%p321) target = $region52
      $region51: #{tpu_custom_call.1} parent=11 // pred_region
        _
      $region52: #{tpu_custom_call.1} parent=11 // pred_fallthru
        _
    $region12: #{tpu_custom_call.1} parent=5 // pred_fallthru
      _
    %p324 = scmp.lt.s32.totalorder %s17, 2
    // Predicated region
    $region53: #{tpu_custom_call.1} parent=5 // pred_check
      %p325 = pneg %p324
    $region54: #{tpu_custom_call.1} parent=5 // pred_check_branch
      %327 = sbr.rel (%p325) target = $region56
    $region55: #{tpu_custom_call.1} parent=5 // pred_region
      // Predicated region
      $region57: #{tpu_custom_call.1} parent=55 // pred_check
        %p328 = pneg %p37
      $region58: #{tpu_custom_call.1} parent=55 // pred_check_branch
        %330 = sbr.rel (%p328) target = $region60
      $region59: #{tpu_custom_call.1} parent=55 // pred_region
        %p331 = scmp.lt.s32.totalorder %s17, 1
        %s332 = scalar_select %p331, %s17, 1
        %s333 = smul.addr %s332, 32
        %s334 = smul.addr %s333, 8
        %s335 = scalar_lea.vmem %s0, %s334
      $region60: #{tpu_custom_call.1} parent=55 // pred_fallthru
        _
    $region56: #{tpu_custom_call.1} parent=5 // pred_fallthru
      _
    %p336 = scmp.le.s32.totalorder 1, %s17
    %p337 = scmp.lt.s32.totalorder %s17, 3
    %p338 = pnand %p336, %p337
    %p339 = pneg %p338
    // Predicated region
    $region61: #{tpu_custom_call.1} parent=5 // pred_check
      _
    $region62: #{tpu_custom_call.1} parent=5 // pred_check_branch
      %341 = sbr.rel (%p338) target = $region64
    $region63: #{tpu_custom_call.1} parent=5 // pred_region
      %s342 = ssub.s32 %s17, 1
      %p343 = scmp.lt.s32.totalorder %s22, 1
      %s344 = scalar_select %p343, %s22, 1
      %s345 = smul.addr %s344, 32
      %s346 = smul.addr %s345, 8
      %s347 = scalar_lea.vmem %s0, %s346
      %p348 = pneg %p43
      %p349 = pneg %p40
      %p350 = pneg %p64
      %p351 = pneg %p61
      %p352 = pneg %p85
      %p353 = pneg %p82
      %p354 = pneg %p106
      %p355 = pneg %p103
      %p356 = pneg %p127
      %p357 = pneg %p124
      %p358 = pneg %p148
      %p359 = pneg %p145
      %p360 = pneg %p169
      %p361 = pneg %p166
      %p362 = pneg %p190
      %p363 = pneg %p187
      %p364 = pneg %p211
      %p365 = pneg %p208
      %p366 = pneg %p232
      %p367 = pneg %p229
      %p368 = pneg %p253
      %p369 = pneg %p250
      %p370 = pneg %p279
      %p371 = pneg %p276
      %p372 = scmp.lt.s32.totalorder %s22, 1
      %s373 = scalar_select %p372, %s22, 1
      %s374 = smul.addr %s373, 32
      %s375 = smul.addr %s374, 8
      %s376 = scalar_lea.vmem %s11, %s375
      %p377 = scmp.lt.s32.totalorder %s22, 1
      %s378 = scalar_select %p377, %s22, 1
      %s379 = smul.addr %s378, 32
      %s380 = smul.addr %s379, 8
      %s381 = scalar_lea.vmem %s0, %s380
      %p382 = scmp.lt.s32.totalorder %s22, 1
      %s383 = scalar_select %p382, %s22, 1
      %s384 = smul.addr %s383, 32
      %s385 = smul.addr %s384, 8
      %s386 = scalar_lea.vmem %s11, %s385
      %387 = vst [vmem:[#allocation2] sm:$0xff] 0.0
      %388 = vst [vmem:[#allocation2 + $0x8] sm:$0xff] 0.0
      %389 = vst [vmem:[#allocation2 + $0x110] sm:$0xff] 0.0
      %390 = vst [vmem:[#allocation2 + $0x118] sm:$0xff] 0.0
      %391 = vst [vmem:[#allocation2 + $0x120] sm:$0xff] 0.0
      %392 = vst [vmem:[#allocation2 + $0x128] sm:$0xff] 0.0
      %393 = vst [vmem:[#allocation2 + $0x230] sm:$0xff] 0.0
      %394 = vst [vmem:[#allocation2 + $0x238] sm:$0xff] 0.0
      %395 = vst [vmem:[#allocation2 + $0x240] sm:$0xff] 0.0
      %396 = vst [vmem:[#allocation2 + $0x248] sm:$0xff] 0.0
      %397 = vst [vmem:[#allocation2 + $0x350] sm:$0xff] 0.0
      %398 = vst [vmem:[#allocation2 + $0x358] sm:$0xff] 0.0
      %v399 = vld [vmem:[%s381] sm:$0xff]
      %v400 = vld [vmem:[%s381 + $0x8] sm:$0xff]
      %v401 = vld [vmem:[%s381 + $0x10] sm:$0xff]
      %v402 = vld [vmem:[%s381 + $0x18] sm:$0xff]
      %v403 = vld [vmem:[%s381 + $0x20] sm:$0xff]
      %v404 = vld [vmem:[%s381 + $0x28] sm:$0xff]
      %v405 = vld [vmem:[%s381 + $0x30] sm:$0xff]
      %v406 = vld [vmem:[%s381 + $0x38] sm:$0xff]
      %v407 = vld [vmem:[%s381 + $0x40] sm:$0xff]
      %v408 = vld [vmem:[%s381 + $0x48] sm:$0xff]
      %v409 = vld [vmem:[%s381 + $0x50] sm:$0xff]
      %v410 = vld [vmem:[%s381 + $0x58] sm:$0xff]
      %v411 = vld [vmem:[%s381 + $0x60] sm:$0xff]
      %v412 = vld [vmem:[%s381 + $0x68] sm:$0xff]
      %v413 = vld [vmem:[%s381 + $0x70] sm:$0xff]
      %v414 = vld [vmem:[%s381 + $0x78] sm:$0xff]
      %v415 = vld [vmem:[%s381 + $0x80] sm:$0xff]
      %v416 = vld [vmem:[%s381 + $0x88] sm:$0xff]
      %v417 = vld [vmem:[%s381 + $0x90] sm:$0xff]
      %v418 = vld [vmem:[%s381 + $0x98] sm:$0xff]
      %v419 = vld [vmem:[%s381 + $0xa0] sm:$0xff]
      %v420 = vld [vmem:[%s381 + $0xa8] sm:$0xff]
      %v421 = vld [vmem:[%s381 + $0xb0] sm:$0xff]
      %v422 = vld [vmem:[%s381 + $0xb8] sm:$0xff]
      %v423 = vld [vmem:[%s381 + $0xc0] sm:$0xff]
      %v424 = vld [vmem:[%s381 + $0xc8] sm:$0xff]
      %v425 = vld [vmem:[%s381 + $0xd0] sm:$0xff]
      %v426 = vld [vmem:[%s381 + $0xd8] sm:$0xff]
      %v427 = vld [vmem:[%s381 + $0xe0] sm:$0xff]
      %v428 = vld [vmem:[%s381 + $0xe8] sm:$0xff]
      %v429 = vld [vmem:[%s381 + $0xf0] sm:$0xff]
      %v430 = vld [vmem:[%s381 + $0xf8] sm:$0xff]
      %v431 = vld [vmem:[%s3] sm:$0xff]
      %v432 = vld [vmem:[%s4] sm:$0x1]
      %v434 = vlaneseq
      %v435 = vshrl.u32 %v434, 7
      %v436 = vsub.s32 0, %v435
      %v437 = vrot.slane %v432, %v436
      %vm439 = vcmask 64512
      %v441 = vsel %vm439, %v399, 0
      %v444 = vsel %vm439, %v400, 0
      %v447 = vsel %vm439, %v401, 0
      %v450 = vsel %vm439, %v402, 0
      %v453 = vsel %vm439, %v403, 0
      %v456 = vsel %vm439, %v404, 0
      %v459 = vsel %vm439, %v405, 0
      %v462 = vsel %vm439, %v406, 0
      %v465 = vsel %vm439, %v407, 0
      %v468 = vsel %vm439, %v408, 0
      %v471 = vsel %vm439, %v409, 0
      %v474 = vsel %vm439, %v410, 0
      %v477 = vsel %vm439, %v411, 0
      %v480 = vsel %vm439, %v412, 0
      %v483 = vsel %vm439, %v413, 0
      %v486 = vsel %vm439, %v414, 0
      %v489 = vsel %vm439, %v415, 0
      %v492 = vsel %vm439, %v416, 0
      %v495 = vsel %vm439, %v417, 0
      %v498 = vsel %vm439, %v418, 0
      %v501 = vsel %vm439, %v419, 0
      %v504 = vsel %vm439, %v420, 0
      %v507 = vsel %vm439, %v421, 0
      %v510 = vsel %vm439, %v422, 0
      %v513 = vsel %vm439, %v423, 0
      %v516 = vsel %vm439, %v424, 0
      %v519 = vsel %vm439, %v425, 0
      %v522 = vsel %vm439, %v426, 0
      %v525 = vsel %vm439, %v427, 0
      %v528 = vsel %vm439, %v428, 0
      %v531 = vsel %vm439, %v429, 0
      %v534 = vsel %vm439, %v430, 0
      %536 = vmatprep.subr.mxu0 0.0
      %537 = vmatpush1.msra.mxu0 %v431
      %538 = vmatprep.subr.mxu0 0.0
      %539 = vmatpush1.msra.mxu0 0.0
      %540 = vmatprep.subr.mxu0 0.0
      %541 = vmatpush1.msra.mxu0 0.0
      %542 = vmatprep.subr.mxu0 0.0
      %543 = vmatpush1.msra.mxu0 0.0
      %544 = vmatprep.subr.mxu0 0.0
      %545 = vmatpush1.msra.mxu0 0.0
      %546 = vmatprep.subr.mxu0 0.0
      %547 = vmatpush1.msra.mxu0 0.0
      %548 = vmatprep.subr.mxu0 0.0
      %549 = vmatpush1.msra.mxu0 0.0
      %550 = vmatprep.subr.mxu0 0.0
      %551 = vmatpush1.msra.mxu0 0.0
      %552 = vmatprep.subr.mxu0 0.0
      %553 = vmatpush1.msra.mxu0 0.0
      %554 = vmatprep.subr.mxu0 0.0
      %555 = vmatpush1.msra.mxu0 0.0
      %556 = vmatprep.subr.mxu0 0.0
      %557 = vmatpush1.msra.mxu0 0.0
      %558 = vmatprep.subr.mxu0 0.0
      %559 = vmatpush1.msra.mxu0 0.0
      %560 = vmatprep.subr.mxu0 0.0
      %561 = vmatpush1.msra.mxu0 0.0
      %562 = vmatprep.subr.mxu0 0.0
      %563 = vmatpush1.msra.mxu0 0.0
      %564 = vmatprep.subr.mxu0 0.0
      %565 = vmatpush1.msra.mxu0 0.0
      %566 = vmatprep.subr.mxu0 0.0
      %567 = vmatpush1.msra.mxu0 0.0
      %568 = vmatprep.subr.mxu0 0.0
      %569 = vmatpush1.msra.mxu0 0.0
      %570 = vmatprep.subr.mxu0 0.0
      %571 = vmatpush1.msra.mxu0 0.0
      %572 = vmatprep.subr.mxu0 0.0
      %573 = vmatpush1.msra.mxu0 0.0
      %574 = vmatprep.subr.mxu0 0.0
      %575 = vmatpush1.msra.mxu0 0.0
      %576 = vmatprep.subr.mxu0 0.0
      %577 = vmatpush1.msra.mxu0 0.0
      %578 = vmatprep.subr.mxu0 0.0
      %579 = vmatpush1.msra.mxu0 0.0
      %580 = vmatprep.subr.mxu0 0.0
      %581 = vmatpush1.msra.mxu0 0.0
      %582 = vmatprep.subr.mxu0 0.0
      %583 = vmatpush1.msra.mxu0 0.0
      %584 = vmatprep.subr.mxu0 0.0
      %585 = vmatpush1.msra.mxu0 0.0
      %586 = vmatprep.subr.mxu0 0.0
      %587 = vmatpush1.msra.mxu0 0.0
      %588 = vmatprep.subr.mxu0 0.0
      %589 = vmatpush1.msra.mxu0 0.0
      %590 = vmatprep.subr.mxu0 0.0
      %591 = vmatpush1.msra.mxu0 0.0
      %592 = vmatprep.subr.mxu0 0.0
      %593 = vmatpush1.msra.mxu0 0.0
      %594 = vmatprep.subr.mxu0 0.0
      %595 = vmatpush1.msra.mxu0 0.0
      %596 = vmatprep.subr.mxu0 0.0
      %597 = vmatpush1.msra.mxu0 0.0
      %598 = vmatprep.subr.mxu0 0.0
      %599 = vmatpush1.msra.mxu0 0.0
      %600 = vmatprep.mubr.f32.mxu0 0.0
      %601 = vmatmul.mubr.f32.gmra.mrb[0].mxu0 %v441
      %v602 = vpop.f32.mrb[0].mxu0
      %v603 = vadd.f32 %v437, %v602
      %v604 = vpop.f32.mrb[0].mxu0
      %605 = vmatprep.mubr.f32.mxu0 0.0
      %606 = vmatmul.mubr.f32.gmra.mrb[0].mxu0 %v444
      %v607 = vpop.f32.mrb[0].mxu0
      %v608 = vadd.f32 %v437, %v607
      %v609 = vpop.f32.mrb[0].mxu0
      %610 = vmatprep.mubr.f32.mxu0 0.0
      %611 = vmatmul.mubr.f32.gmra.mrb[0].mxu0 %v447
      %v612 = vpop.f32.mrb[0].mxu0
      %v613 = vadd.f32 %v437, %v612
      %v614 = vpop.f32.mrb[0].mxu0
      %615 = vmatprep.mubr.f32.mxu0 0.0
      %616 = vmatmul.mubr.f32.gmra.mrb[0].mxu0 %v450
      %v617 = vpop.f32.mrb[0].mxu0
      %v618 = vadd.f32 %v437, %v617
      %v619 = vpop.f32.mrb[0].mxu0
      %620 = vmatprep.mubr.f32.mxu0 0.0
      %621 = vmatmul.mubr.f32.gmra.mrb[0].mxu0 %v453
      %v622 = vpop.f32.mrb[0].mxu0
      %v623 = vadd.f32 %v437, %v622
      %v624 = vpop.f32.mrb[0].mxu0
      %625 = vmatprep.mubr.f32.mxu0 0.0
      %626 = vmatmul.mubr.f32.gmra.mrb[0].mxu0 %v456
      %v627 = vpop.f32.mrb[0].mxu0
      %v628 = vadd.f32 %v437, %v627
      %v629 = vpop.f32.mrb[0].mxu0
      %630 = vmatprep.mubr.f32.mxu0 0.0
      %631 = vmatmul.mubr.f32.gmra.mrb[0].mxu0 %v459
      %v632 = vpop.f32.mrb[0].mxu0
      %v633 = vadd.f32 %v437, %v632
      %v634 = vpop.f32.mrb[0].mxu0
      %635 = vmatprep.mubr.f32.mxu0 0.0
      %636 = vmatmul.mubr.f32.gmra.mrb[0].mxu0 %v462
      %v637 = vpop.f32.mrb[0].mxu0
      %v638 = vadd.f32 %v437, %v637
      %v639 = vpop.f32.mrb[0].mxu0
      %640 = vmatprep.mubr.f32.mxu0 0.0
      %641 = vmatmul.mubr.f32.gmra.mrb[0].mxu0 %v465
      %v642 = vpop.f32.mrb[0].mxu0
      %v643 = vadd.f32 %v437, %v642
      %v644 = vpop.f32.mrb[0].mxu0
      %645 = vmatprep.mubr.f32.mxu0 0.0
      %646 = vmatmul.mubr.f32.gmra.mrb[0].mxu0 %v468
      %v647 = vpop.f32.mrb[0].mxu0
      %v648 = vadd.f32 %v437, %v647
      %v649 = vpop.f32.mrb[0].mxu0
      %650 = vmatprep.mubr.f32.mxu0 0.0
      %651 = vmatmul.mubr.f32.gmra.mrb[0].mxu0 %v471
      %v652 = vpop.f32.mrb[0].mxu0
      %v653 = vadd.f32 %v437, %v652
      %v654 = vpop.f32.mrb[0].mxu0
      %655 = vmatprep.mubr.f32.mxu0 0.0
      %656 = vmatmul.mubr.f32.gmra.mrb[0].mxu0 %v474
      %v657 = vpop.f32.mrb[0].mxu0
      %v658 = vadd.f32 %v437, %v657
      %v659 = vpop.f32.mrb[0].mxu0
      %660 = vmatprep.mubr.f32.mxu0 0.0
      %661 = vmatmul.mubr.f32.gmra.mrb[0].mxu0 %v477
      %v662 = vpop.f32.mrb[0].mxu0
      %v663 = vadd.f32 %v437, %v662
      %v664 = vpop.f32.mrb[0].mxu0
      %665 = vmatprep.mubr.f32.mxu0 0.0
      %666 = vmatmul.mubr.f32.gmra.mrb[0].mxu0 %v480
      %v667 = vpop.f32.mrb[0].mxu0
      %v668 = vadd.f32 %v437, %v667
      %v669 = vpop.f32.mrb[0].mxu0
      %670 = vmatprep.mubr.f32.mxu0 0.0
      %671 = vmatmul.mubr.f32.gmra.mrb[0].mxu0 %v483
      %v672 = vpop.f32.mrb[0].mxu0
      %v673 = vadd.f32 %v437, %v672
      %v674 = vpop.f32.mrb[0].mxu0
      %675 = vmatprep.mubr.f32.mxu0 0.0
      %676 = vmatmul.mubr.f32.gmra.mrb[0].mxu0 %v486
      %v677 = vpop.f32.mrb[0].mxu0
      %v678 = vadd.f32 %v437, %v677
      %v679 = vpop.f32.mrb[0].mxu0
      %680 = vmatprep.mubr.f32.mxu0 0.0
      %681 = vmatmul.mubr.f32.gmra.mrb[0].mxu0 %v489
      %v682 = vpop.f32.mrb[0].mxu0
      %v683 = vadd.f32 %v437, %v682
      %v684 = vpop.f32.mrb[0].mxu0
      %685 = vmatprep.mubr.f32.mxu0 0.0
      %686 = vmatmul.mubr.f32.gmra.mrb[0].mxu0 %v492
      %v687 = vpop.f32.mrb[0].mxu0
      %v688 = vadd.f32 %v437, %v687
      %v689 = vpop.f32.mrb[0].mxu0
      %690 = vmatprep.mubr.f32.mxu0 0.0
      %691 = vmatmul.mubr.f32.gmra.mrb[0].mxu0 %v495
      %v692 = vpop.f32.mrb[0].mxu0
      %v693 = vadd.f32 %v437, %v692
      %v694 = vpop.f32.mrb[0].mxu0
      %695 = vmatprep.mubr.f32.mxu0 0.0
      %696 = vmatmul.mubr.f32.gmra.mrb[0].mxu0 %v498
      %v697 = vpop.f32.mrb[0].mxu0
      %v698 = vadd.f32 %v437, %v697
      %v699 = vpop.f32.mrb[0].mxu0
      %700 = vmatprep.mubr.f32.mxu0 0.0
      %701 = vmatmul.mubr.f32.gmra.mrb[0].mxu0 %v501
      %v702 = vpop.f32.mrb[0].mxu0
      %v703 = vadd.f32 %v437, %v702
      %v704 = vpop.f32.mrb[0].mxu0
      %705 = vmatprep.mubr.f32.mxu0 0.0
      %706 = vmatmul.mubr.f32.gmra.mrb[0].mxu0 %v504
      %v707 = vpop.f32.mrb[0].mxu0
      %v708 = vadd.f32 %v437, %v707
      %v709 = vpop.f32.mrb[0].mxu0
      %710 = vmatprep.mubr.f32.mxu0 0.0
      %711 = vmatmul.mubr.f32.gmra.mrb[0].mxu0 %v507
      %v712 = vpop.f32.mrb[0].mxu0
      %v713 = vadd.f32 %v437, %v712
      %v714 = vpop.f32.mrb[0].mxu0
      %715 = vmatprep.mubr.f32.mxu0 0.0
      %716 = vmatmul.mubr.f32.gmra.mrb[0].mxu0 %v510
      %v717 = vpop.f32.mrb[0].mxu0
      %v718 = vadd.f32 %v437, %v717
      %v719 = vpop.f32.mrb[0].mxu0
      %720 = vmatprep.mubr.f32.mxu0 0.0
      %721 = vmatmul.mubr.f32.gmra.mrb[0].mxu0 %v513
      %v722 = vpop.f32.mrb[0].mxu0
      %v723 = vadd.f32 %v437, %v722
      %v724 = vpop.f32.mrb[0].mxu0
      %725 = vmatprep.mubr.f32.mxu0 0.0
      %726 = vmatmul.mubr.f32.gmra.mrb[0].mxu0 %v516
      %v727 = vpop.f32.mrb[0].mxu0
      %v728 = vadd.f32 %v437, %v727
      %v729 = vpop.f32.mrb[0].mxu0
      %730 = vmatprep.mubr.f32.mxu0 0.0
      %731 = vmatmul.mubr.f32.gmra.mrb[0].mxu0 %v519
      %v732 = vpop.f32.mrb[0].mxu0
      %v733 = vadd.f32 %v437, %v732
      %v734 = vpop.f32.mrb[0].mxu0
      %735 = vmatprep.mubr.f32.mxu0 0.0
      %736 = vmatmul.mubr.f32.gmra.mrb[0].mxu0 %v522
      %v737 = vpop.f32.mrb[0].mxu0
      %v738 = vadd.f32 %v437, %v737
      %v739 = vpop.f32.mrb[0].mxu0
      %740 = vmatprep.mubr.f32.mxu0 0.0
      %741 = vmatmul.mubr.f32.gmra.mrb[0].mxu0 %v525
      %v742 = vpop.f32.mrb[0].mxu0
      %v743 = vadd.f32 %v437, %v742
      %v744 = vpop.f32.mrb[0].mxu0
      %745 = vmatprep.mubr.f32.mxu0 0.0
      %746 = vmatmul.mubr.f32.gmra.mrb[0].mxu0 %v528
      %v747 = vpop.f32.mrb[0].mxu0
      %v748 = vadd.f32 %v437, %v747
      %v749 = vpop.f32.mrb[0].mxu0
      %750 = vmatprep.mubr.f32.mxu0 0.0
      %751 = vmatmul.mubr.f32.gmra.mrb[0].mxu0 %v531
      %v752 = vpop.f32.mrb[0].mxu0
      %v753 = vadd.f32 %v437, %v752
      %v754 = vpop.f32.mrb[0].mxu0
      %755 = vmatprep.mubr.f32.mxu0 0.0
      %756 = vmatmul.mubr.f32.gmra.mrb[0].mxu0 %v534
      %v757 = vpop.f32.mrb[0].mxu0
      %v758 = vadd.f32 %v437, %v757
      %v759 = vpop.f32.mrb[0].mxu0
      %760 = vdwg.mxu0
      %v761 = vmax.f32 %v603, 0.0
      %v762 = vmax.f32 %v608, 0.0
      %v763 = vmax.f32 %v613, 0.0
      %v764 = vmax.f32 %v618, 0.0
      %v765 = vmax.f32 %v623, 0.0
      %v766 = vmax.f32 %v628, 0.0
      %v767 = vmax.f32 %v633, 0.0
      %v768 = vmax.f32 %v638, 0.0
      %v769 = vmax.f32 %v643, 0.0
      %v770 = vmax.f32 %v648, 0.0
      %v771 = vmax.f32 %v653, 0.0
      %v772 = vmax.f32 %v658, 0.0
      %v773 = vmax.f32 %v663, 0.0
      %v774 = vmax.f32 %v668, 0.0
      %v775 = vmax.f32 %v673, 0.0
      %v776 = vmax.f32 %v678, 0.0
      %v777 = vmax.f32 %v683, 0.0
      %v778 = vmax.f32 %v688, 0.0
      %v779 = vmax.f32 %v693, 0.0
      %v780 = vmax.f32 %v698, 0.0
      %v781 = vmax.f32 %v703, 0.0
      %v782 = vmax.f32 %v708, 0.0
      %v783 = vmax.f32 %v713, 0.0
      %v784 = vmax.f32 %v718, 0.0
      %v785 = vmax.f32 %v723, 0.0
      %v786 = vmax.f32 %v728, 0.0
      %v787 = vmax.f32 %v733, 0.0
      %v788 = vmax.f32 %v738, 0.0
      %v789 = vmax.f32 %v743, 0.0
      %v790 = vmax.f32 %v748, 0.0
      %v791 = vmax.f32 %v753, 0.0
      %v792 = vmax.f32 %v758, 0.0
      %793 = vst [vmem:[#allocation2 + $0x130] sm:$0xff] %v761
      %794 = vst [vmem:[#allocation2 + $0x138] sm:$0xff] %v762
      %795 = vst [vmem:[#allocation2 + $0x140] sm:$0xff] %v763
      %796 = vst [vmem:[#allocation2 + $0x148] sm:$0xff] %v764
      %797 = vst [vmem:[#allocation2 + $0x150] sm:$0xff] %v765
      %798 = vst [vmem:[#allocation2 + $0x158] sm:$0xff] %v766
      %799 = vst [vmem:[#allocation2 + $0x160] sm:$0xff] %v767
      %800 = vst [vmem:[#allocation2 + $0x168] sm:$0xff] %v768
      %801 = vst [vmem:[#allocation2 + $0x170] sm:$0xff] %v769
      %802 = vst [vmem:[#allocation2 + $0x178] sm:$0xff] %v770
      %803 = vst [vmem:[#allocation2 + $0x180] sm:$0xff] %v771
      %804 = vst [vmem:[#allocation2 + $0x188] sm:$0xff] %v772
      %805 = vst [vmem:[#allocation2 + $0x190] sm:$0xff] %v773
      %806 = vst [vmem:[#allocation2 + $0x198] sm:$0xff] %v774
      %807 = vst [vmem:[#allocation2 + $0x1a0] sm:$0xff] %v775
      %808 = vst [vmem:[#allocation2 + $0x1a8] sm:$0xff] %v776
      %809 = vst [vmem:[#allocation2 + $0x1b0] sm:$0xff] %v777
      %810 = vst [vmem:[#allocation2 + $0x1b8] sm:$0xff] %v778
      %811 = vst [vmem:[#allocation2 + $0x1c0] sm:$0xff] %v779
      %812 = vst [vmem:[#allocation2 + $0x1c8] sm:$0xff] %v780
      %813 = vst [vmem:[#allocation2 + $0x1d0] sm:$0xff] %v781
      %814 = vst [vmem:[#allocation2 + $0x1d8] sm:$0xff] %v782
      %815 = vst [vmem:[#allocation2 + $0x1e0] sm:$0xff] %v783
      %816 = vst [vmem:[#allocation2 + $0x1e8] sm:$0xff] %v784
      %817 = vst [vmem:[#allocation2 + $0x1f0] sm:$0xff] %v785
      %818 = vst [vmem:[#allocation2 + $0x1f8] sm:$0xff] %v786
      %819 = vst [vmem:[#allocation2 + $0x200] sm:$0xff] %v787
      %820 = vst [vmem:[#allocation2 + $0x208] sm:$0xff] %v788
      %821 = vst [vmem:[#allocation2 + $0x210] sm:$0xff] %v789
      %822 = vst [vmem:[#allocation2 + $0x218] sm:$0xff] %v790
      %823 = vst [vmem:[#allocation2 + $0x220] sm:$0xff] %v791
      %824 = vst [vmem:[#allocation2 + $0x228] sm:$0xff] %v792
      %v825 = vld [vmem:[#allocation2 + $0x12f] sm:$0xff]
      %v826 = vld [vmem:[#allocation2 + $0x137] sm:$0xff]
      %v827 = vld [vmem:[#allocation2 + $0x13f] sm:$0xff]
      %v828 = vld [vmem:[#allocation2 + $0x147] sm:$0xff]
      %v829 = vld [vmem:[#allocation2 + $0x14f] sm:$0xff]
      %v830 = vld [vmem:[#allocation2 + $0x157] sm:$0xff]
      %v831 = vld [vmem:[#allocation2 + $0x15f] sm:$0xff]
      %v832 = vld [vmem:[#allocation2 + $0x167] sm:$0xff]
      %v833 = vld [vmem:[#allocation2 + $0x16f] sm:$0xff]
      %v834 = vld [vmem:[#allocation2 + $0x177] sm:$0xff]
      %v835 = vld [vmem:[#allocation2 + $0x17f] sm:$0xff]
      %v836 = vld [vmem:[#allocation2 + $0x187] sm:$0xff]
      %v837 = vld [vmem:[#allocation2 + $0x18f] sm:$0xff]
      %v838 = vld [vmem:[#allocation2 + $0x197] sm:$0xff]
      %v839 = vld [vmem:[#allocation2 + $0x19f] sm:$0xff]
      %v840 = vld [vmem:[#allocation2 + $0x1a7] sm:$0xff]
      %v841 = vld [vmem:[#allocation2 + $0x1af] sm:$0xff]
      %v842 = vld [vmem:[#allocation2 + $0x1b7] sm:$0xff]
      %v843 = vld [vmem:[#allocation2 + $0x1bf] sm:$0xff]
      %v844 = vld [vmem:[#allocation2 + $0x1c7] sm:$0xff]
      %v845 = vld [vmem:[#allocation2 + $0x1cf] sm:$0xff]
      %v846 = vld [vmem:[#allocation2 + $0x1d7] sm:$0xff]
      %v847 = vld [vmem:[#allocation2 + $0x1df] sm:$0xff]
      %v848 = vld [vmem:[#allocation2 + $0x1e7] sm:$0xff]
      %v849 = vld [vmem:[#allocation2 + $0x1ef] sm:$0xff]
      %v850 = vld [vmem:[#allocation2 + $0x1f7] sm:$0xff]
      %v851 = vld [vmem:[#allocation2 + $0x1ff] sm:$0xff]
      %v852 = vld [vmem:[#allocation2 + $0x207] sm:$0xff]
      %v853 = vld [vmem:[#allocation2 + $0x20f] sm:$0xff]
      %v854 = vld [vmem:[#allocation2 + $0x217] sm:$0xff]
      %v855 = vld [vmem:[#allocation2 + $0x21f] sm:$0xff]
      %v856 = vld [vmem:[#allocation2 + $0x227] sm:$0xff]
      %v857 = vld [vmem:[%s1] sm:$0xff]
      %v858 = vld [vmem:[%s1 + $0x8] sm:$0xff]
      %v859 = vld [vmem:[%s1 + $0x10] sm:$0xff]
      %v860 = vld [vmem:[%s1 + $0x18] sm:$0xff]
      %v861 = vld [vmem:[%s1 + $0x20] sm:$0xff]
      %v862 = vld [vmem:[%s1 + $0x28] sm:$0xff]
      %v863 = vld [vmem:[%s1 + $0x30] sm:$0xff]
      %v864 = vld [vmem:[%s1 + $0x38] sm:$0xff]
      %v865 = vld [vmem:[%s1 + $0x40] sm:$0xff]
      %v866 = vld [vmem:[%s1 + $0x48] sm:$0xff]
      %v867 = vld [vmem:[%s1 + $0x50] sm:$0xff]
      %v868 = vld [vmem:[%s1 + $0x58] sm:$0xff]
      %v869 = vld [vmem:[%s1 + $0x60] sm:$0xff]
      %v870 = vld [vmem:[%s1 + $0x68] sm:$0xff]
      %v871 = vld [vmem:[%s1 + $0x70] sm:$0xff]
      %v872 = vld [vmem:[%s1 + $0x78] sm:$0xff]
      %v873 = vld [vmem:[%s1 + $0x80] sm:$0xff]
      %v874 = vld [vmem:[%s1 + $0x88] sm:$0xff]
      %v875 = vld [vmem:[%s1 + $0x90] sm:$0xff]
      %v876 = vld [vmem:[%s1 + $0x98] sm:$0xff]
      %v877 = vld [vmem:[%s1 + $0xa0] sm:$0xff]
      %v878 = vld [vmem:[%s1 + $0xa8] sm:$0xff]
      %v879 = vld [vmem:[%s1 + $0xb0] sm:$0xff]
      %v880 = vld [vmem:[%s1 + $0xb8] sm:$0xff]
      %v881 = vld [vmem:[%s1 + $0xc0] sm:$0xff]
      %v882 = vld [vmem:[%s1 + $0xc8] sm:$0xff]
      %v883 = vld [vmem:[%s1 + $0xd0] sm:$0xff]
      %v884 = vld [vmem:[%s1 + $0xd8] sm:$0xff]
      %v885 = vld [vmem:[%s1 + $0xe0] sm:$0xff]
      %v886 = vld [vmem:[%s1 + $0xe8] sm:$0xff]
      %v887 = vld [vmem:[%s1 + $0xf0] sm:$0xff]
      %v888 = vld [vmem:[%s1 + $0xf8] sm:$0xff]
      %890 = vset.pattern.permute.xlu0 0
      %891 = vperm.xlu0 %890, %v857
      %v892 = vpop.permute.xlu0 %891
      %895 = vset.pattern.permute.xlu0 0
      %896 = vperm.xlu0 %895, %v858
      %v897 = vpop.permute.xlu0 %896
      %900 = vset.pattern.permute.xlu0 0
      %901 = vperm.xlu0 %900, %v859
      %v902 = vpop.permute.xlu0 %901
      %905 = vset.pattern.permute.xlu0 0
      %906 = vperm.xlu0 %905, %v860
      %v907 = vpop.permute.xlu0 %906
      %910 = vset.pattern.permute.xlu0 0
      %911 = vperm.xlu0 %910, %v861
      %v912 = vpop.permute.xlu0 %911
      %915 = vset.pattern.permute.xlu0 0
      %916 = vperm.xlu0 %915, %v862
      %v917 = vpop.permute.xlu0 %916
      %920 = vset.pattern.permute.xlu0 0
      %921 = vperm.xlu0 %920, %v863
      %v922 = vpop.permute.xlu0 %921
      %925 = vset.pattern.permute.xlu0 0
      %926 = vperm.xlu0 %925, %v864
      %v927 = vpop.permute.xlu0 %926
      %930 = vset.pattern.permute.xlu0 0
      %931 = vperm.xlu0 %930, %v865
      %v932 = vpop.permute.xlu0 %931
      %935 = vset.pattern.permute.xlu0 0
      %936 = vperm.xlu0 %935, %v866
      %v937 = vpop.permute.xlu0 %936
      %940 = vset.pattern.permute.xlu0 0
      %941 = vperm.xlu0 %940, %v867
      %v942 = vpop.permute.xlu0 %941
      %945 = vset.pattern.permute.xlu0 0
      %946 = vperm.xlu0 %945, %v868
      %v947 = vpop.permute.xlu0 %946
      %950 = vset.pattern.permute.xlu0 0
      %951 = vperm.xlu0 %950, %v869
      %v952 = vpop.permute.xlu0 %951
      %955 = vset.pattern.permute.xlu0 0
      %956 = vperm.xlu0 %955, %v870
      %v957 = vpop.permute.xlu0 %956
      %960 = vset.pattern.permute.xlu0 0
      %961 = vperm.xlu0 %960, %v871
      %v962 = vpop.permute.xlu0 %961
      %965 = vset.pattern.permute.xlu0 0
      %966 = vperm.xlu0 %965, %v872
      %v967 = vpop.permute.xlu0 %966
      %970 = vset.pattern.permute.xlu0 0
      %971 = vperm.xlu0 %970, %v873
      %v972 = vpop.permute.xlu0 %971
      %975 = vset.pattern.permute.xlu0 0
      %976 = vperm.xlu0 %975, %v874
      %v977 = vpop.permute.xlu0 %976
      %980 = vset.pattern.permute.xlu0 0
      %981 = vperm.xlu0 %980, %v875
      %v982 = vpop.permute.xlu0 %981
      %985 = vset.pattern.permute.xlu0 0
      %986 = vperm.xlu0 %985, %v876
      %v987 = vpop.permute.xlu0 %986
      %990 = vset.pattern.permute.xlu0 0
      %991 = vperm.xlu0 %990, %v877
      %v992 = vpop.permute.xlu0 %991
      %995 = vset.pattern.permute.xlu0 0
      %996 = vperm.xlu0 %995, %v878
      %v997 = vpop.permute.xlu0 %996
      %1000 = vset.pattern.permute.xlu0 0
      %1001 = vperm.xlu0 %1000, %v879
      %v1002 = vpop.permute.xlu0 %1001
      %1005 = vset.pattern.permute.xlu0 0
      %1006 = vperm.xlu0 %1005, %v880
      %v1007 = vpop.permute.xlu0 %1006
      %1010 = vset.pattern.permute.xlu0 0
      %1011 = vperm.xlu0 %1010, %v881
      %v1012 = vpop.permute.xlu0 %1011
      %1015 = vset.pattern.permute.xlu0 0
      %1016 = vperm.xlu0 %1015, %v882
      %v1017 = vpop.permute.xlu0 %1016
      %1020 = vset.pattern.permute.xlu0 0
      %1021 = vperm.xlu0 %1020, %v883
      %v1022 = vpop.permute.xlu0 %1021
      %1025 = vset.pattern.permute.xlu0 0
      %1026 = vperm.xlu0 %1025, %v884
      %v1027 = vpop.permute.xlu0 %1026
      %1030 = vset.pattern.permute.xlu0 0
      %1031 = vperm.xlu0 %1030, %v885
      %v1032 = vpop.permute.xlu0 %1031
      %1035 = vset.pattern.permute.xlu0 0
      %1036 = vperm.xlu0 %1035, %v886
      %v1037 = vpop.permute.xlu0 %1036
      %1040 = vset.pattern.permute.xlu0 0
      %1041 = vperm.xlu0 %1040, %v887
      %v1042 = vpop.permute.xlu0 %1041
      %1045 = vset.pattern.permute.xlu0 0
      %1046 = vperm.xlu0 %1045, %v888
      %v1047 = vpop.permute.xlu0 %1046
      %v1049 = vmul.f32 %v825, %v892
      %v1050 = vmul.f32 %v826, %v897
      %v1051 = vmul.f32 %v827, %v902
      %v1052 = vmul.f32 %v828, %v907
      %v1053 = vmul.f32 %v829, %v912
      %v1054 = vmul.f32 %v830, %v917
      %v1055 = vmul.f32 %v831, %v922
      %v1056 = vmul.f32 %v832, %v927
      %v1057 = vmul.f32 %v833, %v932
      %v1058 = vmul.f32 %v834, %v937
      %v1059 = vmul.f32 %v835, %v942
      %v1060 = vmul.f32 %v836, %v947
      %v1061 = vmul.f32 %v837, %v952
      %v1062 = vmul.f32 %v838, %v957
      %v1063 = vmul.f32 %v839, %v962
      %v1064 = vmul.f32 %v840, %v967
      %v1065 = vmul.f32 %v841, %v972
      %v1066 = vmul.f32 %v842, %v977
      %v1067 = vmul.f32 %v843, %v982
      %v1068 = vmul.f32 %v844, %v987
      %v1069 = vmul.f32 %v845, %v992
      %v1070 = vmul.f32 %v846, %v997
      %v1071 = vmul.f32 %v847, %v1002
      %v1072 = vmul.f32 %v848, %v1007
      %v1073 = vmul.f32 %v849, %v1012
      %v1074 = vmul.f32 %v850, %v1017
      %v1075 = vmul.f32 %v851, %v1022
      %v1076 = vmul.f32 %v852, %v1027
      %v1077 = vmul.f32 %v853, %v1032
      %v1078 = vmul.f32 %v854, %v1037
      %v1079 = vmul.f32 %v855, %v1042
      %v1080 = vmul.f32 %v856, %v1047
      %v1081 = vld [vmem:[#allocation2 + $0x131] sm:$0xff]
      %v1082 = vld [vmem:[#allocation2 + $0x139] sm:$0xff]
      %v1083 = vld [vmem:[#allocation2 + $0x141] sm:$0xff]
      %v1084 = vld [vmem:[#allocation2 + $0x149] sm:$0xff]
      %v1085 = vld [vmem:[#allocation2 + $0x151] sm:$0xff]
      %v1086 = vld [vmem:[#allocation2 + $0x159] sm:$0xff]
      %v1087 = vld [vmem:[#allocation2 + $0x161] sm:$0xff]
      %v1088 = vld [vmem:[#allocation2 + $0x169] sm:$0xff]
      %v1089 = vld [vmem:[#allocation2 + $0x171] sm:$0xff]
      %v1090 = vld [vmem:[#allocation2 + $0x179] sm:$0xff]
      %v1091 = vld [vmem:[#allocation2 + $0x181] sm:$0xff]
      %v1092 = vld [vmem:[#allocation2 + $0x189] sm:$0xff]
      %v1093 = vld [vmem:[#allocation2 + $0x191] sm:$0xff]
      %v1094 = vld [vmem:[#allocation2 + $0x199] sm:$0xff]
      %v1095 = vld [vmem:[#allocation2 + $0x1a1] sm:$0xff]
      %v1096 = vld [vmem:[#allocation2 + $0x1a9] sm:$0xff]
      %v1097 = vld [vmem:[#allocation2 + $0x1b1] sm:$0xff]
      %v1098 = vld [vmem:[#allocation2 + $0x1b9] sm:$0xff]
      %v1099 = vld [vmem:[#allocation2 + $0x1c1] sm:$0xff]
      %v1100 = vld [vmem:[#allocation2 + $0x1c9] sm:$0xff]
      %v1101 = vld [vmem:[#allocation2 + $0x1d1] sm:$0xff]
      %v1102 = vld [vmem:[#allocation2 + $0x1d9] sm:$0xff]
      %v1103 = vld [vmem:[#allocation2 + $0x1e1] sm:$0xff]
      %v1104 = vld [vmem:[#allocation2 + $0x1e9] sm:$0xff]
      %v1105 = vld [vmem:[#allocation2 + $0x1f1] sm:$0xff]
      %v1106 = vld [vmem:[#allocation2 + $0x1f9] sm:$0xff]
      %v1107 = vld [vmem:[#allocation2 + $0x201] sm:$0xff]
      %v1108 = vld [vmem:[#allocation2 + $0x209] sm:$0xff]
      %v1109 = vld [vmem:[#allocation2 + $0x211] sm:$0xff]
      %v1110 = vld [vmem:[#allocation2 + $0x219] sm:$0xff]
      %v1111 = vld [vmem:[#allocation2 + $0x221] sm:$0xff]
      %v1112 = vld [vmem:[#allocation2 + $0x229] sm:$0xff]
      %v1113 = vld [vmem:[%s2] sm:$0xff]
      %v1114 = vld [vmem:[%s2 + $0x8] sm:$0xff]
      %v1115 = vld [vmem:[%s2 + $0x10] sm:$0xff]
      %v1116 = vld [vmem:[%s2 + $0x18] sm:$0xff]
      %v1117 = vld [vmem:[%s2 + $0x20] sm:$0xff]
      %v1118 = vld [vmem:[%s2 + $0x28] sm:$0xff]
      %v1119 = vld [vmem:[%s2 + $0x30] sm:$0xff]
      %v1120 = vld [vmem:[%s2 + $0x38] sm:$0xff]
      %v1121 = vld [vmem:[%s2 + $0x40] sm:$0xff]
      %v1122 = vld [vmem:[%s2 + $0x48] sm:$0xff]
      %v1123 = vld [vmem:[%s2 + $0x50] sm:$0xff]
      %v1124 = vld [vmem:[%s2 + $0x58] sm:$0xff]
      %v1125 = vld [vmem:[%s2 + $0x60] sm:$0xff]
      %v1126 = vld [vmem:[%s2 + $0x68] sm:$0xff]
      %v1127 = vld [vmem:[%s2 + $0x70] sm:$0xff]
      %v1128 = vld [vmem:[%s2 + $0x78] sm:$0xff]
      %v1129 = vld [vmem:[%s2 + $0x80] sm:$0xff]
      %v1130 = vld [vmem:[%s2 + $0x88] sm:$0xff]
      %v1131 = vld [vmem:[%s2 + $0x90] sm:$0xff]
      %v1132 = vld [vmem:[%s2 + $0x98] sm:$0xff]
      %v1133 = vld [vmem:[%s2 + $0xa0] sm:$0xff]
      %v1134 = vld [vmem:[%s2 + $0xa8] sm:$0xff]
      %v1135 = vld [vmem:[%s2 + $0xb0] sm:$0xff]
      %v1136 = vld [vmem:[%s2 + $0xb8] sm:$0xff]
      %v1137 = vld [vmem:[%s2 + $0xc0] sm:$0xff]
      %v1138 = vld [vmem:[%s2 + $0xc8] sm:$0xff]
      %v1139 = vld [vmem:[%s2 + $0xd0] sm:$0xff]
      %v1140 = vld [vmem:[%s2 + $0xd8] sm:$0xff]
      %v1141 = vld [vmem:[%s2 + $0xe0] sm:$0xff]
      %v1142 = vld [vmem:[%s2 + $0xe8] sm:$0xff]
      %v1143 = vld [vmem:[%s2 + $0xf0] sm:$0xff]
      %v1144 = vld [vmem:[%s2 + $0xf8] sm:$0xff]
      %1146 = vset.pattern.permute.xlu0 0
      %1147 = vperm.xlu0 %1146, %v1113
      %v1148 = vpop.permute.xlu0 %1147
      %1151 = vset.pattern.permute.xlu0 0
      %1152 = vperm.xlu0 %1151, %v1114
      %v1153 = vpop.permute.xlu0 %1152
      %1156 = vset.pattern.permute.xlu0 0
      %1157 = vperm.xlu0 %1156, %v1115
      %v1158 = vpop.permute.xlu0 %1157
      %1161 = vset.pattern.permute.xlu0 0
      %1162 = vperm.xlu0 %1161, %v1116
      %v1163 = vpop.permute.xlu0 %1162
      %1166 = vset.pattern.permute.xlu0 0
      %1167 = vperm.xlu0 %1166, %v1117
      %v1168 = vpop.permute.xlu0 %1167
      %1171 = vset.pattern.permute.xlu0 0
      %1172 = vperm.xlu0 %1171, %v1118
      %v1173 = vpop.permute.xlu0 %1172
      %1176 = vset.pattern.permute.xlu0 0
      %1177 = vperm.xlu0 %1176, %v1119
      %v1178 = vpop.permute.xlu0 %1177
      %1181 = vset.pattern.permute.xlu0 0
      %1182 = vperm.xlu0 %1181, %v1120
      %v1183 = vpop.permute.xlu0 %1182
      %1186 = vset.pattern.permute.xlu0 0
      %1187 = vperm.xlu0 %1186, %v1121
      %v1188 = vpop.permute.xlu0 %1187
      %1191 = vset.pattern.permute.xlu0 0
      %1192 = vperm.xlu0 %1191, %v1122
      %v1193 = vpop.permute.xlu0 %1192
      %1196 = vset.pattern.permute.xlu0 0
      %1197 = vperm.xlu0 %1196, %v1123
      %v1198 = vpop.permute.xlu0 %1197
      %1201 = vset.pattern.permute.xlu0 0
      %1202 = vperm.xlu0 %1201, %v1124
      %v1203 = vpop.permute.xlu0 %1202
      %1206 = vset.pattern.permute.xlu0 0
      %1207 = vperm.xlu0 %1206, %v1125
      %v1208 = vpop.permute.xlu0 %1207
      %1211 = vset.pattern.permute.xlu0 0
      %1212 = vperm.xlu0 %1211, %v1126
      %v1213 = vpop.permute.xlu0 %1212
      %1216 = vset.pattern.permute.xlu0 0
      %1217 = vperm.xlu0 %1216, %v1127
      %v1218 = vpop.permute.xlu0 %1217
      %1221 = vset.pattern.permute.xlu0 0
      %1222 = vperm.xlu0 %1221, %v1128
      %v1223 = vpop.permute.xlu0 %1222
      %1226 = vset.pattern.permute.xlu0 0
      %1227 = vperm.xlu0 %1226, %v1129
      %v1228 = vpop.permute.xlu0 %1227
      %1231 = vset.pattern.permute.xlu0 0
      %1232 = vperm.xlu0 %1231, %v1130
      %v1233 = vpop.permute.xlu0 %1232
      %1236 = vset.pattern.permute.xlu0 0
      %1237 = vperm.xlu0 %1236, %v1131
      %v1238 = vpop.permute.xlu0 %1237
      %1241 = vset.pattern.permute.xlu0 0
      %1242 = vperm.xlu0 %1241, %v1132
      %v1243 = vpop.permute.xlu0 %1242
      %1246 = vset.pattern.permute.xlu0 0
      %1247 = vperm.xlu0 %1246, %v1133
      %v1248 = vpop.permute.xlu0 %1247
      %1251 = vset.pattern.permute.xlu0 0
      %1252 = vperm.xlu0 %1251, %v1134
      %v1253 = vpop.permute.xlu0 %1252
      %1256 = vset.pattern.permute.xlu0 0
      %1257 = vperm.xlu0 %1256, %v1135
      %v1258 = vpop.permute.xlu0 %1257
      %1261 = vset.pattern.permute.xlu0 0
      %1262 = vperm.xlu0 %1261, %v1136
      %v1263 = vpop.permute.xlu0 %1262
      %1266 = vset.pattern.permute.xlu0 0
      %1267 = vperm.xlu0 %1266, %v1137
      %v1268 = vpop.permute.xlu0 %1267
      %1271 = vset.pattern.permute.xlu0 0
      %1272 = vperm.xlu0 %1271, %v1138
      %v1273 = vpop.permute.xlu0 %1272
      %1276 = vset.pattern.permute.xlu0 0
      %1277 = vperm.xlu0 %1276, %v1139
      %v1278 = vpop.permute.xlu0 %1277
      %1281 = vset.pattern.permute.xlu0 0
      %1282 = vperm.xlu0 %1281, %v1140
      %v1283 = vpop.permute.xlu0 %1282
      %1286 = vset.pattern.permute.xlu0 0
      %1287 = vperm.xlu0 %1286, %v1141
      %v1288 = vpop.permute.xlu0 %1287
      %1291 = vset.pattern.permute.xlu0 0
      %1292 = vperm.xlu0 %1291, %v1142
      %v1293 = vpop.permute.xlu0 %1292
      %1296 = vset.pattern.permute.xlu0 0
      %1297 = vperm.xlu0 %1296, %v1143
      %v1298 = vpop.permute.xlu0 %1297
      %1301 = vset.pattern.permute.xlu0 0
      %1302 = vperm.xlu0 %1301, %v1144
      %v1303 = vpop.permute.xlu0 %1302
      %v1305 = vmul.f32 %v1081, %v1148
      %v1306 = vmul.f32 %v1082, %v1153
      %v1307 = vmul.f32 %v1083, %v1158
      %v1308 = vmul.f32 %v1084, %v1163
      %v1309 = vmul.f32 %v1085, %v1168
      %v1310 = vmul.f32 %v1086, %v1173
      %v1311 = vmul.f32 %v1087, %v1178
      %v1312 = vmul.f32 %v1088, %v1183
      %v1313 = vmul.f32 %v1089, %v1188
      %v1314 = vmul.f32 %v1090, %v1193
      %v1315 = vmul.f32 %v1091, %v1198
      %v1316 = vmul.f32 %v1092, %v1203
      %v1317 = vmul.f32 %v1093, %v1208
      %v1318 = vmul.f32 %v1094, %v1213
      %v1319 = vmul.f32 %v1095, %v1218
      %v1320 = vmul.f32 %v1096, %v1223
      %v1321 = vmul.f32 %v1097, %v1228
      %v1322 = vmul.f32 %v1098, %v1233
      %v1323 = vmul.f32 %v1099, %v1238
      %v1324 = vmul.f32 %v1100, %v1243
      %v1325 = vmul.f32 %v1101, %v1248
      %v1326 = vmul.f32 %v1102, %v1253
      %v1327 = vmul.f32 %v1103, %v1258
      %v1328 = vmul.f32 %v1104, %v1263
      %v1329 = vmul.f32 %v1105, %v1268
      %v1330 = vmul.f32 %v1106, %v1273
      %v1331 = vmul.f32 %v1107, %v1278
      %v1332 = vmul.f32 %v1108, %v1283
      %v1333 = vmul.f32 %v1109, %v1288
      %v1334 = vmul.f32 %v1110, %v1293
      %v1335 = vmul.f32 %v1111, %v1298
      %v1336 = vmul.f32 %v1112, %v1303
      %1337 = vst [vmem:[#allocation2 + $0x10] sm:$0xff] %v1049
      %1338 = vst [vmem:[#allocation2 + $0x18] sm:$0xff] %v1050
      %1339 = vst [vmem:[#allocation2 + $0x20] sm:$0xff] %v1051
      %1340 = vst [vmem:[#allocation2 + $0x28] sm:$0xff] %v1052
      %1341 = vst [vmem:[#allocation2 + $0x30] sm:$0xff] %v1053
      %1342 = vst [vmem:[#allocation2 + $0x38] sm:$0xff] %v1054
      %1343 = vst [vmem:[#allocation2 + $0x40] sm:$0xff] %v1055
      %1344 = vst [vmem:[#allocation2 + $0x48] sm:$0xff] %v1056
      %1345 = vst [vmem:[#allocation2 + $0x50] sm:$0xff] %v1057
      %1346 = vst [vmem:[#allocation2 + $0x58] sm:$0xff] %v1058
      %1347 = vst [vmem:[#allocation2 + $0x60] sm:$0xff] %v1059
      %1348 = vst [vmem:[#allocation2 + $0x68] sm:$0xff] %v1060
      %1349 = vst [vmem:[#allocation2 + $0x70] sm:$0xff] %v1061
      %1350 = vst [vmem:[#allocation2 + $0x78] sm:$0xff] %v1062
      %1351 = vst [vmem:[#allocation2 + $0x80] sm:$0xff] %v1063
      %1352 = vst [vmem:[#allocation2 + $0x88] sm:$0xff] %v1064
      %1353 = vst [vmem:[#allocation2 + $0x90] sm:$0xff] %v1065
      %1354 = vst [vmem:[#allocation2 + $0x98] sm:$0xff] %v1066
      %1355 = vst [vmem:[#allocation2 + $0xa0] sm:$0xff] %v1067
      %1356 = vst [vmem:[#allocation2 + $0xa8] sm:$0xff] %v1068
      %1357 = vst [vmem:[#allocation2 + $0xb0] sm:$0xff] %v1069
      %1358 = vst [vmem:[#allocation2 + $0xb8] sm:$0xff] %v1070
      %1359 = vst [vmem:[#allocation2 + $0xc0] sm:$0xff] %v1071
      %1360 = vst [vmem:[#allocation2 + $0xc8] sm:$0xff] %v1072
      %1361 = vst [vmem:[#allocation2 + $0xd0] sm:$0xff] %v1073
      %1362 = vst [vmem:[#allocation2 + $0xd8] sm:$0xff] %v1074
      %1363 = vst [vmem:[#allocation2 + $0xe0] sm:$0xff] %v1075
      %1364 = vst [vmem:[#allocation2 + $0xe8] sm:$0xff] %v1076
      %1365 = vst [vmem:[#allocation2 + $0xf0] sm:$0xff] %v1077
      %1366 = vst [vmem:[#allocation2 + $0xf8] sm:$0xff] %v1078
      %1367 = vst [vmem:[#allocation2 + $0x100] sm:$0xff] %v1079
      %1368 = vst [vmem:[#allocation2 + $0x108] sm:$0xff] %v1080
      %1369 = vst [vmem:[#allocation2 + $0x250] sm:$0xff] %v1305
      %1370 = vst [vmem:[#allocation2 + $0x258] sm:$0xff] %v1306
      %1371 = vst [vmem:[#allocation2 + $0x260] sm:$0xff] %v1307
      %1372 = vst [vmem:[#allocation2 + $0x268] sm:$0xff] %v1308
      %1373 = vst [vmem:[#allocation2 + $0x270] sm:$0xff] %v1309
      %1374 = vst [vmem:[#allocation2 + $0x278] sm:$0xff] %v1310
      %1375 = vst [vmem:[#allocation2 + $0x280] sm:$0xff] %v1311
      %1376 = vst [vmem:[#allocation2 + $0x288] sm:$0xff] %v1312
      %1377 = vst [vmem:[#allocation2 + $0x290] sm:$0xff] %v1313
      %1378 = vst [vmem:[#allocation2 + $0x298] sm:$0xff] %v1314
      %1379 = vst [vmem:[#allocation2 + $0x2a0] sm:$0xff] %v1315
      %1380 = vst [vmem:[#allocation2 + $0x2a8] sm:$0xff] %v1316
      %1381 = vst [vmem:[#allocation2 + $0x2b0] sm:$0xff] %v1317
      %1382 = vst [vmem:[#allocation2 + $0x2b8] sm:$0xff] %v1318
      %1383 = vst [vmem:[#allocation2 + $0x2c0] sm:$0xff] %v1319
      %1384 = vst [vmem:[#allocation2 + $0x2c8] sm:$0xff] %v1320
      %1385 = vst [vmem:[#allocation2 + $0x2d0] sm:$0xff] %v1321
      %1386 = vst [vmem:[#allocation2 + $0x2d8] sm:$0xff] %v1322
      %1387 = vst [vmem:[#allocation2 + $0x2e0] sm:$0xff] %v1323
      %1388 = vst [vmem:[#allocation2 + $0x2e8] sm:$0xff] %v1324
      %1389 = vst [vmem:[#allocation2 + $0x2f0] sm:$0xff] %v1325
      %1390 = vst [vmem:[#allocation2 + $0x2f8] sm:$0xff] %v1326
      %1391 = vst [vmem:[#allocation2 + $0x300] sm:$0xff] %v1327
      %1392 = vst [vmem:[#allocation2 + $0x308] sm:$0xff] %v1328
      %1393 = vst [vmem:[#allocation2 + $0x310] sm:$0xff] %v1329
      %1394 = vst [vmem:[#allocation2 + $0x318] sm:$0xff] %v1330
      %1395 = vst [vmem:[#allocation2 + $0x320] sm:$0xff] %v1331
      %1396 = vst [vmem:[#allocation2 + $0x328] sm:$0xff] %v1332
      %1397 = vst [vmem:[#allocation2 + $0x330] sm:$0xff] %v1333
      %1398 = vst [vmem:[#allocation2 + $0x338] sm:$0xff] %v1334
      %1399 = vst [vmem:[#allocation2 + $0x340] sm:$0xff] %v1335
      %1400 = vst [vmem:[#allocation2 + $0x348] sm:$0xff] %v1336
      %v1401 = vld [vmem:[%s5 + $0x4] sm:$0x1]
      %v1402 = vlaneseq
      %v1403 = vshrl.u32 %v1402, 7
      %v1404 = vsub.s32 0, %v1403
      %v1405 = vrot.slane %v1401, %v1404
      %v1406 = vmul.f32 %v761, %v1405
      %v1407 = vmul.f32 %v762, %v1405
      %v1408 = vmul.f32 %v763, %v1405
      %v1409 = vmul.f32 %v764, %v1405
      %v1410 = vmul.f32 %v765, %v1405
      %v1411 = vmul.f32 %v766, %v1405
      %v1412 = vmul.f32 %v767, %v1405
      %v1413 = vmul.f32 %v768, %v1405
      %v1414 = vmul.f32 %v769, %v1405
      %v1415 = vmul.f32 %v770, %v1405
      %v1416 = vmul.f32 %v771, %v1405
      %v1417 = vmul.f32 %v772, %v1405
      %v1418 = vmul.f32 %v773, %v1405
      %v1419 = vmul.f32 %v774, %v1405
      %v1420 = vmul.f32 %v775, %v1405
      %v1421 = vmul.f32 %v776, %v1405
      %v1422 = vmul.f32 %v777, %v1405
      %v1423 = vmul.f32 %v778, %v1405
      %v1424 = vmul.f32 %v779, %v1405
      %v1425 = vmul.f32 %v780, %v1405
      %v1426 = vmul.f32 %v781, %v1405
      %v1427 = vmul.f32 %v782, %v1405
      %v1428 = vmul.f32 %v783, %v1405
      %v1429 = vmul.f32 %v784, %v1405
      %v1430 = vmul.f32 %v785, %v1405
      %v1431 = vmul.f32 %v786, %v1405
      %v1432 = vmul.f32 %v787, %v1405
      %v1433 = vmul.f32 %v788, %v1405
      %v1434 = vmul.f32 %v789, %v1405
      %v1435 = vmul.f32 %v790, %v1405
      %v1436 = vmul.f32 %v791, %v1405
      %v1437 = vmul.f32 %v792, %v1405
      %v1438 = vld [vmem:[#allocation2] sm:$0xff]
      %v1439 = vld [vmem:[#allocation2 + $0x8] sm:$0xff]
      %v1440 = vld [vmem:[#allocation2 + $0x10] sm:$0xff]
      %v1441 = vld [vmem:[#allocation2 + $0x18] sm:$0xff]
      %v1442 = vld [vmem:[#allocation2 + $0x20] sm:$0xff]
      %v1443 = vld [vmem:[#allocation2 + $0x28] sm:$0xff]
      %v1444 = vld [vmem:[#allocation2 + $0x30] sm:$0xff]
      %v1445 = vld [vmem:[#allocation2 + $0x38] sm:$0xff]
      %v1446 = vld [vmem:[#allocation2 + $0x40] sm:$0xff]
      %v1447 = vld [vmem:[#allocation2 + $0x48] sm:$0xff]
      %v1448 = vld [vmem:[#allocation2 + $0x50] sm:$0xff]
      %v1449 = vld [vmem:[#allocation2 + $0x58] sm:$0xff]
      %v1450 = vld [vmem:[#allocation2 + $0x60] sm:$0xff]
      %v1451 = vld [vmem:[#allocation2 + $0x68] sm:$0xff]
      %v1452 = vld [vmem:[#allocation2 + $0x70] sm:$0xff]
      %v1453 = vld [vmem:[#allocation2 + $0x78] sm:$0xff]
      %v1454 = vld [vmem:[#allocation2 + $0x80] sm:$0xff]
      %v1455 = vld [vmem:[#allocation2 + $0x88] sm:$0xff]
      %v1456 = vld [vmem:[#allocation2 + $0x90] sm:$0xff]
      %v1457 = vld [vmem:[#allocation2 + $0x98] sm:$0xff]
      %v1458 = vld [vmem:[#allocation2 + $0xa0] sm:$0xff]
      %v1459 = vld [vmem:[#allocation2 + $0xa8] sm:$0xff]
      %v1460 = vld [vmem:[#allocation2 + $0xb0] sm:$0xff]
      %v1461 = vld [vmem:[#allocation2 + $0xb8] sm:$0xff]
      %v1462 = vld [vmem:[#allocation2 + $0xc0] sm:$0xff]
      %v1463 = vld [vmem:[#allocation2 + $0xc8] sm:$0xff]
      %v1464 = vld [vmem:[#allocation2 + $0xd0] sm:$0xff]
      %v1465 = vld [vmem:[#allocation2 + $0xd8] sm:$0xff]
      %v1466 = vld [vmem:[#allocation2 + $0xe0] sm:$0xff]
      %v1467 = vld [vmem:[#allocation2 + $0xe8] sm:$0xff]
      %v1468 = vld [vmem:[#allocation2 + $0xf0] sm:$0xff]
      %v1469 = vld [vmem:[#allocation2 + $0xf8] sm:$0xff]
      %v1470 = vld [vmem:[%s5] sm:$0x1]
      %v1471 = vlaneseq
      %v1472 = vshrl.u32 %v1471, 7
      %v1473 = vsub.s32 0, %v1472
      %v1474 = vrot.slane %v1470, %v1473
      %v1475 = vmul.f32 %v1438, %v1474
      %v1476 = vmul.f32 %v1439, %v1474
      %v1477 = vmul.f32 %v1440, %v1474
      %v1478 = vmul.f32 %v1441, %v1474
      %v1479 = vmul.f32 %v1442, %v1474
      %v1480 = vmul.f32 %v1443, %v1474
      %v1481 = vmul.f32 %v1444, %v1474
      %v1482 = vmul.f32 %v1445, %v1474
      %v1483 = vmul.f32 %v1446, %v1474
      %v1484 = vmul.f32 %v1447, %v1474
      %v1485 = vmul.f32 %v1448, %v1474
      %v1486 = vmul.f32 %v1449, %v1474
      %v1487 = vmul.f32 %v1450, %v1474
      %v1488 = vmul.f32 %v1451, %v1474
      %v1489 = vmul.f32 %v1452, %v1474
      %v1490 = vmul.f32 %v1453, %v1474
      %v1491 = vmul.f32 %v1454, %v1474
      %v1492 = vmul.f32 %v1455, %v1474
      %v1493 = vmul.f32 %v1456, %v1474
      %v1494 = vmul.f32 %v1457, %v1474
      %v1495 = vmul.f32 %v1458, %v1474
      %v1496 = vmul.f32 %v1459, %v1474
      %v1497 = vmul.f32 %v1460, %v1474
      %v1498 = vmul.f32 %v1461, %v1474
      %v1499 = vmul.f32 %v1462, %v1474
      %v1500 = vmul.f32 %v1463, %v1474
      %v1501 = vmul.f32 %v1464, %v1474
      %v1502 = vmul.f32 %v1465, %v1474
      %v1503 = vmul.f32 %v1466, %v1474
      %v1504 = vmul.f32 %v1467, %v1474
      %v1505 = vmul.f32 %v1468, %v1474
      %v1506 = vmul.f32 %v1469, %v1474
      %v1507 = vadd.f32 %v1406, %v1475
      %v1508 = vadd.f32 %v1407, %v1476
      %v1509 = vadd.f32 %v1408, %v1477
      %v1510 = vadd.f32 %v1409, %v1478
      %v1511 = vadd.f32 %v1410, %v1479
      %v1512 = vadd.f32 %v1411, %v1480
      %v1513 = vadd.f32 %v1412, %v1481
      %v1514 = vadd.f32 %v1413, %v1482
      %v1515 = vadd.f32 %v1414, %v1483
      %v1516 = vadd.f32 %v1415, %v1484
      %v1517 = vadd.f32 %v1416, %v1485
      %v1518 = vadd.f32 %v1417, %v1486
      %v1519 = vadd.f32 %v1418, %v1487
      %v1520 = vadd.f32 %v1419, %v1488
      %v1521 = vadd.f32 %v1420, %v1489
      %v1522 = vadd.f32 %v1421, %v1490
      %v1523 = vadd.f32 %v1422, %v1491
      %v1524 = vadd.f32 %v1423, %v1492
      %v1525 = vadd.f32 %v1424, %v1493
      %v1526 = vadd.f32 %v1425, %v1494
      %v1527 = vadd.f32 %v1426, %v1495
      %v1528 = vadd.f32 %v1427, %v1496
      %v1529 = vadd.f32 %v1428, %v1497
      %v1530 = vadd.f32 %v1429, %v1498
      %v1531 = vadd.f32 %v1430, %v1499
      %v1532 = vadd.f32 %v1431, %v1500
      %v1533 = vadd.f32 %v1432, %v1501
      %v1534 = vadd.f32 %v1433, %v1502
      %v1535 = vadd.f32 %v1434, %v1503
      %v1536 = vadd.f32 %v1435, %v1504
      %v1537 = vadd.f32 %v1436, %v1505
      %v1538 = vadd.f32 %v1437, %v1506
      %v1539 = vld [vmem:[#allocation2 + $0x120] sm:$0xff]
      %v1540 = vld [vmem:[#allocation2 + $0x128] sm:$0xff]
      %v1541 = vld [vmem:[#allocation2 + $0x130] sm:$0xff]
      %v1542 = vld [vmem:[#allocation2 + $0x138] sm:$0xff]
      %v1543 = vld [vmem:[#allocation2 + $0x140] sm:$0xff]
      %v1544 = vld [vmem:[#allocation2 + $0x148] sm:$0xff]
      %v1545 = vld [vmem:[#allocation2 + $0x150] sm:$0xff]
      %v1546 = vld [vmem:[#allocation2 + $0x158] sm:$0xff]
      %v1547 = vld [vmem:[#allocation2 + $0x160] sm:$0xff]
      %v1548 = vld [vmem:[#allocation2 + $0x168] sm:$0xff]
      %v1549 = vld [vmem:[#allocation2 + $0x170] sm:$0xff]
      %v1550 = vld [vmem:[#allocation2 + $0x178] sm:$0xff]
      %v1551 = vld [vmem:[#allocation2 + $0x180] sm:$0xff]
      %v1552 = vld [vmem:[#allocation2 + $0x188] sm:$0xff]
      %v1553 = vld [vmem:[#allocation2 + $0x190] sm:$0xff]
      %v1554 = vld [vmem:[#allocation2 + $0x198] sm:$0xff]
      %v1555 = vld [vmem:[#allocation2 + $0x1a0] sm:$0xff]
      %v1556 = vld [vmem:[#allocation2 + $0x1a8] sm:$0xff]
      %v1557 = vld [vmem:[#allocation2 + $0x1b0] sm:$0xff]
      %v1558 = vld [vmem:[#allocation2 + $0x1b8] sm:$0xff]
      %v1559 = vld [vmem:[#allocation2 + $0x1c0] sm:$0xff]
      %v1560 = vld [vmem:[#allocation2 + $0x1c8] sm:$0xff]
      %v1561 = vld [vmem:[#allocation2 + $0x1d0] sm:$0xff]
      %v1562 = vld [vmem:[#allocation2 + $0x1d8] sm:$0xff]
      %v1563 = vld [vmem:[#allocation2 + $0x1e0] sm:$0xff]
      %v1564 = vld [vmem:[#allocation2 + $0x1e8] sm:$0xff]
      %v1565 = vld [vmem:[#allocation2 + $0x1f0] sm:$0xff]
      %v1566 = vld [vmem:[#allocation2 + $0x1f8] sm:$0xff]
      %v1567 = vld [vmem:[#allocation2 + $0x200] sm:$0xff]
      %v1568 = vld [vmem:[#allocation2 + $0x208] sm:$0xff]
      %v1569 = vld [vmem:[#allocation2 + $0x210] sm:$0xff]
      %v1570 = vld [vmem:[#allocation2 + $0x218] sm:$0xff]
      %v1571 = vld [vmem:[%s5 + $0x1] sm:$0x1]
      %v1572 = vlaneseq
      %v1573 = vshrl.u32 %v1572, 7
      %v1574 = vsub.s32 0, %v1573
      %v1575 = vrot.slane %v1571, %v1574
      %v1576 = vmul.f32 %v1539, %v1575
      %v1577 = vmul.f32 %v1540, %v1575
      %v1578 = vmul.f32 %v1541, %v1575
      %v1579 = vmul.f32 %v1542, %v1575
      %v1580 = vmul.f32 %v1543, %v1575
      %v1581 = vmul.f32 %v1544, %v1575
      %v1582 = vmul.f32 %v1545, %v1575
      %v1583 = vmul.f32 %v1546, %v1575
      %v1584 = vmul.f32 %v1547, %v1575
      %v1585 = vmul.f32 %v1548, %v1575
      %v1586 = vmul.f32 %v1549, %v1575
      %v1587 = vmul.f32 %v1550, %v1575
      %v1588 = vmul.f32 %v1551, %v1575
      %v1589 = vmul.f32 %v1552, %v1575
      %v1590 = vmul.f32 %v1553, %v1575
      %v1591 = vmul.f32 %v1554, %v1575
      %v1592 = vmul.f32 %v1555, %v1575
      %v1593 = vmul.f32 %v1556, %v1575
      %v1594 = vmul.f32 %v1557, %v1575
      %v1595 = vmul.f32 %v1558, %v1575
      %v1596 = vmul.f32 %v1559, %v1575
      %v1597 = vmul.f32 %v1560, %v1575
      %v1598 = vmul.f32 %v1561, %v1575
      %v1599 = vmul.f32 %v1562, %v1575
      %v1600 = vmul.f32 %v1563, %v1575
      %v1601 = vmul.f32 %v1564, %v1575
      %v1602 = vmul.f32 %v1565, %v1575
      %v1603 = vmul.f32 %v1566, %v1575
      %v1604 = vmul.f32 %v1567, %v1575
      %v1605 = vmul.f32 %v1568, %v1575
      %v1606 = vmul.f32 %v1569, %v1575
      %v1607 = vmul.f32 %v1570, %v1575
      %v1608 = vadd.f32 %v1507, %v1576
      %v1609 = vadd.f32 %v1508, %v1577
      %v1610 = vadd.f32 %v1509, %v1578
      %v1611 = vadd.f32 %v1510, %v1579
      %v1612 = vadd.f32 %v1511, %v1580
      %v1613 = vadd.f32 %v1512, %v1581
      %v1614 = vadd.f32 %v1513, %v1582
      %v1615 = vadd.f32 %v1514, %v1583
      %v1616 = vadd.f32 %v1515, %v1584
      %v1617 = vadd.f32 %v1516, %v1585
      %v1618 = vadd.f32 %v1517, %v1586
      %v1619 = vadd.f32 %v1518, %v1587
      %v1620 = vadd.f32 %v1519, %v1588
      %v1621 = vadd.f32 %v1520, %v1589
      %v1622 = vadd.f32 %v1521, %v1590
      %v1623 = vadd.f32 %v1522, %v1591
      %v1624 = vadd.f32 %v1523, %v1592
      %v1625 = vadd.f32 %v1524, %v1593
      %v1626 = vadd.f32 %v1525, %v1594
      %v1627 = vadd.f32 %v1526, %v1595
      %v1628 = vadd.f32 %v1527, %v1596
      %v1629 = vadd.f32 %v1528, %v1597
      %v1630 = vadd.f32 %v1529, %v1598
      %v1631 = vadd.f32 %v1530, %v1599
      %v1632 = vadd.f32 %v1531, %v1600
      %v1633 = vadd.f32 %v1532, %v1601
      %v1634 = vadd.f32 %v1533, %v1602
      %v1635 = vadd.f32 %v1534, %v1603
      %v1636 = vadd.f32 %v1535, %v1604
      %v1637 = vadd.f32 %v1536, %v1605
      %v1638 = vadd.f32 %v1537, %v1606
      %v1639 = vadd.f32 %v1538, %v1607
      %v1640 = vld [vmem:[#allocation2 + $0x240] sm:$0xff]
      %v1641 = vld [vmem:[#allocation2 + $0x248] sm:$0xff]
      %v1642 = vld [vmem:[#allocation2 + $0x250] sm:$0xff]
      %v1643 = vld [vmem:[#allocation2 + $0x258] sm:$0xff]
      %v1644 = vld [vmem:[#allocation2 + $0x260] sm:$0xff]
      %v1645 = vld [vmem:[#allocation2 + $0x268] sm:$0xff]
      %v1646 = vld [vmem:[#allocation2 + $0x270] sm:$0xff]
      %v1647 = vld [vmem:[#allocation2 + $0x278] sm:$0xff]
      %v1648 = vld [vmem:[#allocation2 + $0x280] sm:$0xff]
      %v1649 = vld [vmem:[#allocation2 + $0x288] sm:$0xff]
      %v1650 = vld [vmem:[#allocation2 + $0x290] sm:$0xff]
      %v1651 = vld [vmem:[#allocation2 + $0x298] sm:$0xff]
      %v1652 = vld [vmem:[#allocation2 + $0x2a0] sm:$0xff]
      %v1653 = vld [vmem:[#allocation2 + $0x2a8] sm:$0xff]
      %v1654 = vld [vmem:[#allocation2 + $0x2b0] sm:$0xff]
      %v1655 = vld [vmem:[#allocation2 + $0x2b8] sm:$0xff]
      %v1656 = vld [vmem:[#allocation2 + $0x2c0] sm:$0xff]
      %v1657 = vld [vmem:[#allocation2 + $0x2c8] sm:$0xff]
      %v1658 = vld [vmem:[#allocation2 + $0x2d0] sm:$0xff]
      %v1659 = vld [vmem:[#allocation2 + $0x2d8] sm:$0xff]
      %v1660 = vld [vmem:[#allocation2 + $0x2e0] sm:$0xff]
      %v1661 = vld [vmem:[#allocation2 + $0x2e8] sm:$0xff]
      %v1662 = vld [vmem:[#allocation2 + $0x2f0] sm:$0xff]
      %v1663 = vld [vmem:[#allocation2 + $0x2f8] sm:$0xff]
      %v1664 = vld [vmem:[#allocation2 + $0x300] sm:$0xff]
      %v1665 = vld [vmem:[#allocation2 + $0x308] sm:$0xff]
      %v1666 = vld [vmem:[#allocation2 + $0x310] sm:$0xff]
      %v1667 = vld [vmem:[#allocation2 + $0x318] sm:$0xff]
      %v1668 = vld [vmem:[#allocation2 + $0x320] sm:$0xff]
      %v1669 = vld [vmem:[#allocation2 + $0x328] sm:$0xff]
      %v1670 = vld [vmem:[#allocation2 + $0x330] sm:$0xff]
      %v1671 = vld [vmem:[#allocation2 + $0x338] sm:$0xff]
      %v1672 = vld [vmem:[%s5 + $0x2] sm:$0x1]
      %v1673 = vlaneseq
      %v1674 = vshrl.u32 %v1673, 7
      %v1675 = vsub.s32 0, %v1674
      %v1676 = vrot.slane %v1672, %v1675
      %v1677 = vmul.f32 %v1640, %v1676
      %v1678 = vmul.f32 %v1641, %v1676
      %v1679 = vmul.f32 %v1642, %v1676
      %v1680 = vmul.f32 %v1643, %v1676
      %v1681 = vmul.f32 %v1644, %v1676
      %v1682 = vmul.f32 %v1645, %v1676
      %v1683 = vmul.f32 %v1646, %v1676
      %v1684 = vmul.f32 %v1647, %v1676
      %v1685 = vmul.f32 %v1648, %v1676
      %v1686 = vmul.f32 %v1649, %v1676
      %v1687 = vmul.f32 %v1650, %v1676
      %v1688 = vmul.f32 %v1651, %v1676
      %v1689 = vmul.f32 %v1652, %v1676
      %v1690 = vmul.f32 %v1653, %v1676
      %v1691 = vmul.f32 %v1654, %v1676
      %v1692 = vmul.f32 %v1655, %v1676
      %v1693 = vmul.f32 %v1656, %v1676
      %v1694 = vmul.f32 %v1657, %v1676
      %v1695 = vmul.f32 %v1658, %v1676
      %v1696 = vmul.f32 %v1659, %v1676
      %v1697 = vmul.f32 %v1660, %v1676
      %v1698 = vmul.f32 %v1661, %v1676
      %v1699 = vmul.f32 %v1662, %v1676
      %v1700 = vmul.f32 %v1663, %v1676
      %v1701 = vmul.f32 %v1664, %v1676
      %v1702 = vmul.f32 %v1665, %v1676
      %v1703 = vmul.f32 %v1666, %v1676
      %v1704 = vmul.f32 %v1667, %v1676
      %v1705 = vmul.f32 %v1668, %v1676
      %v1706 = vmul.f32 %v1669, %v1676
      %v1707 = vmul.f32 %v1670, %v1676
      %v1708 = vmul.f32 %v1671, %v1676
      %v1709 = vadd.f32 %v1608, %v1677
      %v1710 = vadd.f32 %v1609, %v1678
      %v1711 = vadd.f32 %v1610, %v1679
      %v1712 = vadd.f32 %v1611, %v1680
      %v1713 = vadd.f32 %v1612, %v1681
      %v1714 = vadd.f32 %v1613, %v1682
      %v1715 = vadd.f32 %v1614, %v1683
      %v1716 = vadd.f32 %v1615, %v1684
      %v1717 = vadd.f32 %v1616, %v1685
      %v1718 = vadd.f32 %v1617, %v1686
      %v1719 = vadd.f32 %v1618, %v1687
      %v1720 = vadd.f32 %v1619, %v1688
      %v1721 = vadd.f32 %v1620, %v1689
      %v1722 = vadd.f32 %v1621, %v1690
      %v1723 = vadd.f32 %v1622, %v1691
      %v1724 = vadd.f32 %v1623, %v1692
      %v1725 = vadd.f32 %v1624, %v1693
      %v1726 = vadd.f32 %v1625, %v1694
      %v1727 = vadd.f32 %v1626, %v1695
      %v1728 = vadd.f32 %v1627, %v1696
      %v1729 = vadd.f32 %v1628, %v1697
      %v1730 = vadd.f32 %v1629, %v1698
      %v1731 = vadd.f32 %v1630, %v1699
      %v1732 = vadd.f32 %v1631, %v1700
      %v1733 = vadd.f32 %v1632, %v1701
      %v1734 = vadd.f32 %v1633, %v1702
      %v1735 = vadd.f32 %v1634, %v1703
      %v1736 = vadd.f32 %v1635, %v1704
      %v1737 = vadd.f32 %v1636, %v1705
      %v1738 = vadd.f32 %v1637, %v1706
      %v1739 = vadd.f32 %v1638, %v1707
      %v1740 = vadd.f32 %v1639, %v1708
      %v1741 = vld [vmem:[#allocation2 + $0x100] sm:$0xff]
      %v1742 = vld [vmem:[#allocation2 + $0x108] sm:$0xff]
      %v1743 = vld [vmem:[%s5 + $0x3] sm:$0x1]
      %v1744 = vlaneseq
      %v1745 = vshrl.u32 %v1744, 7
      %v1746 = vsub.s32 0, %v1745
      %v1747 = vrot.slane %v1743, %v1746
      %v1748 = vmul.f32 %v1440, %v1747
      %v1749 = vmul.f32 %v1441, %v1747
      %v1750 = vmul.f32 %v1442, %v1747
      %v1751 = vmul.f32 %v1443, %v1747
      %v1752 = vmul.f32 %v1444, %v1747
      %v1753 = vmul.f32 %v1445, %v1747
      %v1754 = vmul.f32 %v1446, %v1747
      %v1755 = vmul.f32 %v1447, %v1747
      %v1756 = vmul.f32 %v1448, %v1747
      %v1757 = vmul.f32 %v1449, %v1747
      %v1758 = vmul.f32 %v1450, %v1747
      %v1759 = vmul.f32 %v1451, %v1747
      %v1760 = vmul.f32 %v1452, %v1747
      %v1761 = vmul.f32 %v1453, %v1747
      %v1762 = vmul.f32 %v1454, %v1747
      %v1763 = vmul.f32 %v1455, %v1747
      %v1764 = vmul.f32 %v1456, %v1747
      %v1765 = vmul.f32 %v1457, %v1747
      %v1766 = vmul.f32 %v1458, %v1747
      %v1767 = vmul.f32 %v1459, %v1747
      %v1768 = vmul.f32 %v1460, %v1747
      %v1769 = vmul.f32 %v1461, %v1747
      %v1770 = vmul.f32 %v1462, %v1747
      %v1771 = vmul.f32 %v1463, %v1747
      %v1772 = vmul.f32 %v1464, %v1747
      %v1773 = vmul.f32 %v1465, %v1747
      %v1774 = vmul.f32 %v1466, %v1747
      %v1775 = vmul.f32 %v1467, %v1747
      %v1776 = vmul.f32 %v1468, %v1747
      %v1777 = vmul.f32 %v1469, %v1747
      %v1778 = vmul.f32 %v1741, %v1747
      %v1779 = vmul.f32 %v1742, %v1747
      %v1780 = vadd.f32 %v1709, %v1748
      %v1781 = vadd.f32 %v1710, %v1749
      %v1782 = vadd.f32 %v1711, %v1750
      %v1783 = vadd.f32 %v1712, %v1751
      %v1784 = vadd.f32 %v1713, %v1752
      %v1785 = vadd.f32 %v1714, %v1753
      %v1786 = vadd.f32 %v1715, %v1754
      %v1787 = vadd.f32 %v1716, %v1755
      %v1788 = vadd.f32 %v1717, %v1756
      %v1789 = vadd.f32 %v1718, %v1757
      %v1790 = vadd.f32 %v1719, %v1758
      %v1791 = vadd.f32 %v1720, %v1759
      %v1792 = vadd.f32 %v1721, %v1760
      %v1793 = vadd.f32 %v1722, %v1761
      %v1794 = vadd.f32 %v1723, %v1762
      %v1795 = vadd.f32 %v1724, %v1763
      %v1796 = vadd.f32 %v1725, %v1764
      %v1797 = vadd.f32 %v1726, %v1765
      %v1798 = vadd.f32 %v1727, %v1766
      %v1799 = vadd.f32 %v1728, %v1767
      %v1800 = vadd.f32 %v1729, %v1768
      %v1801 = vadd.f32 %v1730, %v1769
      %v1802 = vadd.f32 %v1731, %v1770
      %v1803 = vadd.f32 %v1732, %v1771
      %v1804 = vadd.f32 %v1733, %v1772
      %v1805 = vadd.f32 %v1734, %v1773
      %v1806 = vadd.f32 %v1735, %v1774
      %v1807 = vadd.f32 %v1736, %v1775
      %v1808 = vadd.f32 %v1737, %v1776
      %v1809 = vadd.f32 %v1738, %v1777
      %v1810 = vadd.f32 %v1739, %v1778
      %v1811 = vadd.f32 %v1740, %v1779
      %v1812 = vld [vmem:[#allocation2 + $0x340] sm:$0xff]
      %v1813 = vld [vmem:[#allocation2 + $0x348] sm:$0xff]
      %v1814 = vld [vmem:[%s5 + $0x5] sm:$0x1]
      %v1815 = vlaneseq
      %v1816 = vshrl.u32 %v1815, 7
      %v1817 = vsub.s32 0, %v1816
      %v1818 = vrot.slane %v1814, %v1817
      %v1819 = vmul.f32 %v1642, %v1818
      %v1820 = vmul.f32 %v1643, %v1818
      %v1821 = vmul.f32 %v1644, %v1818
      %v1822 = vmul.f32 %v1645, %v1818
      %v1823 = vmul.f32 %v1646, %v1818
      %v1824 = vmul.f32 %v1647, %v1818
      %v1825 = vmul.f32 %v1648, %v1818
      %v1826 = vmul.f32 %v1649, %v1818
      %v1827 = vmul.f32 %v1650, %v1818
      %v1828 = vmul.f32 %v1651, %v1818
      %v1829 = vmul.f32 %v1652, %v1818
      %v1830 = vmul.f32 %v1653, %v1818
      %v1831 = vmul.f32 %v1654, %v1818
      %v1832 = vmul.f32 %v1655, %v1818
      %v1833 = vmul.f32 %v1656, %v1818
      %v1834 = vmul.f32 %v1657, %v1818
      %v1835 = vmul.f32 %v1658, %v1818
      %v1836 = vmul.f32 %v1659, %v1818
      %v1837 = vmul.f32 %v1660, %v1818
      %v1838 = vmul.f32 %v1661, %v1818
      %v1839 = vmul.f32 %v1662, %v1818
      %v1840 = vmul.f32 %v1663, %v1818
      %v1841 = vmul.f32 %v1664, %v1818
      %v1842 = vmul.f32 %v1665, %v1818
      %v1843 = vmul.f32 %v1666, %v1818
      %v1844 = vmul.f32 %v1667, %v1818
      %v1845 = vmul.f32 %v1668, %v1818
      %v1846 = vmul.f32 %v1669, %v1818
      %v1847 = vmul.f32 %v1670, %v1818
      %v1848 = vmul.f32 %v1671, %v1818
      %v1849 = vmul.f32 %v1812, %v1818
      %v1850 = vmul.f32 %v1813, %v1818
      %v1851 = vadd.f32 %v1780, %v1819
      %v1852 = vadd.f32 %v1781, %v1820
      %v1853 = vadd.f32 %v1782, %v1821
      %v1854 = vadd.f32 %v1783, %v1822
      %v1855 = vadd.f32 %v1784, %v1823
      %v1856 = vadd.f32 %v1785, %v1824
      %v1857 = vadd.f32 %v1786, %v1825
      %v1858 = vadd.f32 %v1787, %v1826
      %v1859 = vadd.f32 %v1788, %v1827
      %v1860 = vadd.f32 %v1789, %v1828
      %v1861 = vadd.f32 %v1790, %v1829
      %v1862 = vadd.f32 %v1791, %v1830
      %v1863 = vadd.f32 %v1792, %v1831
      %v1864 = vadd.f32 %v1793, %v1832
      %v1865 = vadd.f32 %v1794, %v1833
      %v1866 = vadd.f32 %v1795, %v1834
      %v1867 = vadd.f32 %v1796, %v1835
      %v1868 = vadd.f32 %v1797, %v1836
      %v1869 = vadd.f32 %v1798, %v1837
      %v1870 = vadd.f32 %v1799, %v1838
      %v1871 = vadd.f32 %v1800, %v1839
      %v1872 = vadd.f32 %v1801, %v1840
      %v1873 = vadd.f32 %v1802, %v1841
      %v1874 = vadd.f32 %v1803, %v1842
      %v1875 = vadd.f32 %v1804, %v1843
      %v1876 = vadd.f32 %v1805, %v1844
      %v1877 = vadd.f32 %v1806, %v1845
      %v1878 = vadd.f32 %v1807, %v1846
      %v1879 = vadd.f32 %v1808, %v1847
      %v1880 = vadd.f32 %v1809, %v1848
      %v1881 = vadd.f32 %v1810, %v1849
      %v1882 = vadd.f32 %v1811, %v1850
      %v1883 = vld [vmem:[#allocation2 + $0x110] sm:$0xff]
      %v1884 = vld [vmem:[#allocation2 + $0x118] sm:$0xff]
      %v1885 = vld [vmem:[%s5 + $0x6] sm:$0x1]
      %v1886 = vlaneseq
      %v1887 = vshrl.u32 %v1886, 7
      %v1888 = vsub.s32 0, %v1887
      %v1889 = vrot.slane %v1885, %v1888
      %v1890 = vmul.f32 %v1442, %v1889
      %v1891 = vmul.f32 %v1443, %v1889
      %v1892 = vmul.f32 %v1444, %v1889
      %v1893 = vmul.f32 %v1445, %v1889
      %v1894 = vmul.f32 %v1446, %v1889
      %v1895 = vmul.f32 %v1447, %v1889
      %v1896 = vmul.f32 %v1448, %v1889
      %v1897 = vmul.f32 %v1449, %v1889
      %v1898 = vmul.f32 %v1450, %v1889
      %v1899 = vmul.f32 %v1451, %v1889
      %v1900 = vmul.f32 %v1452, %v1889
      %v1901 = vmul.f32 %v1453, %v1889
      %v1902 = vmul.f32 %v1454, %v1889
      %v1903 = vmul.f32 %v1455, %v1889
      %v1904 = vmul.f32 %v1456, %v1889
      %v1905 = vmul.f32 %v1457, %v1889
      %v1906 = vmul.f32 %v1458, %v1889
      %v1907 = vmul.f32 %v1459, %v1889
      %v1908 = vmul.f32 %v1460, %v1889
      %v1909 = vmul.f32 %v1461, %v1889
      %v1910 = vmul.f32 %v1462, %v1889
      %v1911 = vmul.f32 %v1463, %v1889
      %v1912 = vmul.f32 %v1464, %v1889
      %v1913 = vmul.f32 %v1465, %v1889
      %v1914 = vmul.f32 %v1466, %v1889
      %v1915 = vmul.f32 %v1467, %v1889
      %v1916 = vmul.f32 %v1468, %v1889
      %v1917 = vmul.f32 %v1469, %v1889
      %v1918 = vmul.f32 %v1741, %v1889
      %v1919 = vmul.f32 %v1742, %v1889
      %v1920 = vmul.f32 %v1883, %v1889
      %v1921 = vmul.f32 %v1884, %v1889
      %v1922 = vadd.f32 %v1851, %v1890
      %v1923 = vadd.f32 %v1852, %v1891
      %v1924 = vadd.f32 %v1853, %v1892
      %v1925 = vadd.f32 %v1854, %v1893
      %v1926 = vadd.f32 %v1855, %v1894
      %v1927 = vadd.f32 %v1856, %v1895
      %v1928 = vadd.f32 %v1857, %v1896
      %v1929 = vadd.f32 %v1858, %v1897
      %v1930 = vadd.f32 %v1859, %v1898
      %v1931 = vadd.f32 %v1860, %v1899
      %v1932 = vadd.f32 %v1861, %v1900
      %v1933 = vadd.f32 %v1862, %v1901
      %v1934 = vadd.f32 %v1863, %v1902
      %v1935 = vadd.f32 %v1864, %v1903
      %v1936 = vadd.f32 %v1865, %v1904
      %v1937 = vadd.f32 %v1866, %v1905
      %v1938 = vadd.f32 %v1867, %v1906
      %v1939 = vadd.f32 %v1868, %v1907
      %v1940 = vadd.f32 %v1869, %v1908
      %v1941 = vadd.f32 %v1870, %v1909
      %v1942 = vadd.f32 %v1871, %v1910
      %v1943 = vadd.f32 %v1872, %v1911
      %v1944 = vadd.f32 %v1873, %v1912
      %v1945 = vadd.f32 %v1874, %v1913
      %v1946 = vadd.f32 %v1875, %v1914
      %v1947 = vadd.f32 %v1876, %v1915
      %v1948 = vadd.f32 %v1877, %v1916
      %v1949 = vadd.f32 %v1878, %v1917
      %v1950 = vadd.f32 %v1879, %v1918
      %v1951 = vadd.f32 %v1880, %v1919
      %v1952 = vadd.f32 %v1881, %v1920
      %v1953 = vadd.f32 %v1882, %v1921
      %v1954 = vld [vmem:[#allocation2 + $0x220] sm:$0xff]
      %v1955 = vld [vmem:[#allocation2 + $0x228] sm:$0xff]
      %v1956 = vld [vmem:[#allocation2 + $0x230] sm:$0xff]
      %v1957 = vld [vmem:[#allocation2 + $0x238] sm:$0xff]
      %v1958 = vld [vmem:[%s5 + $0x7] sm:$0x1]
      %v1959 = vlaneseq
      %v1960 = vshrl.u32 %v1959, 7
      %v1961 = vsub.s32 0, %v1960
      %v1962 = vrot.slane %v1958, %v1961
      %v1963 = vmul.f32 %v1543, %v1962
      %v1964 = vmul.f32 %v1544, %v1962
      %v1965 = vmul.f32 %v1545, %v1962
      %v1966 = vmul.f32 %v1546, %v1962
      %v1967 = vmul.f32 %v1547, %v1962
      %v1968 = vmul.f32 %v1548, %v1962
      %v1969 = vmul.f32 %v1549, %v1962
      %v1970 = vmul.f32 %v1550, %v1962
      %v1971 = vmul.f32 %v1551, %v1962
      %v1972 = vmul.f32 %v1552, %v1962
      %v1973 = vmul.f32 %v1553, %v1962
      %v1974 = vmul.f32 %v1554, %v1962
      %v1975 = vmul.f32 %v1555, %v1962
      %v1976 = vmul.f32 %v1556, %v1962
      %v1977 = vmul.f32 %v1557, %v1962
      %v1978 = vmul.f32 %v1558, %v1962
      %v1979 = vmul.f32 %v1559, %v1962
      %v1980 = vmul.f32 %v1560, %v1962
      %v1981 = vmul.f32 %v1561, %v1962
      %v1982 = vmul.f32 %v1562, %v1962
      %v1983 = vmul.f32 %v1563, %v1962
      %v1984 = vmul.f32 %v1564, %v1962
      %v1985 = vmul.f32 %v1565, %v1962
      %v1986 = vmul.f32 %v1566, %v1962
      %v1987 = vmul.f32 %v1567, %v1962
      %v1988 = vmul.f32 %v1568, %v1962
      %v1989 = vmul.f32 %v1569, %v1962
      %v1990 = vmul.f32 %v1570, %v1962
      %v1991 = vmul.f32 %v1954, %v1962
      %v1992 = vmul.f32 %v1955, %v1962
      %v1993 = vmul.f32 %v1956, %v1962
      %v1994 = vmul.f32 %v1957, %v1962
      %v1995 = vadd.f32 %v1922, %v1963
      %v1996 = vadd.f32 %v1923, %v1964
      %v1997 = vadd.f32 %v1924, %v1965
      %v1998 = vadd.f32 %v1925, %v1966
      %v1999 = vadd.f32 %v1926, %v1967
      %v2000 = vadd.f32 %v1927, %v1968
      %v2001 = vadd.f32 %v1928, %v1969
      %v2002 = vadd.f32 %v1929, %v1970
      %v2003 = vadd.f32 %v1930, %v1971
      %v2004 = vadd.f32 %v1931, %v1972
      %v2005 = vadd.f32 %v1932, %v1973
      %v2006 = vadd.f32 %v1933, %v1974
      %v2007 = vadd.f32 %v1934, %v1975
      %v2008 = vadd.f32 %v1935, %v1976
      %v2009 = vadd.f32 %v1936, %v1977
      %v2010 = vadd.f32 %v1937, %v1978
      %v2011 = vadd.f32 %v1938, %v1979
      %v2012 = vadd.f32 %v1939, %v1980
      %v2013 = vadd.f32 %v1940, %v1981
      %v2014 = vadd.f32 %v1941, %v1982
      %v2015 = vadd.f32 %v1942, %v1983
      %v2016 = vadd.f32 %v1943, %v1984
      %v2017 = vadd.f32 %v1944, %v1985
      %v2018 = vadd.f32 %v1945, %v1986
      %v2019 = vadd.f32 %v1946, %v1987
      %v2020 = vadd.f32 %v1947, %v1988
      %v2021 = vadd.f32 %v1948, %v1989
      %v2022 = vadd.f32 %v1949, %v1990
      %v2023 = vadd.f32 %v1950, %v1991
      %v2024 = vadd.f32 %v1951, %v1992
      %v2025 = vadd.f32 %v1952, %v1993
      %v2026 = vadd.f32 %v1953, %v1994
      %v2027 = vld [vmem:[#allocation2 + $0x260] sm:$0xff]
      %v2028 = vld [vmem:[#allocation2 + $0x268] sm:$0xff]
      %v2029 = vld [vmem:[#allocation2 + $0x270] sm:$0xff]
      %v2030 = vld [vmem:[#allocation2 + $0x278] sm:$0xff]
      %v2031 = vld [vmem:[#allocation2 + $0x280] sm:$0xff]
      %v2032 = vld [vmem:[#allocation2 + $0x288] sm:$0xff]
      %v2033 = vld [vmem:[#allocation2 + $0x290] sm:$0xff]
      %v2034 = vld [vmem:[#allocation2 + $0x298] sm:$0xff]
      %v2035 = vld [vmem:[#allocation2 + $0x2a0] sm:$0xff]
      %v2036 = vld [vmem:[#allocation2 + $0x2a8] sm:$0xff]
      %v2037 = vld [vmem:[#allocation2 + $0x2b0] sm:$0xff]
      %v2038 = vld [vmem:[#allocation2 + $0x2b8] sm:$0xff]
      %v2039 = vld [vmem:[#allocation2 + $0x2c0] sm:$0xff]
      %v2040 = vld [vmem:[#allocation2 + $0x2c8] sm:$0xff]
      %v2041 = vld [vmem:[#allocation2 + $0x2d0] sm:$0xff]
      %v2042 = vld [vmem:[#allocation2 + $0x2d8] sm:$0xff]
      %v2043 = vld [vmem:[#allocation2 + $0x2e0] sm:$0xff]
      %v2044 = vld [vmem:[#allocation2 + $0x2e8] sm:$0xff]
      %v2045 = vld [vmem:[#allocation2 + $0x2f0] sm:$0xff]
      %v2046 = vld [vmem:[#allocation2 + $0x2f8] sm:$0xff]
      %v2047 = vld [vmem:[#allocation2 + $0x300] sm:$0xff]
      %v2048 = vld [vmem:[#allocation2 + $0x308] sm:$0xff]
      %v2049 = vld [vmem:[#allocation2 + $0x310] sm:$0xff]
      %v2050 = vld [vmem:[#allocation2 + $0x318] sm:$0xff]
      %v2051 = vld [vmem:[#allocation2 + $0x320] sm:$0xff]
      %v2052 = vld [vmem:[#allocation2 + $0x328] sm:$0xff]
      %v2053 = vld [vmem:[#allocation2 + $0x330] sm:$0xff]
      %v2054 = vld [vmem:[#allocation2 + $0x338] sm:$0xff]
      %v2055 = vld [vmem:[#allocation2 + $0x340] sm:$0xff]
      %v2056 = vld [vmem:[#allocation2 + $0x348] sm:$0xff]
      %v2057 = vld [vmem:[#allocation2 + $0x350] sm:$0xff]
      %v2058 = vld [vmem:[#allocation2 + $0x358] sm:$0xff]
      %v2059 = vld [vmem:[%s5 + $0x8] sm:$0x1]
      %v2060 = vlaneseq
      %v2061 = vshrl.u32 %v2060, 7
      %v2062 = vsub.s32 0, %v2061
      %v2063 = vrot.slane %v2059, %v2062
      %v2064 = vmul.f32 %v2027, %v2063
      %v2065 = vmul.f32 %v2028, %v2063
      %v2066 = vmul.f32 %v2029, %v2063
      %v2067 = vmul.f32 %v2030, %v2063
      %v2068 = vmul.f32 %v2031, %v2063
      %v2069 = vmul.f32 %v2032, %v2063
      %v2070 = vmul.f32 %v2033, %v2063
      %v2071 = vmul.f32 %v2034, %v2063
      %v2072 = vmul.f32 %v2035, %v2063
      %v2073 = vmul.f32 %v2036, %v2063
      %v2074 = vmul.f32 %v2037, %v2063
      %v2075 = vmul.f32 %v2038, %v2063
      %v2076 = vmul.f32 %v2039, %v2063
      %v2077 = vmul.f32 %v2040, %v2063
      %v2078 = vmul.f32 %v2041, %v2063
      %v2079 = vmul.f32 %v2042, %v2063
      %v2080 = vmul.f32 %v2043, %v2063
      %v2081 = vmul.f32 %v2044, %v2063
      %v2082 = vmul.f32 %v2045, %v2063
      %v2083 = vmul.f32 %v2046, %v2063
      %v2084 = vmul.f32 %v2047, %v2063
      %v2085 = vmul.f32 %v2048, %v2063
      %v2086 = vmul.f32 %v2049, %v2063
      %v2087 = vmul.f32 %v2050, %v2063
      %v2088 = vmul.f32 %v2051, %v2063
      %v2089 = vmul.f32 %v2052, %v2063
      %v2090 = vmul.f32 %v2053, %v2063
      %v2091 = vmul.f32 %v2054, %v2063
      %v2092 = vmul.f32 %v2055, %v2063
      %v2093 = vmul.f32 %v2056, %v2063
      %v2094 = vmul.f32 %v2057, %v2063
      %v2095 = vmul.f32 %v2058, %v2063
      %v2096 = vadd.f32 %v1995, %v2064
      %v2097 = vadd.f32 %v1996, %v2065
      %v2098 = vadd.f32 %v1997, %v2066
      %v2099 = vadd.f32 %v1998, %v2067
      %v2100 = vadd.f32 %v1999, %v2068
      %v2101 = vadd.f32 %v2000, %v2069
      %v2102 = vadd.f32 %v2001, %v2070
      %v2103 = vadd.f32 %v2002, %v2071
      %v2104 = vadd.f32 %v2003, %v2072
      %v2105 = vadd.f32 %v2004, %v2073
      %v2106 = vadd.f32 %v2005, %v2074
      %v2107 = vadd.f32 %v2006, %v2075
      %v2108 = vadd.f32 %v2007, %v2076
      %v2109 = vadd.f32 %v2008, %v2077
      %v2110 = vadd.f32 %v2009, %v2078
      %v2111 = vadd.f32 %v2010, %v2079
      %v2112 = vadd.f32 %v2011, %v2080
      %v2113 = vadd.f32 %v2012, %v2081
      %v2114 = vadd.f32 %v2013, %v2082
      %v2115 = vadd.f32 %v2014, %v2083
      %v2116 = vadd.f32 %v2015, %v2084
      %v2117 = vadd.f32 %v2016, %v2085
      %v2118 = vadd.f32 %v2017, %v2086
      %v2119 = vadd.f32 %v2018, %v2087
      %v2120 = vadd.f32 %v2019, %v2088
      %v2121 = vadd.f32 %v2020, %v2089
      %v2122 = vadd.f32 %v2021, %v2090
      %v2123 = vadd.f32 %v2022, %v2091
      %v2124 = vadd.f32 %v2023, %v2092
      %v2125 = vadd.f32 %v2024, %v2093
      %v2126 = vadd.f32 %v2025, %v2094
      %v2127 = vadd.f32 %v2026, %v2095
      %v2128 = vld [vmem:[%s6] sm:$0x1]
      %v2130 = vlaneseq
      %v2131 = vshrl.u32 %v2130, 7
      %v2132 = vsub.s32 0, %v2131
      %v2133 = vrot.slane %v2128, %v2132
      %v2135 = vadd.f32 %v2096, %v2133
      %v2136 = vadd.f32 %v2097, %v2133
      %v2137 = vadd.f32 %v2098, %v2133
      %v2138 = vadd.f32 %v2099, %v2133
      %v2139 = vadd.f32 %v2100, %v2133
      %v2140 = vadd.f32 %v2101, %v2133
      %v2141 = vadd.f32 %v2102, %v2133
      %v2142 = vadd.f32 %v2103, %v2133
      %v2143 = vadd.f32 %v2104, %v2133
      %v2144 = vadd.f32 %v2105, %v2133
      %v2145 = vadd.f32 %v2106, %v2133
      %v2146 = vadd.f32 %v2107, %v2133
      %v2147 = vadd.f32 %v2108, %v2133
      %v2148 = vadd.f32 %v2109, %v2133
      %v2149 = vadd.f32 %v2110, %v2133
      %v2150 = vadd.f32 %v2111, %v2133
      %v2151 = vadd.f32 %v2112, %v2133
      %v2152 = vadd.f32 %v2113, %v2133
      %v2153 = vadd.f32 %v2114, %v2133
      %v2154 = vadd.f32 %v2115, %v2133
      %v2155 = vadd.f32 %v2116, %v2133
      %v2156 = vadd.f32 %v2117, %v2133
      %v2157 = vadd.f32 %v2118, %v2133
      %v2158 = vadd.f32 %v2119, %v2133
      %v2159 = vadd.f32 %v2120, %v2133
      %v2160 = vadd.f32 %v2121, %v2133
      %v2161 = vadd.f32 %v2122, %v2133
      %v2162 = vadd.f32 %v2123, %v2133
      %v2163 = vadd.f32 %v2124, %v2133
      %v2164 = vadd.f32 %v2125, %v2133
      %v2165 = vadd.f32 %v2126, %v2133
      %v2166 = vadd.f32 %v2127, %v2133
      %v2167 = vmax.f32 %v2135, 0.0
      %v2168 = vmax.f32 %v2136, 0.0
      %v2169 = vmax.f32 %v2137, 0.0
      %v2170 = vmax.f32 %v2138, 0.0
      %v2171 = vmax.f32 %v2139, 0.0
      %v2172 = vmax.f32 %v2140, 0.0
      %v2173 = vmax.f32 %v2141, 0.0
      %v2174 = vmax.f32 %v2142, 0.0
      %v2175 = vmax.f32 %v2143, 0.0
      %v2176 = vmax.f32 %v2144, 0.0
      %v2177 = vmax.f32 %v2145, 0.0
      %v2178 = vmax.f32 %v2146, 0.0
      %v2179 = vmax.f32 %v2147, 0.0
      %v2180 = vmax.f32 %v2148, 0.0
      %v2181 = vmax.f32 %v2149, 0.0
      %v2182 = vmax.f32 %v2150, 0.0
      %v2183 = vmax.f32 %v2151, 0.0
      %v2184 = vmax.f32 %v2152, 0.0
      %v2185 = vmax.f32 %v2153, 0.0
      %v2186 = vmax.f32 %v2154, 0.0
      %v2187 = vmax.f32 %v2155, 0.0
      %v2188 = vmax.f32 %v2156, 0.0
      %v2189 = vmax.f32 %v2157, 0.0
      %v2190 = vmax.f32 %v2158, 0.0
      %v2191 = vmax.f32 %v2159, 0.0
      %v2192 = vmax.f32 %v2160, 0.0
      %v2193 = vmax.f32 %v2161, 0.0
      %v2194 = vmax.f32 %v2162, 0.0
      %v2195 = vmax.f32 %v2163, 0.0
      %v2196 = vmax.f32 %v2164, 0.0
      %v2197 = vmax.f32 %v2165, 0.0
      %v2198 = vmax.f32 %v2166, 0.0
      %v2199 = vadd.f32 %v2167, %v2168
      %v2200 = vadd.f32 %v2199, %v2169
      %v2201 = vadd.f32 %v2200, %v2170
      %v2202 = vadd.f32 %v2201, %v2171
      %v2203 = vadd.f32 %v2202, %v2172
      %v2204 = vadd.f32 %v2203, %v2173
      %v2205 = vadd.f32 %v2204, %v2174
      %v2206 = vadd.f32 %v2205, %v2175
      %v2207 = vadd.f32 %v2206, %v2176
      %v2208 = vadd.f32 %v2207, %v2177
      %v2209 = vadd.f32 %v2208, %v2178
      %v2210 = vadd.f32 %v2209, %v2179
      %v2211 = vadd.f32 %v2210, %v2180
      %v2212 = vadd.f32 %v2211, %v2181
      %v2213 = vadd.f32 %v2212, %v2182
      %v2214 = vadd.f32 %v2213, %v2183
      %v2215 = vadd.f32 %v2214, %v2184
      %v2216 = vadd.f32 %v2215, %v2185
      %v2217 = vadd.f32 %v2216, %v2186
      %v2218 = vadd.f32 %v2217, %v2187
      %v2219 = vadd.f32 %v2218, %v2188
      %v2220 = vadd.f32 %v2219, %v2189
      %v2221 = vadd.f32 %v2220, %v2190
      %v2222 = vadd.f32 %v2221, %v2191
      %v2223 = vadd.f32 %v2222, %v2192
      %v2224 = vadd.f32 %v2223, %v2193
      %v2225 = vadd.f32 %v2224, %v2194
      %v2226 = vadd.f32 %v2225, %v2195
      %v2227 = vadd.f32 %v2226, %v2196
      %v2228 = vadd.f32 %v2227, %v2197
      %v2229 = vadd.f32 %v2228, %v2198
      %v2230 = vrot.slane %v2229, 4
      %v2231 = vadd.f32 %v2229, %v2230
      %v2232 = vrot.slane %v2231, 2
      %v2233 = vadd.f32 %v2231, %v2232
      %v2234 = vrot.slane %v2233, 1
      %v2235 = vadd.f32 %v2233, %v2234
      %v2236 = vmul.f32 %v2235, 0.00390625
      %v2237 = vld [vmem:[%s7] sm:$0xff]
      %v2238 = vld [vmem:[%s7 + $0x8] sm:$0xff]
      %v2239 = vld [vmem:[%s7 + $0x10] sm:$0xff]
      %v2240 = vld [vmem:[%s7 + $0x18] sm:$0xff]
      %v2241 = vld [vmem:[%s7 + $0x20] sm:$0xff]
      %v2242 = vld [vmem:[%s7 + $0x28] sm:$0xff]
      %v2243 = vld [vmem:[%s7 + $0x30] sm:$0xff]
      %v2244 = vld [vmem:[%s7 + $0x38] sm:$0xff]
      %v2245 = vld [vmem:[%s7 + $0x40] sm:$0xff]
      %v2246 = vld [vmem:[%s7 + $0x48] sm:$0xff]
      %v2247 = vld [vmem:[%s7 + $0x50] sm:$0xff]
      %v2248 = vld [vmem:[%s7 + $0x58] sm:$0xff]
      %v2249 = vld [vmem:[%s7 + $0x60] sm:$0xff]
      %v2250 = vld [vmem:[%s7 + $0x68] sm:$0xff]
      %v2251 = vld [vmem:[%s7 + $0x70] sm:$0xff]
      %v2252 = vld [vmem:[%s7 + $0x78] sm:$0xff]
      %2253 = vmatprep.subr.mxu0 0.0
      %2254 = vmatpush1.msra.mxu0 %v2237
      %2255 = vmatprep.subr.mxu0 0.0
      %2256 = vmatpush1.msra.mxu0 %v2238
      %2257 = vmatprep.subr.mxu0 0.0
      %2258 = vmatpush1.msra.mxu0 %v2239
      %2259 = vmatprep.subr.mxu0 0.0
      %2260 = vmatpush1.msra.mxu0 %v2240
      %2261 = vmatprep.subr.mxu0 0.0
      %2262 = vmatpush1.msra.mxu0 %v2241
      %2263 = vmatprep.subr.mxu0 0.0
      %2264 = vmatpush1.msra.mxu0 %v2242
      %2265 = vmatprep.subr.mxu0 0.0
      %2266 = vmatpush1.msra.mxu0 %v2243
      %2267 = vmatprep.subr.mxu0 0.0
      %2268 = vmatpush1.msra.mxu0 %v2244
      %2269 = vmatprep.subr.mxu0 0.0
      %2270 = vmatpush1.msra.mxu0 %v2245
      %2271 = vmatprep.subr.mxu0 0.0
      %2272 = vmatpush1.msra.mxu0 %v2246
      %2273 = vmatprep.subr.mxu0 0.0
      %2274 = vmatpush1.msra.mxu0 %v2247
      %2275 = vmatprep.subr.mxu0 0.0
      %2276 = vmatpush1.msra.mxu0 %v2248
      %2277 = vmatprep.subr.mxu0 0.0
      %2278 = vmatpush1.msra.mxu0 %v2249
      %2279 = vmatprep.subr.mxu0 0.0
      %2280 = vmatpush1.msra.mxu0 %v2250
      %2281 = vmatprep.subr.mxu0 0.0
      %2282 = vmatpush1.msra.mxu0 %v2251
      %2283 = vmatprep.subr.mxu0 0.0
      %2284 = vmatpush1.msra.mxu0 %v2252
      %2285 = vmatprep.subr.mxu0 0.0
      %2286 = vmatpush1.msra.mxu0 0.0
      %2287 = vmatprep.subr.mxu0 0.0
      %2288 = vmatpush1.msra.mxu0 0.0
      %2289 = vmatprep.subr.mxu0 0.0
      %2290 = vmatpush1.msra.mxu0 0.0
      %2291 = vmatprep.subr.mxu0 0.0
      %2292 = vmatpush1.msra.mxu0 0.0
      %2293 = vmatprep.subr.mxu0 0.0
      %2294 = vmatpush1.msra.mxu0 0.0
      %2295 = vmatprep.subr.mxu0 0.0
      %2296 = vmatpush1.msra.mxu0 0.0
      %2297 = vmatprep.subr.mxu0 0.0
      %2298 = vmatpush1.msra.mxu0 0.0
      %2299 = vmatprep.subr.mxu0 0.0
      %2300 = vmatpush1.msra.mxu0 0.0
      %2301 = vmatprep.subr.mxu0 0.0
      %2302 = vmatpush1.msra.mxu0 0.0
      %2303 = vmatprep.subr.mxu0 0.0
      %2304 = vmatpush1.msra.mxu0 0.0
      %2305 = vmatprep.subr.mxu0 0.0
      %2306 = vmatpush1.msra.mxu0 0.0
      %2307 = vmatprep.subr.mxu0 0.0
      %2308 = vmatpush1.msra.mxu0 0.0
      %2309 = vmatprep.subr.mxu0 0.0
      %2310 = vmatpush1.msra.mxu0 0.0
      %2311 = vmatprep.subr.mxu0 0.0
      %2312 = vmatpush1.msra.mxu0 0.0
      %2313 = vmatprep.subr.mxu0 0.0
      %2314 = vmatpush1.msra.mxu0 0.0
      %2315 = vmatprep.subr.mxu0 0.0
      %2316 = vmatpush1.msra.mxu0 0.0
      %2317 = vmatprep.mubr.f32.mxu0 0.0
      %2318 = vmatmul.mubr.f32.gmra.mrb[0].mxu0 %v2236
      %v2319 = vpop.f32.mrb[0].mxu0
      %v2320 = vadd.f32 0.0, %v2319
      %v2321 = vpop.f32.mrb[0].mxu0
      %2322 = vdwg.mxu0
      %v2323 = vmax.f32 %v2320, 0.0
      %v2324 = vld [vmem:[%s8] sm:$0xff]
      %v2325 = vld [vmem:[%s8 + $0x8] sm:$0xff]
      %v2326 = vld [vmem:[%s8 + $0x10] sm:$0xff]
      %v2327 = vld [vmem:[%s8 + $0x18] sm:$0xff]
      %v2328 = vld [vmem:[%s8 + $0x20] sm:$0xff]
      %v2329 = vld [vmem:[%s8 + $0x28] sm:$0xff]
      %v2330 = vld [vmem:[%s8 + $0x30] sm:$0xff]
      %v2331 = vld [vmem:[%s8 + $0x38] sm:$0xff]
      %v2332 = vld [vmem:[%s8 + $0x40] sm:$0xff]
      %v2333 = vld [vmem:[%s8 + $0x48] sm:$0xff]
      %v2334 = vld [vmem:[%s8 + $0x50] sm:$0xff]
      %v2335 = vld [vmem:[%s8 + $0x58] sm:$0xff]
      %v2336 = vld [vmem:[%s8 + $0x60] sm:$0xff]
      %v2337 = vld [vmem:[%s8 + $0x68] sm:$0xff]
      %v2338 = vld [vmem:[%s8 + $0x70] sm:$0xff]
      %v2339 = vld [vmem:[%s8 + $0x78] sm:$0xff]
      %2340 = vmatprep.subr.mxu0 0.0
      %2341 = vmatpush1.msra.mxu0 %v2324
      %2342 = vmatprep.subr.mxu0 0.0
      %2343 = vmatpush1.msra.mxu0 %v2325
      %2344 = vmatprep.subr.mxu0 0.0
      %2345 = vmatpush1.msra.mxu0 %v2326
      %2346 = vmatprep.subr.mxu0 0.0
      %2347 = vmatpush1.msra.mxu0 %v2327
      %2348 = vmatprep.subr.mxu0 0.0
      %2349 = vmatpush1.msra.mxu0 %v2328
      %2350 = vmatprep.subr.mxu0 0.0
      %2351 = vmatpush1.msra.mxu0 %v2329
      %2352 = vmatprep.subr.mxu0 0.0
      %2353 = vmatpush1.msra.mxu0 %v2330
      %2354 = vmatprep.subr.mxu0 0.0
      %2355 = vmatpush1.msra.mxu0 %v2331
      %2356 = vmatprep.subr.mxu0 0.0
      %2357 = vmatpush1.msra.mxu0 %v2332
      %2358 = vmatprep.subr.mxu0 0.0
      %2359 = vmatpush1.msra.mxu0 %v2333
      %2360 = vmatprep.subr.mxu0 0.0
      %2361 = vmatpush1.msra.mxu0 %v2334
      %2362 = vmatprep.subr.mxu0 0.0
      %2363 = vmatpush1.msra.mxu0 %v2335
      %2364 = vmatprep.subr.mxu0 0.0
      %2365 = vmatpush1.msra.mxu0 %v2336
      %2366 = vmatprep.subr.mxu0 0.0
      %2367 = vmatpush1.msra.mxu0 %v2337
      %2368 = vmatprep.subr.mxu0 0.0
      %2369 = vmatpush1.msra.mxu0 %v2338
      %2370 = vmatprep.subr.mxu0 0.0
      %2371 = vmatpush1.msra.mxu0 %v2339
      %2372 = vmatprep.subr.mxu0 0.0
      %2373 = vmatpush1.msra.mxu0 0.0
      %2374 = vmatprep.subr.mxu0 0.0
      %2375 = vmatpush1.msra.mxu0 0.0
      %2376 = vmatprep.subr.mxu0 0.0
      %2377 = vmatpush1.msra.mxu0 0.0
      %2378 = vmatprep.subr.mxu0 0.0
      %2379 = vmatpush1.msra.mxu0 0.0
      %2380 = vmatprep.subr.mxu0 0.0
      %2381 = vmatpush1.msra.mxu0 0.0
      %2382 = vmatprep.subr.mxu0 0.0
      %2383 = vmatpush1.msra.mxu0 0.0
      %2384 = vmatprep.subr.mxu0 0.0
      %2385 = vmatpush1.msra.mxu0 0.0
      %2386 = vmatprep.subr.mxu0 0.0
      %2387 = vmatpush1.msra.mxu0 0.0
      %2388 = vmatprep.subr.mxu0 0.0
      %2389 = vmatpush1.msra.mxu0 0.0
      %2390 = vmatprep.subr.mxu0 0.0
      %2391 = vmatpush1.msra.mxu0 0.0
      %2392 = vmatprep.subr.mxu0 0.0
      %2393 = vmatpush1.msra.mxu0 0.0
      %2394 = vmatprep.subr.mxu0 0.0
      %2395 = vmatpush1.msra.mxu0 0.0
      %2396 = vmatprep.subr.mxu0 0.0
      %2397 = vmatpush1.msra.mxu0 0.0
      %2398 = vmatprep.subr.mxu0 0.0
      %2399 = vmatpush1.msra.mxu0 0.0
      %2400 = vmatprep.subr.mxu0 0.0
      %2401 = vmatpush1.msra.mxu0 0.0
      %2402 = vmatprep.subr.mxu0 0.0
      %2403 = vmatpush1.msra.mxu0 0.0
      %2404 = vmatprep.mubr.f32.mxu0 0.0
      %2405 = vmatmul.mubr.f32.gmra.mrb[0].mxu0 %v2323
      %v2406 = vpop.f32.mrb[0].mxu0
      %v2407 = vadd.f32 0.0, %v2406
      %v2408 = vpop.f32.mrb[0].mxu0
      %2409 = vdwg.mxu0
      %v2410 = vsub.f32 0.0, %v2407
      %v2411 = vmul.f32 %v2410, 1.442695
      %v2412 = vpow.pop %v2411
      %v2413 = vadd.f32 %v2412, 1.0
      %v2414 = vrcp.pop %v2413
      %v2415 = vmul.f32 1.0, %v2414
      %v2416 = vlaneseq
      %v2417 = vshrl.u32 %v2416, 7
      %v2418 = vsub.s32 0, %v2417
      %v2419 = vrot.slane %v2415, %v2418
      %v2420 = vmul.f32 %v2167, %v2419
      %v2421 = vmul.f32 %v2168, %v2419
      %v2422 = vmul.f32 %v2169, %v2419
      %v2423 = vmul.f32 %v2170, %v2419
      %v2424 = vmul.f32 %v2171, %v2419
      %v2425 = vmul.f32 %v2172, %v2419
      %v2426 = vmul.f32 %v2173, %v2419
      %v2427 = vmul.f32 %v2174, %v2419
      %v2428 = vmul.f32 %v2175, %v2419
      %v2429 = vmul.f32 %v2176, %v2419
      %v2430 = vmul.f32 %v2177, %v2419
      %v2431 = vmul.f32 %v2178, %v2419
      %v2432 = vmul.f32 %v2179, %v2419
      %v2433 = vmul.f32 %v2180, %v2419
      %v2434 = vmul.f32 %v2181, %v2419
      %v2435 = vmul.f32 %v2182, %v2419
      %v2436 = vmul.f32 %v2183, %v2419
      %v2437 = vmul.f32 %v2184, %v2419
      %v2438 = vmul.f32 %v2185, %v2419
      %v2439 = vmul.f32 %v2186, %v2419
      %v2440 = vmul.f32 %v2187, %v2419
      %v2441 = vmul.f32 %v2188, %v2419
      %v2442 = vmul.f32 %v2189, %v2419
      %v2443 = vmul.f32 %v2190, %v2419
      %v2444 = vmul.f32 %v2191, %v2419
      %v2445 = vmul.f32 %v2192, %v2419
      %v2446 = vmul.f32 %v2193, %v2419
      %v2447 = vmul.f32 %v2194, %v2419
      %v2448 = vmul.f32 %v2195, %v2419
      %v2449 = vmul.f32 %v2196, %v2419
      %v2450 = vmul.f32 %v2197, %v2419
      %v2451 = vmul.f32 %v2198, %v2419
      %v2452 = vld [vmem:[%s9] sm:$0xff]
      %v2453 = vld [vmem:[%s9 + $0x8] sm:$0xff]
      %v2454 = vld [vmem:[%s9 + $0x10] sm:$0xff]
      %v2455 = vld [vmem:[%s9 + $0x18] sm:$0xff]
      %v2456 = vld [vmem:[%s9 + $0x20] sm:$0xff]
      %v2457 = vld [vmem:[%s9 + $0x28] sm:$0xff]
      %v2458 = vld [vmem:[%s9 + $0x30] sm:$0xff]
      %v2459 = vld [vmem:[%s9 + $0x38] sm:$0xff]
      %v2460 = vld [vmem:[%s9 + $0x40] sm:$0xff]
      %v2461 = vld [vmem:[%s9 + $0x48] sm:$0xff]
      %v2462 = vld [vmem:[%s9 + $0x50] sm:$0xff]
      %v2463 = vld [vmem:[%s9 + $0x58] sm:$0xff]
      %v2464 = vld [vmem:[%s9 + $0x60] sm:$0xff]
      %v2465 = vld [vmem:[%s9 + $0x68] sm:$0xff]
      %v2466 = vld [vmem:[%s9 + $0x70] sm:$0xff]
      %v2467 = vld [vmem:[%s9 + $0x78] sm:$0xff]
      %v2468 = vld [vmem:[%s10] sm:$0x1]
      %v2470 = vlaneseq
      %v2471 = vshrl.u32 %v2470, 7
      %v2472 = vsub.s32 0, %v2471
      %v2473 = vrot.slane %v2468, %v2472
      %2475 = vmatprep.subr.mxu0 0.0
      %2476 = vmatpush1.msra.mxu0 %v2452
      %2477 = vmatprep.subr.mxu0 0.0
      %2478 = vmatpush1.msra.mxu0 %v2453
      %2479 = vmatprep.subr.mxu0 0.0
      %2480 = vmatpush1.msra.mxu0 %v2454
      %2481 = vmatprep.subr.mxu0 0.0
      %2482 = vmatpush1.msra.mxu0 %v2455
      %2483 = vmatprep.subr.mxu0 0.0
      %2484 = vmatpush1.msra.mxu0 %v2456
      %2485 = vmatprep.subr.mxu0 0.0
      %2486 = vmatpush1.msra.mxu0 %v2457
      %2487 = vmatprep.subr.mxu0 0.0
      %2488 = vmatpush1.msra.mxu0 %v2458
      %2489 = vmatprep.subr.mxu0 0.0
      %2490 = vmatpush1.msra.mxu0 %v2459
      %2491 = vmatprep.subr.mxu0 0.0
      %2492 = vmatpush1.msra.mxu0 %v2460
      %2493 = vmatprep.subr.mxu0 0.0
      %2494 = vmatpush1.msra.mxu0 %v2461
      %2495 = vmatprep.subr.mxu0 0.0
      %2496 = vmatpush1.msra.mxu0 %v2462
      %2497 = vmatprep.subr.mxu0 0.0
      %2498 = vmatpush1.msra.mxu0 %v2463
      %2499 = vmatprep.subr.mxu0 0.0
      %2500 = vmatpush1.msra.mxu0 %v2464
      %2501 = vmatprep.subr.mxu0 0.0
      %2502 = vmatpush1.msra.mxu0 %v2465
      %2503 = vmatprep.subr.mxu0 0.0
      %2504 = vmatpush1.msra.mxu0 %v2466
      %2505 = vmatprep.subr.mxu0 0.0
      %2506 = vmatpush1.msra.mxu0 %v2467
      %2507 = vmatprep.subr.mxu0 0.0
      %2508 = vmatpush1.msra.mxu0 0.0
      %2509 = vmatprep.subr.mxu0 0.0
      %2510 = vmatpush1.msra.mxu0 0.0
      %2511 = vmatprep.subr.mxu0 0.0
      %2512 = vmatpush1.msra.mxu0 0.0
      %2513 = vmatprep.subr.mxu0 0.0
      %2514 = vmatpush1.msra.mxu0 0.0
      %2515 = vmatprep.subr.mxu0 0.0
      %2516 = vmatpush1.msra.mxu0 0.0
      %2517 = vmatprep.subr.mxu0 0.0
      %2518 = vmatpush1.msra.mxu0 0.0
      %2519 = vmatprep.subr.mxu0 0.0
      %2520 = vmatpush1.msra.mxu0 0.0
      %2521 = vmatprep.subr.mxu0 0.0
      %2522 = vmatpush1.msra.mxu0 0.0
      %2523 = vmatprep.subr.mxu0 0.0
      %2524 = vmatpush1.msra.mxu0 0.0
      %2525 = vmatprep.subr.mxu0 0.0
      %2526 = vmatpush1.msra.mxu0 0.0
      %2527 = vmatprep.subr.mxu0 0.0
      %2528 = vmatpush1.msra.mxu0 0.0
      %2529 = vmatprep.subr.mxu0 0.0
      %2530 = vmatpush1.msra.mxu0 0.0
      %2531 = vmatprep.subr.mxu0 0.0
      %2532 = vmatpush1.msra.mxu0 0.0
      %2533 = vmatprep.subr.mxu0 0.0
      %2534 = vmatpush1.msra.mxu0 0.0
      %2535 = vmatprep.subr.mxu0 0.0
      %2536 = vmatpush1.msra.mxu0 0.0
      %2537 = vmatprep.subr.mxu0 0.0
      %2538 = vmatpush1.msra.mxu0 0.0
      %2539 = vmatprep.mubr.f32.mxu0 0.0
      %2540 = vmatmul.mubr.f32.gmra.mrb[0].mxu0 %v2420
      %v2541 = vpop.f32.mrb[0].mxu0
      %v2542 = vadd.f32 %v2473, %v2541
      %v2543 = vpop.f32.mrb[0].mxu0
      %2544 = vmatprep.mubr.f32.mxu0 0.0
      %2545 = vmatmul.mubr.f32.gmra.mrb[0].mxu0 %v2421
      %v2546 = vpop.f32.mrb[0].mxu0
      %v2547 = vadd.f32 %v2473, %v2546
      %v2548 = vpop.f32.mrb[0].mxu0
      %2549 = vmatprep.mubr.f32.mxu0 0.0
      %2550 = vmatmul.mubr.f32.gmra.mrb[0].mxu0 %v2422
      %v2551 = vpop.f32.mrb[0].mxu0
      %v2552 = vadd.f32 %v2473, %v2551
      %v2553 = vpop.f32.mrb[0].mxu0
      %2554 = vmatprep.mubr.f32.mxu0 0.0
      %2555 = vmatmul.mubr.f32.gmra.mrb[0].mxu0 %v2423
      %v2556 = vpop.f32.mrb[0].mxu0
      %v2557 = vadd.f32 %v2473, %v2556
      %v2558 = vpop.f32.mrb[0].mxu0
      %2559 = vmatprep.mubr.f32.mxu0 0.0
      %2560 = vmatmul.mubr.f32.gmra.mrb[0].mxu0 %v2424
      %v2561 = vpop.f32.mrb[0].mxu0
      %v2562 = vadd.f32 %v2473, %v2561
      %v2563 = vpop.f32.mrb[0].mxu0
      %2564 = vmatprep.mubr.f32.mxu0 0.0
      %2565 = vmatmul.mubr.f32.gmra.mrb[0].mxu0 %v2425
      %v2566 = vpop.f32.mrb[0].mxu0
      %v2567 = vadd.f32 %v2473, %v2566
      %v2568 = vpop.f32.mrb[0].mxu0
      %2569 = vmatprep.mubr.f32.mxu0 0.0
      %2570 = vmatmul.mubr.f32.gmra.mrb[0].mxu0 %v2426
      %v2571 = vpop.f32.mrb[0].mxu0
      %v2572 = vadd.f32 %v2473, %v2571
      %v2573 = vpop.f32.mrb[0].mxu0
      %2574 = vmatprep.mubr.f32.mxu0 0.0
      %2575 = vmatmul.mubr.f32.gmra.mrb[0].mxu0 %v2427
      %v2576 = vpop.f32.mrb[0].mxu0
      %v2577 = vadd.f32 %v2473, %v2576
      %v2578 = vpop.f32.mrb[0].mxu0
      %2579 = vmatprep.mubr.f32.mxu0 0.0
      %2580 = vmatmul.mubr.f32.gmra.mrb[0].mxu0 %v2428
      %v2581 = vpop.f32.mrb[0].mxu0
      %v2582 = vadd.f32 %v2473, %v2581
      %v2583 = vpop.f32.mrb[0].mxu0
      %2584 = vmatprep.mubr.f32.mxu0 0.0
      %2585 = vmatmul.mubr.f32.gmra.mrb[0].mxu0 %v2429
      %v2586 = vpop.f32.mrb[0].mxu0
      %v2587 = vadd.f32 %v2473, %v2586
      %v2588 = vpop.f32.mrb[0].mxu0
      %2589 = vmatprep.mubr.f32.mxu0 0.0
      %2590 = vmatmul.mubr.f32.gmra.mrb[0].mxu0 %v2430
      %v2591 = vpop.f32.mrb[0].mxu0
      %v2592 = vadd.f32 %v2473, %v2591
      %v2593 = vpop.f32.mrb[0].mxu0
      %2594 = vmatprep.mubr.f32.mxu0 0.0
      %2595 = vmatmul.mubr.f32.gmra.mrb[0].mxu0 %v2431
      %v2596 = vpop.f32.mrb[0].mxu0
      %v2597 = vadd.f32 %v2473, %v2596
      %v2598 = vpop.f32.mrb[0].mxu0
      %2599 = vmatprep.mubr.f32.mxu0 0.0
      %2600 = vmatmul.mubr.f32.gmra.mrb[0].mxu0 %v2432
      %v2601 = vpop.f32.mrb[0].mxu0
      %v2602 = vadd.f32 %v2473, %v2601
      %v2603 = vpop.f32.mrb[0].mxu0
      %2604 = vmatprep.mubr.f32.mxu0 0.0
      %2605 = vmatmul.mubr.f32.gmra.mrb[0].mxu0 %v2433
      %v2606 = vpop.f32.mrb[0].mxu0
      %v2607 = vadd.f32 %v2473, %v2606
      %v2608 = vpop.f32.mrb[0].mxu0
      %2609 = vmatprep.mubr.f32.mxu0 0.0
      %2610 = vmatmul.mubr.f32.gmra.mrb[0].mxu0 %v2434
      %v2611 = vpop.f32.mrb[0].mxu0
      %v2612 = vadd.f32 %v2473, %v2611
      %v2613 = vpop.f32.mrb[0].mxu0
      %2614 = vmatprep.mubr.f32.mxu0 0.0
      %2615 = vmatmul.mubr.f32.gmra.mrb[0].mxu0 %v2435
      %v2616 = vpop.f32.mrb[0].mxu0
      %v2617 = vadd.f32 %v2473, %v2616
      %v2618 = vpop.f32.mrb[0].mxu0
      %2619 = vmatprep.mubr.f32.mxu0 0.0
      %2620 = vmatmul.mubr.f32.gmra.mrb[0].mxu0 %v2436
      %v2621 = vpop.f32.mrb[0].mxu0
      %v2622 = vadd.f32 %v2473, %v2621
      %v2623 = vpop.f32.mrb[0].mxu0
      %2624 = vmatprep.mubr.f32.mxu0 0.0
      %2625 = vmatmul.mubr.f32.gmra.mrb[0].mxu0 %v2437
      %v2626 = vpop.f32.mrb[0].mxu0
      %v2627 = vadd.f32 %v2473, %v2626
      %v2628 = vpop.f32.mrb[0].mxu0
      %2629 = vmatprep.mubr.f32.mxu0 0.0
      %2630 = vmatmul.mubr.f32.gmra.mrb[0].mxu0 %v2438
      %v2631 = vpop.f32.mrb[0].mxu0
      %v2632 = vadd.f32 %v2473, %v2631
      %v2633 = vpop.f32.mrb[0].mxu0
      %2634 = vmatprep.mubr.f32.mxu0 0.0
      %2635 = vmatmul.mubr.f32.gmra.mrb[0].mxu0 %v2439
      %v2636 = vpop.f32.mrb[0].mxu0
      %v2637 = vadd.f32 %v2473, %v2636
      %v2638 = vpop.f32.mrb[0].mxu0
      %2639 = vmatprep.mubr.f32.mxu0 0.0
      %2640 = vmatmul.mubr.f32.gmra.mrb[0].mxu0 %v2440
      %v2641 = vpop.f32.mrb[0].mxu0
      %v2642 = vadd.f32 %v2473, %v2641
      %v2643 = vpop.f32.mrb[0].mxu0
      %2644 = vmatprep.mubr.f32.mxu0 0.0
      %2645 = vmatmul.mubr.f32.gmra.mrb[0].mxu0 %v2441
      %v2646 = vpop.f32.mrb[0].mxu0
      %v2647 = vadd.f32 %v2473, %v2646
      %v2648 = vpop.f32.mrb[0].mxu0
      %2649 = vmatprep.mubr.f32.mxu0 0.0
      %2650 = vmatmul.mubr.f32.gmra.mrb[0].mxu0 %v2442
      %v2651 = vpop.f32.mrb[0].mxu0
      %v2652 = vadd.f32 %v2473, %v2651
      %v2653 = vpop.f32.mrb[0].mxu0
      %2654 = vmatprep.mubr.f32.mxu0 0.0
      %2655 = vmatmul.mubr.f32.gmra.mrb[0].mxu0 %v2443
      %v2656 = vpop.f32.mrb[0].mxu0
      %v2657 = vadd.f32 %v2473, %v2656
      %v2658 = vpop.f32.mrb[0].mxu0
      %2659 = vmatprep.mubr.f32.mxu0 0.0
      %2660 = vmatmul.mubr.f32.gmra.mrb[0].mxu0 %v2444
      %v2661 = vpop.f32.mrb[0].mxu0
      %v2662 = vadd.f32 %v2473, %v2661
      %v2663 = vpop.f32.mrb[0].mxu0
      %2664 = vmatprep.mubr.f32.mxu0 0.0
      %2665 = vmatmul.mubr.f32.gmra.mrb[0].mxu0 %v2445
      %v2666 = vpop.f32.mrb[0].mxu0
      %v2667 = vadd.f32 %v2473, %v2666
      %v2668 = vpop.f32.mrb[0].mxu0
      %2669 = vmatprep.mubr.f32.mxu0 0.0
      %2670 = vmatmul.mubr.f32.gmra.mrb[0].mxu0 %v2446
      %v2671 = vpop.f32.mrb[0].mxu0
      %v2672 = vadd.f32 %v2473, %v2671
      %v2673 = vpop.f32.mrb[0].mxu0
      %2674 = vmatprep.mubr.f32.mxu0 0.0
      %2675 = vmatmul.mubr.f32.gmra.mrb[0].mxu0 %v2447
      %v2676 = vpop.f32.mrb[0].mxu0
      %v2677 = vadd.f32 %v2473, %v2676
      %v2678 = vpop.f32.mrb[0].mxu0
      %2679 = vmatprep.mubr.f32.mxu0 0.0
      %2680 = vmatmul.mubr.f32.gmra.mrb[0].mxu0 %v2448
      %v2681 = vpop.f32.mrb[0].mxu0
      %v2682 = vadd.f32 %v2473, %v2681
      %v2683 = vpop.f32.mrb[0].mxu0
      %2684 = vmatprep.mubr.f32.mxu0 0.0
      %2685 = vmatmul.mubr.f32.gmra.mrb[0].mxu0 %v2449
      %v2686 = vpop.f32.mrb[0].mxu0
      %v2687 = vadd.f32 %v2473, %v2686
      %v2688 = vpop.f32.mrb[0].mxu0
      %2689 = vmatprep.mubr.f32.mxu0 0.0
      %2690 = vmatmul.mubr.f32.gmra.mrb[0].mxu0 %v2450
      %v2691 = vpop.f32.mrb[0].mxu0
      %v2692 = vadd.f32 %v2473, %v2691
      %v2693 = vpop.f32.mrb[0].mxu0
      %2694 = vmatprep.mubr.f32.mxu0 0.0
      %2695 = vmatmul.mubr.f32.gmra.mrb[0].mxu0 %v2451
      %v2696 = vpop.f32.mrb[0].mxu0
      %v2697 = vadd.f32 %v2473, %v2696
      %v2698 = vpop.f32.mrb[0].mxu0
      %2699 = vdwg.mxu0
      %v2700 = vadd.f32 %v2542, %v399
      %v2701 = vadd.f32 %v2547, %v400
      %v2702 = vadd.f32 %v2552, %v401
      %v2703 = vadd.f32 %v2557, %v402
      %v2704 = vadd.f32 %v2562, %v403
      %v2705 = vadd.f32 %v2567, %v404
      %v2706 = vadd.f32 %v2572, %v405
      %v2707 = vadd.f32 %v2577, %v406
      %v2708 = vadd.f32 %v2582, %v407
      %v2709 = vadd.f32 %v2587, %v408
      %v2710 = vadd.f32 %v2592, %v409
      %v2711 = vadd.f32 %v2597, %v410
      %v2712 = vadd.f32 %v2602, %v411
      %v2713 = vadd.f32 %v2607, %v412
      %v2714 = vadd.f32 %v2612, %v413
      %v2715 = vadd.f32 %v2617, %v414
      %v2716 = vadd.f32 %v2622, %v415
      %v2717 = vadd.f32 %v2627, %v416
      %v2718 = vadd.f32 %v2632, %v417
      %v2719 = vadd.f32 %v2637, %v418
      %v2720 = vadd.f32 %v2642, %v419
      %v2721 = vadd.f32 %v2647, %v420
      %v2722 = vadd.f32 %v2652, %v421
      %v2723 = vadd.f32 %v2657, %v422
      %v2724 = vadd.f32 %v2662, %v423
      %v2725 = vadd.f32 %v2667, %v424
      %v2726 = vadd.f32 %v2672, %v425
      %v2727 = vadd.f32 %v2677, %v426
      %v2728 = vadd.f32 %v2682, %v427
      %v2729 = vadd.f32 %v2687, %v428
      %v2730 = vadd.f32 %v2692, %v429
      %v2731 = vadd.f32 %v2697, %v430
      %2732 = vst.msk [vmem:[%s386] sm:$0xff] %vm439, %v2700
      %2733 = vst.msk [vmem:[%s386 + $0x8] sm:$0xff] %vm439, %v2701
      %2734 = vst.msk [vmem:[%s386 + $0x10] sm:$0xff] %vm439, %v2702
      %2735 = vst.msk [vmem:[%s386 + $0x18] sm:$0xff] %vm439, %v2703
      %2736 = vst.msk [vmem:[%s386 + $0x20] sm:$0xff] %vm439, %v2704
      %2737 = vst.msk [vmem:[%s386 + $0x28] sm:$0xff] %vm439, %v2705
      %2738 = vst.msk [vmem:[%s386 + $0x30] sm:$0xff] %vm439, %v2706
      %2739 = vst.msk [vmem:[%s386 + $0x38] sm:$0xff] %vm439, %v2707
      %2740 = vst.msk [vmem:[%s386 + $0x40] sm:$0xff] %vm439, %v2708
      %2741 = vst.msk [vmem:[%s386 + $0x48] sm:$0xff] %vm439, %v2709
      %2742 = vst.msk [vmem:[%s386 + $0x50] sm:$0xff] %vm439, %v2710
      %2743 = vst.msk [vmem:[%s386 + $0x58] sm:$0xff] %vm439, %v2711
      %2744 = vst.msk [vmem:[%s386 + $0x60] sm:$0xff] %vm439, %v2712
      %2745 = vst.msk [vmem:[%s386 + $0x68] sm:$0xff] %vm439, %v2713
      %2746 = vst.msk [vmem:[%s386 + $0x70] sm:$0xff] %vm439, %v2714
      %2747 = vst.msk [vmem:[%s386 + $0x78] sm:$0xff] %vm439, %v2715
      %2748 = vst.msk [vmem:[%s386 + $0x80] sm:$0xff] %vm439, %v2716
      %2749 = vst.msk [vmem:[%s386 + $0x88] sm:$0xff] %vm439, %v2717
      %2750 = vst.msk [vmem:[%s386 + $0x90] sm:$0xff] %vm439, %v2718
      %2751 = vst.msk [vmem:[%s386 + $0x98] sm:$0xff] %vm439, %v2719
      %2752 = vst.msk [vmem:[%s386 + $0xa0] sm:$0xff] %vm439, %v2720
      %2753 = vst.msk [vmem:[%s386 + $0xa8] sm:$0xff] %vm439, %v2721
      %2754 = vst.msk [vmem:[%s386 + $0xb0] sm:$0xff] %vm439, %v2722
      %2755 = vst.msk [vmem:[%s386 + $0xb8] sm:$0xff] %vm439, %v2723
      %2756 = vst.msk [vmem:[%s386 + $0xc0] sm:$0xff] %vm439, %v2724
      %2757 = vst.msk [vmem:[%s386 + $0xc8] sm:$0xff] %vm439, %v2725
      %2758 = vst.msk [vmem:[%s386 + $0xd0] sm:$0xff] %vm439, %v2726
      %2759 = vst.msk [vmem:[%s386 + $0xd8] sm:$0xff] %vm439, %v2727
      %2760 = vst.msk [vmem:[%s386 + $0xe0] sm:$0xff] %vm439, %v2728
      %2761 = vst.msk [vmem:[%s386 + $0xe8] sm:$0xff] %vm439, %v2729
      %2762 = vst.msk [vmem:[%s386 + $0xf0] sm:$0xff] %vm439, %v2730
      %2763 = vst.msk [vmem:[%s386 + $0xf8] sm:$0xff] %vm439, %v2731
      %p2764 = scmp.lt.s32.totalorder %s22, 1
      %s2765 = scalar_select %p2764, %s22, 1
      %s2766 = smul.addr %s2765, 32
      %s2767 = smul.addr %s2766, 8
      %s2768 = scalar_lea.vmem %s11, %s2767
      // Predicated region
      $region65: #{tpu_custom_call.1} parent=63 // pred_check
        %p2769 = pneg %p276
      $region66: #{tpu_custom_call.1} parent=63 // pred_check_branch
        %2771 = sbr.rel (%p2769) target = $region68
      $region67: #{tpu_custom_call.1} parent=63 // pred_region
        _
      $region68: #{tpu_custom_call.1} parent=63 // pred_fallthru
        _
    $region64: #{tpu_custom_call.1} parent=5 // pred_fallthru
      _
    %p2772 = scmp.le.s32.totalorder 2, %s17
    // Predicated region
    $region69: #{tpu_custom_call.1} parent=5 // pred_check
      %p2773 = pneg %p2772
    $region70: #{tpu_custom_call.1} parent=5 // pred_check_branch
      %2775 = sbr.rel (%p2773) target = $region72
    $region71: #{tpu_custom_call.1} parent=5 // pred_region
      %s2776 = ssub.s32 %s17, 2
      // Predicated region
      $region73: #{tpu_custom_call.1} parent=71 // pred_check
        %p2777 = pneg %p282
      $region74: #{tpu_custom_call.1} parent=71 // pred_check_branch
        %2779 = sbr.rel (%p2777) target = $region76
      $region75: #{tpu_custom_call.1} parent=71 // pred_region
        %p2780 = scmp.lt.s32.totalorder %s23, 1
        %s2781 = scalar_select %p2780, %s23, 1
        %s2782 = smul.addr %s2781, 32
        %s2783 = smul.addr %s2782, 8
        %s2784 = scalar_lea.vmem %s11, %s2783
      $region76: #{tpu_custom_call.1} parent=71 // pred_fallthru
        _
    $region72: #{tpu_custom_call.1} parent=5 // pred_fallthru
      _
  $region6: #{tpu_custom_call.1} parent=0 // loop_footer
    %s21 = sadd.s32 1, %s17
  $region7: #{tpu_custom_call.1} parent=0 // loop_footer_branch
    %16 = sbr.rel target = $region3
  $region8: #{tpu_custom_call.1} parent=0 // loop_exit
    _

</llo_original>
